<compile_context>
chip_gen: v5e
topology: v5e:2x2
jax: 0.10.0
libtpu: 0.0.40
codegen_flags: <defaults>
</compile_context>

<pallas_src>
import jax
import jax.numpy as jnp
from jax.experimental import pallas as pl
from jax.experimental.pallas import tpu as pltpu

EPS = 1e-5
SLOPE = 0.2


def _row_instance_norm(h):
    # per-row normalization over the feature (lane) axis, biased variance
    mean = jnp.mean(h, axis=-1, keepdims=True)
    var = jnp.mean(jnp.square(h - mean), axis=-1, keepdims=True)
    return (h - mean) * jax.lax.rsqrt(var + EPS)


def _leaky_relu(h):
    return jnp.where(h >= 0, h, SLOPE * h)


def generator_kernel(x_ref,
                     w1_ref, b1_ref, w2_ref, b2_ref,
                     w3_ref, b3_ref, w4_ref, b4_ref,
                     o_ref):
    x = x_ref[...]
    in_dim = x.shape[1]

    # ---- layer 1: Linear(in_dim, 128) ----
    if in_dim <= 16:
        # Tiny-K contraction: cheaper as VPU broadcast-FMAs than a padded MXU pass.
        w1 = w1_ref[...]
        h = x[:, 0:1] * w1[0:1, :]
        for k in range(1, in_dim):
            h = h + x[:, k:k + 1] * w1[k:k + 1, :]
        h = h + b1_ref[...]
    else:
        h = jnp.dot(x, w1_ref[...], preferred_element_type=jnp.float32) + b1_ref[...]
    h = _leaky_relu(_row_instance_norm(h))

    # ---- layer 2: Linear(128, 256) (optionally bf16 MXU inputs, f32 accumulate) ----
    h = jnp.dot(h.astype(w2_ref.dtype), w2_ref[...],
                preferred_element_type=jnp.float32) + b2_ref[...]
    h = _leaky_relu(_row_instance_norm(h))

    # ---- layer 3: Linear(256, 128) ----
    h = jnp.dot(h.astype(w3_ref.dtype), w3_ref[...],
                preferred_element_type=jnp.float32) + b3_ref[...]
    h = _leaky_relu(_row_instance_norm(h))

    # ---- layer 4: Linear(128, out_dim) ----
    h = jnp.dot(h.astype(w4_ref.dtype), w4_ref[...],
                preferred_element_type=jnp.float32) + b4_ref[...]
    o_ref[...] = h.astype(o_ref.dtype)


def init_params(key, input_dim, output_dim):
    """Deterministic Linear params (PyTorch-style uniform(-1/sqrt(fan_in), ..))."""
    dims = [(input_dim, 128), (128, 256), (256, 128), (128, output_dim)]
    params = {}
    for i, (fan_in, fan_out) in enumerate(dims, start=1):
        key, kw, kb = jax.random.split(key, 3)
        bound = 1.0 / jnp.sqrt(float(fan_in))
        # stored as (fan_in, fan_out) so the kernel does x @ W + b
        params[f"w{i}"] = jax.random.uniform(
            kw, (fan_in, fan_out), jnp.float32, -bound, bound)
        params[f"b{i}"] = jax.random.uniform(
            kb, (1, fan_out), jnp.float32, -bound, bound)
    return params


def generator_forward(x, params, *, tile_rows=256, use_bf16=True):
    """Run the Generator forward pass via a single Pallas kernel.

    tile_rows: rows per grid step (sweep 256-1024 on v6e/v7x, multiples of 128
               on v5e). The batch is zero-padded to a multiple of tile_rows.
    use_bf16:  cast activations/weights of the two heavy matmuls to bf16
               (f32 accumulation). Set False for bit-exact f32.
    """
    N, F = x.shape
    out_dim = params["w4"].shape[1]

    n_tiles = pl.cdiv(N, tile_rows)
    n_pad = n_tiles * tile_rows
    if n_pad != N:
        # Row-padding is safe: every op in the kernel is row-independent.
        x = jnp.pad(x, ((0, n_pad - N), (0, 0)))

    mm_dtype = jnp.bfloat16 if use_bf16 else jnp.float32
    # bf16 only on the heavy (128,256)/(256,128) matmuls; layers 1/4 and all
    # biases / norm / activation math stay f32.
    w1, b1 = params["w1"], params["b1"]
    w2, b2 = params["w2"].astype(mm_dtype), params["b2"]
    w3, b3 = params["w3"].astype(mm_dtype), params["b3"]
    w4, b4 = params["w4"], params["b4"]

    full = lambda i: (0, 0)
    row_tile = lambda i: (i, 0)

    in_specs = [pl.BlockSpec((tile_rows, F), row_tile)]
    for w, b in ((w1, b1), (w2, b2), (w3, b3), (w4, b4)):
        in_specs.append(pl.BlockSpec(w.shape, full))
        in_specs.append(pl.BlockSpec(b.shape, full))

    out = pl.pallas_call(
        generator_kernel,
        out_shape=jax.ShapeDtypeStruct((n_pad, out_dim), jnp.float32),
        grid_spec=pltpu.PrefetchScalarGridSpec(
            num_scalar_prefetch=0,
            grid=(n_tiles,),
            in_specs=in_specs,
            out_specs=pl.BlockSpec((tile_rows, out_dim), row_tile),
        ),
        compiler_params=pltpu.CompilerParams(
            dimension_semantics=("parallel",)),
    )(x, w1, b1, w2, b2, w3, b3, w4, b4)

    return out[:N] if n_pad != N else out


def generator_reference(x, params):
    """Pure-JAX f32 reference matching the PyTorch forward semantics."""
    h = x
    for layer in (1, 2, 3):
        h = h @ params[f"w{layer}"] + params[f"b{layer}"]
        h = _leaky_relu(_row_instance_norm(h))
    return h @ params["w4"] + params["b4"]


if __name__ == "__main__":
    input_dim, output_dim = 3, 16      # "ThreeToSixteen"
    batch = 16

    key = jax.random.PRNGKey(0)
    key, kx = jax.random.split(key)
    x = jax.random.normal(kx, (batch, input_dim), dtype=jnp.float32)
    params = init_params(key, input_dim, output_dim)
    ref = generator_reference(x, params)

    # 1) exact f32 path (default large tile_rows exercises the padding path)
    out_f32 = jax.block_until_ready(
        generator_forward(x, params, tile_rows=256, use_bf16=False))
    assert out_f32.shape == (batch, output_dim)
    assert jnp.allclose(out_f32, ref, atol=1e-4, rtol=1e-4), "f32 mismatch vs reference"

    # 2) bf16 fast path for the heavy matmuls (relaxed tolerance)
    out_bf16 = jax.block_until_ready(
        generator_forward(x, params, tile_rows=256, use_bf16=True))
    assert out_bf16.shape == (batch, output_dim)
    assert jnp.allclose(out_bf16, ref, atol=1e-1, rtol=1e-1), "bf16 mismatch vs reference"

    # 3) multi-tile grid + ragged batch (exercises grid > 1 and row padding)
    xb = jax.random.normal(jax.random.PRNGKey(1), (40, input_dim), dtype=jnp.float32)
    refb = generator_reference(xb, params)
    out_b = jax.block_until_ready(
        generator_forward(xb, params, tile_rows=16, use_bf16=False))
    assert out_b.shape == (40, output_dim)
    assert jnp.allclose(out_b, refb, atol=1e-4, rtol=1e-4), "multi-tile mismatch"

    print("KERNEL_OK")
</pallas_src>

<mosaic_0001>
module attributes {stable_mosaic.version = 11 : i64} {
  func.func @generator_kernel(%arg0: i32, %arg1: memref<256x3xf32, #tpu.memory_space<vmem>>, %arg2: memref<3x128xf32, #tpu.memory_space<vmem>>, %arg3: memref<1x128xf32, #tpu.memory_space<vmem>>, %arg4: memref<128x256xf32, #tpu.memory_space<vmem>>, %arg5: memref<1x256xf32, #tpu.memory_space<vmem>>, %arg6: memref<256x128xf32, #tpu.memory_space<vmem>>, %arg7: memref<1x128xf32, #tpu.memory_space<vmem>>, %arg8: memref<128x16xf32, #tpu.memory_space<vmem>>, %arg9: memref<1x16xf32, #tpu.memory_space<vmem>>, %arg10: memref<256x16xf32, #tpu.memory_space<vmem>>) attributes {dimension_semantics = [#tpu.dimension_semantics<parallel>], iteration_bounds = array<i64: 1>, scalar_prefetch = 0 : i64, scratch_operands = 0 : i64, tpu.core_type = #tpu.core_type<tc>, window_params = [{transform_indices = @transform_0, window_bounds = array<i64: 256, 3>}, {pipeline_mode = #tpu.pipeline_mode<synchronous>, transform_indices = @transform_1, window_bounds = array<i64: 3, 128>}, {pipeline_mode = #tpu.pipeline_mode<synchronous>, transform_indices = @transform_2, window_bounds = array<i64: 1, 128>}, {pipeline_mode = #tpu.pipeline_mode<synchronous>, transform_indices = @transform_3, window_bounds = array<i64: 128, 256>}, {pipeline_mode = #tpu.pipeline_mode<synchronous>, transform_indices = @transform_4, window_bounds = array<i64: 1, 256>}, {pipeline_mode = #tpu.pipeline_mode<synchronous>, transform_indices = @transform_5, window_bounds = array<i64: 256, 128>}, {pipeline_mode = #tpu.pipeline_mode<synchronous>, transform_indices = @transform_6, window_bounds = array<i64: 1, 128>}, {pipeline_mode = #tpu.pipeline_mode<synchronous>, transform_indices = @transform_7, window_bounds = array<i64: 128, 16>}, {pipeline_mode = #tpu.pipeline_mode<synchronous>, transform_indices = @transform_8, window_bounds = array<i64: 1, 16>}, {transform_indices = @transform_9, window_bounds = array<i64: 256, 16>}]} {
    %c0 = arith.constant 0 : index
    %c0_0 = arith.constant 0 : index
    %0 = vector.load %arg1[%c0, %c0_0] : memref<256x3xf32, #tpu.memory_space<vmem>>, vector<256x3xf32>
    %c0_1 = arith.constant 0 : index
    %c0_2 = arith.constant 0 : index
    %1 = vector.load %arg2[%c0_1, %c0_2] : memref<3x128xf32, #tpu.memory_space<vmem>>, vector<3x128xf32>
    %2 = vector.extract_strided_slice %0 {offsets = [0, 0], sizes = [256, 1], strides = [1, 1]} : vector<256x3xf32> to vector<256x1xf32>
    %3 = vector.extract_strided_slice %1 {offsets = [0, 0], sizes = [1, 128], strides = [1, 1]} : vector<3x128xf32> to vector<1x128xf32>
    %4 = vector.broadcast %2 : vector<256x1xf32> to vector<256x128xf32>
    %5 = vector.broadcast %3 : vector<1x128xf32> to vector<256x128xf32>
    %6 = arith.mulf %4, %5 : vector<256x128xf32>
    %7 = vector.extract_strided_slice %0 {offsets = [0, 1], sizes = [256, 1], strides = [1, 1]} : vector<256x3xf32> to vector<256x1xf32>
    %8 = vector.extract_strided_slice %1 {offsets = [1, 0], sizes = [1, 128], strides = [1, 1]} : vector<3x128xf32> to vector<1x128xf32>
    %9 = vector.broadcast %7 : vector<256x1xf32> to vector<256x128xf32>
    %10 = vector.broadcast %8 : vector<1x128xf32> to vector<256x128xf32>
    %11 = arith.mulf %9, %10 : vector<256x128xf32>
    %12 = arith.addf %6, %11 : vector<256x128xf32>
    %13 = vector.extract_strided_slice %0 {offsets = [0, 2], sizes = [256, 1], strides = [1, 1]} : vector<256x3xf32> to vector<256x1xf32>
    %14 = vector.extract_strided_slice %1 {offsets = [2, 0], sizes = [1, 128], strides = [1, 1]} : vector<3x128xf32> to vector<1x128xf32>
    %15 = vector.broadcast %13 : vector<256x1xf32> to vector<256x128xf32>
    %16 = vector.broadcast %14 : vector<1x128xf32> to vector<256x128xf32>
    %17 = arith.mulf %15, %16 : vector<256x128xf32>
    %18 = arith.addf %12, %17 : vector<256x128xf32>
    %c0_3 = arith.constant 0 : index
    %c0_4 = arith.constant 0 : index
    %19 = vector.load %arg3[%c0_3, %c0_4] : memref<1x128xf32, #tpu.memory_space<vmem>>, vector<1x128xf32>
    %20 = vector.broadcast %19 : vector<1x128xf32> to vector<256x128xf32>
    %21 = arith.addf %18, %20 : vector<256x128xf32>
    %cst = arith.constant dense<0.000000e+00> : vector<256xf32>
    %22 = vector.multi_reduction <add>, %21, %cst [1] : vector<256x128xf32> to vector<256xf32>
    %23 = vector.shape_cast %22 : vector<256xf32> to vector<256x1xf32>
    %cst_5 = arith.constant 1.280000e+02 : f32
    %24 = vector.broadcast %cst_5 : f32 to vector<256x1xf32>
    %25 = arith.divf %23, %24 : vector<256x1xf32>
    %26 = vector.broadcast %25 : vector<256x1xf32> to vector<256x128xf32>
    %27 = arith.subf %21, %26 : vector<256x128xf32>
    %28 = arith.mulf %27, %27 : vector<256x128xf32>
    %cst_6 = arith.constant dense<0.000000e+00> : vector<256xf32>
    %29 = vector.multi_reduction <add>, %28, %cst_6 [1] : vector<256x128xf32> to vector<256xf32>
    %30 = vector.shape_cast %29 : vector<256xf32> to vector<256x1xf32>
    %cst_7 = arith.constant 1.280000e+02 : f32
    %31 = vector.broadcast %cst_7 : f32 to vector<256x1xf32>
    %32 = arith.divf %30, %31 : vector<256x1xf32>
    %33 = vector.broadcast %25 : vector<256x1xf32> to vector<256x128xf32>
    %34 = arith.subf %21, %33 : vector<256x128xf32>
    %cst_8 = arith.constant 9.99999974E-6 : f32
    %35 = vector.broadcast %cst_8 : f32 to vector<256x1xf32>
    %36 = arith.addf %32, %35 : vector<256x1xf32>
    %37 = math.rsqrt %36 : vector<256x1xf32>
    %38 = vector.broadcast %37 : vector<256x1xf32> to vector<256x128xf32>
    %39 = arith.mulf %34, %38 : vector<256x128xf32>
    %cst_9 = arith.constant 0.000000e+00 : f32
    %40 = vector.broadcast %cst_9 : f32 to vector<256x128xf32>
    %41 = arith.cmpf oge, %39, %40 : vector<256x128xf32>
    %cst_10 = arith.constant 2.000000e-01 : f32
    %42 = vector.broadcast %cst_10 : f32 to vector<256x128xf32>
    %43 = arith.mulf %42, %39 : vector<256x128xf32>
    %44 = arith.select %41, %39, %43 : vector<256x128xi1>, vector<256x128xf32>
    %c0_11 = arith.constant 0 : index
    %c0_12 = arith.constant 0 : index
    %45 = vector.load %arg4[%c0_11, %c0_12] : memref<128x256xf32, #tpu.memory_space<vmem>>, vector<128x256xf32>
    %cst_13 = arith.constant dense<0.000000e+00> : vector<256x256xf32>
    %46 = tpu.matmul %44, %45, %cst_13 {dimension_numbers = #tpu.dot_dimension_numbers<[1], [0], [0], [1], [0, 0, 1, 1], [], []>} : vector<256x128xf32>, vector<128x256xf32>, vector<256x256xf32> -> vector<256x256xf32>
    %c0_14 = arith.constant 0 : index
    %c0_15 = arith.constant 0 : index
    %47 = vector.load %arg5[%c0_14, %c0_15] : memref<1x256xf32, #tpu.memory_space<vmem>>, vector<1x256xf32>
    %48 = vector.broadcast %47 : vector<1x256xf32> to vector<256x256xf32>
    %49 = arith.addf %46, %48 : vector<256x256xf32>
    %cst_16 = arith.constant dense<0.000000e+00> : vector<256xf32>
    %50 = vector.multi_reduction <add>, %49, %cst_16 [1] : vector<256x256xf32> to vector<256xf32>
    %51 = vector.shape_cast %50 : vector<256xf32> to vector<256x1xf32>
    %cst_17 = arith.constant 2.560000e+02 : f32
    %52 = vector.broadcast %cst_17 : f32 to vector<256x1xf32>
    %53 = arith.divf %51, %52 : vector<256x1xf32>
    %54 = vector.broadcast %53 : vector<256x1xf32> to vector<256x256xf32>
    %55 = arith.subf %49, %54 : vector<256x256xf32>
    %56 = arith.mulf %55, %55 : vector<256x256xf32>
    %cst_18 = arith.constant dense<0.000000e+00> : vector<256xf32>
    %57 = vector.multi_reduction <add>, %56, %cst_18 [1] : vector<256x256xf32> to vector<256xf32>
    %58 = vector.shape_cast %57 : vector<256xf32> to vector<256x1xf32>
    %cst_19 = arith.constant 2.560000e+02 : f32
    %59 = vector.broadcast %cst_19 : f32 to vector<256x1xf32>
    %60 = arith.divf %58, %59 : vector<256x1xf32>
    %61 = vector.broadcast %53 : vector<256x1xf32> to vector<256x256xf32>
    %62 = arith.subf %49, %61 : vector<256x256xf32>
    %cst_20 = arith.constant 9.99999974E-6 : f32
    %63 = vector.broadcast %cst_20 : f32 to vector<256x1xf32>
    %64 = arith.addf %60, %63 : vector<256x1xf32>
    %65 = math.rsqrt %64 : vector<256x1xf32>
    %66 = vector.broadcast %65 : vector<256x1xf32> to vector<256x256xf32>
    %67 = arith.mulf %62, %66 : vector<256x256xf32>
    %cst_21 = arith.constant 0.000000e+00 : f32
    %68 = vector.broadcast %cst_21 : f32 to vector<256x256xf32>
    %69 = arith.cmpf oge, %67, %68 : vector<256x256xf32>
    %cst_22 = arith.constant 2.000000e-01 : f32
    %70 = vector.broadcast %cst_22 : f32 to vector<256x256xf32>
    %71 = arith.mulf %70, %67 : vector<256x256xf32>
    %72 = arith.select %69, %67, %71 : vector<256x256xi1>, vector<256x256xf32>
    %c0_23 = arith.constant 0 : index
    %c0_24 = arith.constant 0 : index
    %73 = vector.load %arg6[%c0_23, %c0_24] : memref<256x128xf32, #tpu.memory_space<vmem>>, vector<256x128xf32>
    %cst_25 = arith.constant dense<0.000000e+00> : vector<256x128xf32>
    %74 = tpu.matmul %72, %73, %cst_25 {dimension_numbers = #tpu.dot_dimension_numbers<[1], [0], [0], [1], [0, 0, 1, 1], [], []>} : vector<256x256xf32>, vector<256x128xf32>, vector<256x128xf32> -> vector<256x128xf32>
    %c0_26 = arith.constant 0 : index
    %c0_27 = arith.constant 0 : index
    %75 = vector.load %arg7[%c0_26, %c0_27] : memref<1x128xf32, #tpu.memory_space<vmem>>, vector<1x128xf32>
    %76 = vector.broadcast %75 : vector<1x128xf32> to vector<256x128xf32>
    %77 = arith.addf %74, %76 : vector<256x128xf32>
    %cst_28 = arith.constant dense<0.000000e+00> : vector<256xf32>
    %78 = vector.multi_reduction <add>, %77, %cst_28 [1] : vector<256x128xf32> to vector<256xf32>
    %79 = vector.shape_cast %78 : vector<256xf32> to vector<256x1xf32>
    %cst_29 = arith.constant 1.280000e+02 : f32
    %80 = vector.broadcast %cst_29 : f32 to vector<256x1xf32>
    %81 = arith.divf %79, %80 : vector<256x1xf32>
    %82 = vector.broadcast %81 : vector<256x1xf32> to vector<256x128xf32>
    %83 = arith.subf %77, %82 : vector<256x128xf32>
    %84 = arith.mulf %83, %83 : vector<256x128xf32>
    %cst_30 = arith.constant dense<0.000000e+00> : vector<256xf32>
    %85 = vector.multi_reduction <add>, %84, %cst_30 [1] : vector<256x128xf32> to vector<256xf32>
    %86 = vector.shape_cast %85 : vector<256xf32> to vector<256x1xf32>
    %cst_31 = arith.constant 1.280000e+02 : f32
    %87 = vector.broadcast %cst_31 : f32 to vector<256x1xf32>
    %88 = arith.divf %86, %87 : vector<256x1xf32>
    %89 = vector.broadcast %81 : vector<256x1xf32> to vector<256x128xf32>
    %90 = arith.subf %77, %89 : vector<256x128xf32>
    %cst_32 = arith.constant 9.99999974E-6 : f32
    %91 = vector.broadcast %cst_32 : f32 to vector<256x1xf32>
    %92 = arith.addf %88, %91 : vector<256x1xf32>
    %93 = math.rsqrt %92 : vector<256x1xf32>
    %94 = vector.broadcast %93 : vector<256x1xf32> to vector<256x128xf32>
    %95 = arith.mulf %90, %94 : vector<256x128xf32>
    %cst_33 = arith.constant 0.000000e+00 : f32
    %96 = vector.broadcast %cst_33 : f32 to vector<256x128xf32>
    %97 = arith.cmpf oge, %95, %96 : vector<256x128xf32>
    %cst_34 = arith.constant 2.000000e-01 : f32
    %98 = vector.broadcast %cst_34 : f32 to vector<256x128xf32>
    %99 = arith.mulf %98, %95 : vector<256x128xf32>
    %100 = arith.select %97, %95, %99 : vector<256x128xi1>, vector<256x128xf32>
    %c0_35 = arith.constant 0 : index
    %c0_36 = arith.constant 0 : index
    %101 = vector.load %arg8[%c0_35, %c0_36] : memref<128x16xf32, #tpu.memory_space<vmem>>, vector<128x16xf32>
    %cst_37 = arith.constant dense<0.000000e+00> : vector<256x16xf32>
    %102 = tpu.matmul %100, %101, %cst_37 {dimension_numbers = #tpu.dot_dimension_numbers<[1], [0], [0], [1], [0, 0, 1, 1], [], []>} : vector<256x128xf32>, vector<128x16xf32>, vector<256x16xf32> -> vector<256x16xf32>
    %c0_38 = arith.constant 0 : index
    %c0_39 = arith.constant 0 : index
    %103 = vector.load %arg9[%c0_38, %c0_39] : memref<1x16xf32, #tpu.memory_space<vmem>>, vector<1x16xf32>
    %104 = vector.broadcast %103 : vector<1x16xf32> to vector<256x16xf32>
    %105 = arith.addf %102, %104 : vector<256x16xf32>
    %c0_40 = arith.constant 0 : index
    %c0_41 = arith.constant 0 : index
    %106 = vector.load %arg10[%c0_40, %c0_41] : memref<256x16xf32, #tpu.memory_space<vmem>>, vector<256x16xf32>
    tpu.vector_store %arg10[%c0_40, %c0_41], %105 {strides = array<i32>} : memref<256x16xf32, #tpu.memory_space<vmem>>, vector<256x16xf32>,
    return
  }
  func.func @transform_0(%arg0: i32) -> (i32, i32) {
    %c0_i32 = arith.constant 0 : i32
    %c0_i32_0 = arith.constant 0 : i32
    return %arg0, %c0_i32 : i32, i32
  }
  func.func @transform_1(%arg0: i32) -> (i32, i32) {
    %c0_i32 = arith.constant 0 : i32
    %c0_i32_0 = arith.constant 0 : i32
    %c0_i32_1 = arith.constant 0 : i32
    return %c0_i32, %c0_i32_0 : i32, i32
  }
  func.func @transform_2(%arg0: i32) -> (i32, i32) {
    %c0_i32 = arith.constant 0 : i32
    %c0_i32_0 = arith.constant 0 : i32
    %c0_i32_1 = arith.constant 0 : i32
    return %c0_i32, %c0_i32_0 : i32, i32
  }
  func.func @transform_3(%arg0: i32) -> (i32, i32) {
    %c0_i32 = arith.constant 0 : i32
    %c0_i32_0 = arith.constant 0 : i32
    %c0_i32_1 = arith.constant 0 : i32
    return %c0_i32, %c0_i32_0 : i32, i32
  }
  func.func @transform_4(%arg0: i32) -> (i32, i32) {
    %c0_i32 = arith.constant 0 : i32
    %c0_i32_0 = arith.constant 0 : i32
    %c0_i32_1 = arith.constant 0 : i32
    return %c0_i32, %c0_i32_0 : i32, i32
  }
  func.func @transform_5(%arg0: i32) -> (i32, i32) {
    %c0_i32 = arith.constant 0 : i32
    %c0_i32_0 = arith.constant 0 : i32
    %c0_i32_1 = arith.constant 0 : i32
    return %c0_i32, %c0_i32_0 : i32, i32
  }
  func.func @transform_6(%arg0: i32) -> (i32, i32) {
    %c0_i32 = arith.constant 0 : i32
    %c0_i32_0 = arith.constant 0 : i32
    %c0_i32_1 = arith.constant 0 : i32
    return %c0_i32, %c0_i32_0 : i32, i32
  }
  func.func @transform_7(%arg0: i32) -> (i32, i32) {
    %c0_i32 = arith.constant 0 : i32
    %c0_i32_0 = arith.constant 0 : i32
    %c0_i32_1 = arith.constant 0 : i32
    return %c0_i32, %c0_i32_0 : i32, i32
  }
  func.func @transform_8(%arg0: i32) -> (i32, i32) {
    %c0_i32 = arith.constant 0 : i32
    %c0_i32_0 = arith.constant 0 : i32
    %c0_i32_1 = arith.constant 0 : i32
    return %c0_i32, %c0_i32_0 : i32, i32
  }
  func.func @transform_9(%arg0: i32) -> (i32, i32) {
    %c0_i32 = arith.constant 0 : i32
    %c0_i32_0 = arith.constant 0 : i32
    return %arg0, %c0_i32 : i32, i32
  }
}

</mosaic_0001>

<llo_original>
// kernel: tpu_custom_call.1
$region0: #{tpu_custom_call.1}
  #allocation0 [shape = 'u32[]', space=smem, size = 0x4, offset = 0x4, fixed_abs, tag = 'smem constant byte address 0x4 - core index']
  #allocation1 [shape = 'u32[72,128]{1,0:T(1,128)}', space=vmem, size = 0x9000, scoped, tag = 'internal scratch']
  %s0 = inlined_call_operand.vmem [shape: f32[256,3], index: 0, kind: input, shape index: {}]
  %s1 = inlined_call_operand.vmem [shape: f32[3,128], index: 1, kind: input, shape index: {}]
  %s2 = inlined_call_operand.vmem [shape: f32[1,128], index: 2, kind: input, shape index: {}]
  %s3 = inlined_call_operand.vmem [shape: f32[128,256], index: 3, kind: input, shape index: {}]
  %s4 = inlined_call_operand.vmem [shape: f32[1,256], index: 4, kind: input, shape index: {}]
  %s5 = inlined_call_operand.hbm [shape: f32[256,128], index: 5, kind: input, shape index: {}]
  %s6 = inlined_call_operand.vmem [shape: f32[1,128], index: 6, kind: input, shape index: {}]
  %s7 = inlined_call_operand.vmem [shape: f32[128,16], index: 7, kind: input, shape index: {}]
  %s8 = inlined_call_operand.vmem [shape: f32[1,16], index: 8, kind: input, shape index: {}]
  %s9 = inlined_call_operand.vmem [shape: f32[256,16], index: 9, kind: output, shape index: {}]
  %s10 = sld [smem:[#allocation0]]
  $region50: #{tpu_custom_call.1} parent=0
    _
  %s12 = ssub.s32 1, %s10
  %s13 = scalar_select 0, %s12, %s10
  $region1: #{tpu_custom_call.1} parent=0
    #allocation2 [shape = 'u8[131072]{0}', space=vmem, size = 0x20000, scoped, tag = 'input window, operand 5, single buffered']
    #allocation3 [shape = 's32[1]{0}', space=sflag, size = 0x4, scoped, tag = 'scoped memory for tpu_custom_call.1']
    %14 = vsyncpa [#allocation3], 0
    // Predicated region
    $region2: #{tpu_custom_call.1} parent=1 // pred_check
      _
    $region3: #{tpu_custom_call.1} parent=1 // pred_check_branch
      %16 = sbr.rel (0) target = $region5
    $region4: #{tpu_custom_call.1} parent=1 // pred_region
      _
    $region5: #{tpu_custom_call.1} parent=1 // pred_fallthru
      _
    // Predicated region
    $region6: #{tpu_custom_call.1} parent=1 // pred_check
      _
    $region7: #{tpu_custom_call.1} parent=1 // pred_check_branch
      %18 = sbr.rel (0) target = $region9
    $region8: #{tpu_custom_call.1} parent=1 // pred_region
      _
    $region9: #{tpu_custom_call.1} parent=1 // pred_fallthru
      _
    // Predicated region
    $region10: #{tpu_custom_call.1} parent=1 // pred_check
      _
    $region11: #{tpu_custom_call.1} parent=1 // pred_check_branch
      %20 = sbr.rel (0) target = $region13
    $region12: #{tpu_custom_call.1} parent=1 // pred_region
      _
    $region13: #{tpu_custom_call.1} parent=1 // pred_fallthru
      _
    // Predicated region
    $region14: #{tpu_custom_call.1} parent=1 // pred_check
      _
    $region15: #{tpu_custom_call.1} parent=1 // pred_check_branch
      %22 = sbr.rel (0) target = $region17
    $region16: #{tpu_custom_call.1} parent=1 // pred_region
      _
    $region17: #{tpu_custom_call.1} parent=1 // pred_fallthru
      _
    // Predicated region
    $region18: #{tpu_custom_call.1} parent=1 // pred_check
      _
    $region19: #{tpu_custom_call.1} parent=1 // pred_check_branch
      %24 = sbr.rel (0) target = $region21
    $region20: #{tpu_custom_call.1} parent=1 // pred_region
      _
    $region21: #{tpu_custom_call.1} parent=1 // pred_fallthru
      _
    // Predicated region
    $region22: #{tpu_custom_call.1} parent=1 // pred_check
      _
    $region23: #{tpu_custom_call.1} parent=1 // pred_check_branch
      %26 = sbr.rel (0) target = $region25
    $region24: #{tpu_custom_call.1} parent=1 // pred_region
      %28 = vsyncadd [#allocation3], 0
      %s29 = sshll.u32 %s5, 4
      %s30 = int_to_ptr.hbm [resolvable:$true] %s29
      %s31 = sshll.u32 [#allocation2], 4
      %s32 = int_to_ptr.vmem [resolvable:$true] %s31
      %37 = dma.hbm_to_vmem [thread:$0]  %s30, 4096, %s32, [#allocation3], 128, 128, 8
    $region25: #{tpu_custom_call.1} parent=1 // pred_fallthru
      _
    // Predicated region
    $region26: #{tpu_custom_call.1} parent=1 // pred_check
      _
    $region27: #{tpu_custom_call.1} parent=1 // pred_check_branch
      %39 = sbr.rel (0) target = $region29
    $region28: #{tpu_custom_call.1} parent=1 // pred_region
      _
    $region29: #{tpu_custom_call.1} parent=1 // pred_fallthru
      _
    // Predicated region
    $region30: #{tpu_custom_call.1} parent=1 // pred_check
      _
    $region31: #{tpu_custom_call.1} parent=1 // pred_check_branch
      %41 = sbr.rel (0) target = $region33
    $region32: #{tpu_custom_call.1} parent=1 // pred_region
      _
    $region33: #{tpu_custom_call.1} parent=1 // pred_fallthru
      _
    // Predicated region
    $region34: #{tpu_custom_call.1} parent=1 // pred_check
      _
    $region35: #{tpu_custom_call.1} parent=1 // pred_check_branch
      %43 = sbr.rel (0) target = $region37
    $region36: #{tpu_custom_call.1} parent=1 // pred_region
      _
    $region37: #{tpu_custom_call.1} parent=1 // pred_fallthru
      _
    // Predicated region
    $region38: #{tpu_custom_call.1} parent=1 // pred_check
      _
    $region39: #{tpu_custom_call.1} parent=1 // pred_check_branch
      %45 = sbr.rel (0) target = $region41
    $region40: #{tpu_custom_call.1} parent=1 // pred_region
      %47 = dma.done [#allocation3], 4096
    $region41: #{tpu_custom_call.1} parent=1 // pred_fallthru
      _
    %v48 = vld [vmem:[%s0] sm:$0xff]
    %v49 = vld [vmem:[%s0 + $0x8] sm:$0xff]
    %v50 = vld [vmem:[%s0 + $0x10] sm:$0xff]
    %v51 = vld [vmem:[%s0 + $0x18] sm:$0xff]
    %v52 = vld [vmem:[%s0 + $0x20] sm:$0xff]
    %v53 = vld [vmem:[%s0 + $0x28] sm:$0xff]
    %v54 = vld [vmem:[%s0 + $0x30] sm:$0xff]
    %v55 = vld [vmem:[%s0 + $0x38] sm:$0xff]
    %v56 = vld [vmem:[%s0 + $0x40] sm:$0xff]
    %v57 = vld [vmem:[%s0 + $0x48] sm:$0xff]
    %v58 = vld [vmem:[%s0 + $0x50] sm:$0xff]
    %v59 = vld [vmem:[%s0 + $0x58] sm:$0xff]
    %v60 = vld [vmem:[%s0 + $0x60] sm:$0xff]
    %v61 = vld [vmem:[%s0 + $0x68] sm:$0xff]
    %v62 = vld [vmem:[%s0 + $0x70] sm:$0xff]
    %v63 = vld [vmem:[%s0 + $0x78] sm:$0xff]
    %v64 = vld [vmem:[%s0 + $0x80] sm:$0xff]
    %v65 = vld [vmem:[%s0 + $0x88] sm:$0xff]
    %v66 = vld [vmem:[%s0 + $0x90] sm:$0xff]
    %v67 = vld [vmem:[%s0 + $0x98] sm:$0xff]
    %v68 = vld [vmem:[%s0 + $0xa0] sm:$0xff]
    %v69 = vld [vmem:[%s0 + $0xa8] sm:$0xff]
    %v70 = vld [vmem:[%s0 + $0xb0] sm:$0xff]
    %v71 = vld [vmem:[%s0 + $0xb8] sm:$0xff]
    %v72 = vld [vmem:[%s0 + $0xc0] sm:$0xff]
    %v73 = vld [vmem:[%s0 + $0xc8] sm:$0xff]
    %v74 = vld [vmem:[%s0 + $0xd0] sm:$0xff]
    %v75 = vld [vmem:[%s0 + $0xd8] sm:$0xff]
    %v76 = vld [vmem:[%s0 + $0xe0] sm:$0xff]
    %v77 = vld [vmem:[%s0 + $0xe8] sm:$0xff]
    %v78 = vld [vmem:[%s0 + $0xf0] sm:$0xff]
    %v79 = vld [vmem:[%s0 + $0xf8] sm:$0xff]
    %v80 = vld [vmem:[%s1] sm:$0x7]
    %82 = vset.pattern.permute.xlu0 0
    %83 = vperm.xlu0 %82, %v48
    %v84 = vpop.permute.xlu0 %83
    %87 = vset.pattern.permute.xlu0 0
    %88 = vperm.xlu0 %87, %v49
    %v89 = vpop.permute.xlu0 %88
    %92 = vset.pattern.permute.xlu0 0
    %93 = vperm.xlu0 %92, %v50
    %v94 = vpop.permute.xlu0 %93
    %97 = vset.pattern.permute.xlu0 0
    %98 = vperm.xlu0 %97, %v51
    %v99 = vpop.permute.xlu0 %98
    %102 = vset.pattern.permute.xlu0 0
    %103 = vperm.xlu0 %102, %v52
    %v104 = vpop.permute.xlu0 %103
    %107 = vset.pattern.permute.xlu0 0
    %108 = vperm.xlu0 %107, %v53
    %v109 = vpop.permute.xlu0 %108
    %112 = vset.pattern.permute.xlu0 0
    %113 = vperm.xlu0 %112, %v54
    %v114 = vpop.permute.xlu0 %113
    %117 = vset.pattern.permute.xlu0 0
    %118 = vperm.xlu0 %117, %v55
    %v119 = vpop.permute.xlu0 %118
    %122 = vset.pattern.permute.xlu0 0
    %123 = vperm.xlu0 %122, %v56
    %v124 = vpop.permute.xlu0 %123
    %127 = vset.pattern.permute.xlu0 0
    %128 = vperm.xlu0 %127, %v57
    %v129 = vpop.permute.xlu0 %128
    %132 = vset.pattern.permute.xlu0 0
    %133 = vperm.xlu0 %132, %v58
    %v134 = vpop.permute.xlu0 %133
    %137 = vset.pattern.permute.xlu0 0
    %138 = vperm.xlu0 %137, %v59
    %v139 = vpop.permute.xlu0 %138
    %142 = vset.pattern.permute.xlu0 0
    %143 = vperm.xlu0 %142, %v60
    %v144 = vpop.permute.xlu0 %143
    %147 = vset.pattern.permute.xlu0 0
    %148 = vperm.xlu0 %147, %v61
    %v149 = vpop.permute.xlu0 %148
    %152 = vset.pattern.permute.xlu0 0
    %153 = vperm.xlu0 %152, %v62
    %v154 = vpop.permute.xlu0 %153
    %157 = vset.pattern.permute.xlu0 0
    %158 = vperm.xlu0 %157, %v63
    %v159 = vpop.permute.xlu0 %158
    %162 = vset.pattern.permute.xlu0 0
    %163 = vperm.xlu0 %162, %v64
    %v164 = vpop.permute.xlu0 %163
    %167 = vset.pattern.permute.xlu0 0
    %168 = vperm.xlu0 %167, %v65
    %v169 = vpop.permute.xlu0 %168
    %172 = vset.pattern.permute.xlu0 0
    %173 = vperm.xlu0 %172, %v66
    %v174 = vpop.permute.xlu0 %173
    %177 = vset.pattern.permute.xlu0 0
    %178 = vperm.xlu0 %177, %v67
    %v179 = vpop.permute.xlu0 %178
    %182 = vset.pattern.permute.xlu0 0
    %183 = vperm.xlu0 %182, %v68
    %v184 = vpop.permute.xlu0 %183
    %187 = vset.pattern.permute.xlu0 0
    %188 = vperm.xlu0 %187, %v69
    %v189 = vpop.permute.xlu0 %188
    %192 = vset.pattern.permute.xlu0 0
    %193 = vperm.xlu0 %192, %v70
    %v194 = vpop.permute.xlu0 %193
    %197 = vset.pattern.permute.xlu0 0
    %198 = vperm.xlu0 %197, %v71
    %v199 = vpop.permute.xlu0 %198
    %202 = vset.pattern.permute.xlu0 0
    %203 = vperm.xlu0 %202, %v72
    %v204 = vpop.permute.xlu0 %203
    %207 = vset.pattern.permute.xlu0 0
    %208 = vperm.xlu0 %207, %v73
    %v209 = vpop.permute.xlu0 %208
    %212 = vset.pattern.permute.xlu0 0
    %213 = vperm.xlu0 %212, %v74
    %v214 = vpop.permute.xlu0 %213
    %217 = vset.pattern.permute.xlu0 0
    %218 = vperm.xlu0 %217, %v75
    %v219 = vpop.permute.xlu0 %218
    %222 = vset.pattern.permute.xlu0 0
    %223 = vperm.xlu0 %222, %v76
    %v224 = vpop.permute.xlu0 %223
    %227 = vset.pattern.permute.xlu0 0
    %228 = vperm.xlu0 %227, %v77
    %v229 = vpop.permute.xlu0 %228
    %232 = vset.pattern.permute.xlu0 0
    %233 = vperm.xlu0 %232, %v78
    %v234 = vpop.permute.xlu0 %233
    %237 = vset.pattern.permute.xlu0 0
    %238 = vperm.xlu0 %237, %v79
    %v239 = vpop.permute.xlu0 %238
    %v241 = vperm.slane %v80, 0
    %v242 = vmul.f32 %v84, %v241
    %v243 = vmul.f32 %v89, %v241
    %v244 = vmul.f32 %v94, %v241
    %v245 = vmul.f32 %v99, %v241
    %v246 = vmul.f32 %v104, %v241
    %v247 = vmul.f32 %v109, %v241
    %v248 = vmul.f32 %v114, %v241
    %v249 = vmul.f32 %v119, %v241
    %v250 = vmul.f32 %v124, %v241
    %v251 = vmul.f32 %v129, %v241
    %v252 = vmul.f32 %v134, %v241
    %v253 = vmul.f32 %v139, %v241
    %v254 = vmul.f32 %v144, %v241
    %v255 = vmul.f32 %v149, %v241
    %v256 = vmul.f32 %v154, %v241
    %v257 = vmul.f32 %v159, %v241
    %v258 = vmul.f32 %v164, %v241
    %v259 = vmul.f32 %v169, %v241
    %v260 = vmul.f32 %v174, %v241
    %v261 = vmul.f32 %v179, %v241
    %v262 = vmul.f32 %v184, %v241
    %v263 = vmul.f32 %v189, %v241
    %v264 = vmul.f32 %v194, %v241
    %v265 = vmul.f32 %v199, %v241
    %v266 = vmul.f32 %v204, %v241
    %v267 = vmul.f32 %v209, %v241
    %v268 = vmul.f32 %v214, %v241
    %v269 = vmul.f32 %v219, %v241
    %v270 = vmul.f32 %v224, %v241
    %v271 = vmul.f32 %v229, %v241
    %v272 = vmul.f32 %v234, %v241
    %v273 = vmul.f32 %v239, %v241
    %274 = vset.pattern.permute.xlu0 1
    %275 = vperm.xlu0 %274, %v48
    %v276 = vpop.permute.xlu0 %275
    %278 = vset.pattern.permute.xlu0 1
    %279 = vperm.xlu0 %278, %v49
    %v280 = vpop.permute.xlu0 %279
    %282 = vset.pattern.permute.xlu0 1
    %283 = vperm.xlu0 %282, %v50
    %v284 = vpop.permute.xlu0 %283
    %286 = vset.pattern.permute.xlu0 1
    %287 = vperm.xlu0 %286, %v51
    %v288 = vpop.permute.xlu0 %287
    %290 = vset.pattern.permute.xlu0 1
    %291 = vperm.xlu0 %290, %v52
    %v292 = vpop.permute.xlu0 %291
    %294 = vset.pattern.permute.xlu0 1
    %295 = vperm.xlu0 %294, %v53
    %v296 = vpop.permute.xlu0 %295
    %298 = vset.pattern.permute.xlu0 1
    %299 = vperm.xlu0 %298, %v54
    %v300 = vpop.permute.xlu0 %299
    %302 = vset.pattern.permute.xlu0 1
    %303 = vperm.xlu0 %302, %v55
    %v304 = vpop.permute.xlu0 %303
    %306 = vset.pattern.permute.xlu0 1
    %307 = vperm.xlu0 %306, %v56
    %v308 = vpop.permute.xlu0 %307
    %310 = vset.pattern.permute.xlu0 1
    %311 = vperm.xlu0 %310, %v57
    %v312 = vpop.permute.xlu0 %311
    %314 = vset.pattern.permute.xlu0 1
    %315 = vperm.xlu0 %314, %v58
    %v316 = vpop.permute.xlu0 %315
    %318 = vset.pattern.permute.xlu0 1
    %319 = vperm.xlu0 %318, %v59
    %v320 = vpop.permute.xlu0 %319
    %322 = vset.pattern.permute.xlu0 1
    %323 = vperm.xlu0 %322, %v60
    %v324 = vpop.permute.xlu0 %323
    %326 = vset.pattern.permute.xlu0 1
    %327 = vperm.xlu0 %326, %v61
    %v328 = vpop.permute.xlu0 %327
    %330 = vset.pattern.permute.xlu0 1
    %331 = vperm.xlu0 %330, %v62
    %v332 = vpop.permute.xlu0 %331
    %334 = vset.pattern.permute.xlu0 1
    %335 = vperm.xlu0 %334, %v63
    %v336 = vpop.permute.xlu0 %335
    %338 = vset.pattern.permute.xlu0 1
    %339 = vperm.xlu0 %338, %v64
    %v340 = vpop.permute.xlu0 %339
    %342 = vset.pattern.permute.xlu0 1
    %343 = vperm.xlu0 %342, %v65
    %v344 = vpop.permute.xlu0 %343
    %346 = vset.pattern.permute.xlu0 1
    %347 = vperm.xlu0 %346, %v66
    %v348 = vpop.permute.xlu0 %347
    %350 = vset.pattern.permute.xlu0 1
    %351 = vperm.xlu0 %350, %v67
    %v352 = vpop.permute.xlu0 %351
    %354 = vset.pattern.permute.xlu0 1
    %355 = vperm.xlu0 %354, %v68
    %v356 = vpop.permute.xlu0 %355
    %358 = vset.pattern.permute.xlu0 1
    %359 = vperm.xlu0 %358, %v69
    %v360 = vpop.permute.xlu0 %359
    %362 = vset.pattern.permute.xlu0 1
    %363 = vperm.xlu0 %362, %v70
    %v364 = vpop.permute.xlu0 %363
    %366 = vset.pattern.permute.xlu0 1
    %367 = vperm.xlu0 %366, %v71
    %v368 = vpop.permute.xlu0 %367
    %370 = vset.pattern.permute.xlu0 1
    %371 = vperm.xlu0 %370, %v72
    %v372 = vpop.permute.xlu0 %371
    %374 = vset.pattern.permute.xlu0 1
    %375 = vperm.xlu0 %374, %v73
    %v376 = vpop.permute.xlu0 %375
    %378 = vset.pattern.permute.xlu0 1
    %379 = vperm.xlu0 %378, %v74
    %v380 = vpop.permute.xlu0 %379
    %382 = vset.pattern.permute.xlu0 1
    %383 = vperm.xlu0 %382, %v75
    %v384 = vpop.permute.xlu0 %383
    %386 = vset.pattern.permute.xlu0 1
    %387 = vperm.xlu0 %386, %v76
    %v388 = vpop.permute.xlu0 %387
    %390 = vset.pattern.permute.xlu0 1
    %391 = vperm.xlu0 %390, %v77
    %v392 = vpop.permute.xlu0 %391
    %394 = vset.pattern.permute.xlu0 1
    %395 = vperm.xlu0 %394, %v78
    %v396 = vpop.permute.xlu0 %395
    %398 = vset.pattern.permute.xlu0 1
    %399 = vperm.xlu0 %398, %v79
    %v400 = vpop.permute.xlu0 %399
    %v402 = vperm.slane %v80, 1
    %v403 = vmul.f32 %v276, %v402
    %v404 = vmul.f32 %v280, %v402
    %v405 = vmul.f32 %v284, %v402
    %v406 = vmul.f32 %v288, %v402
    %v407 = vmul.f32 %v292, %v402
    %v408 = vmul.f32 %v296, %v402
    %v409 = vmul.f32 %v300, %v402
    %v410 = vmul.f32 %v304, %v402
    %v411 = vmul.f32 %v308, %v402
    %v412 = vmul.f32 %v312, %v402
    %v413 = vmul.f32 %v316, %v402
    %v414 = vmul.f32 %v320, %v402
    %v415 = vmul.f32 %v324, %v402
    %v416 = vmul.f32 %v328, %v402
    %v417 = vmul.f32 %v332, %v402
    %v418 = vmul.f32 %v336, %v402
    %v419 = vmul.f32 %v340, %v402
    %v420 = vmul.f32 %v344, %v402
    %v421 = vmul.f32 %v348, %v402
    %v422 = vmul.f32 %v352, %v402
    %v423 = vmul.f32 %v356, %v402
    %v424 = vmul.f32 %v360, %v402
    %v425 = vmul.f32 %v364, %v402
    %v426 = vmul.f32 %v368, %v402
    %v427 = vmul.f32 %v372, %v402
    %v428 = vmul.f32 %v376, %v402
    %v429 = vmul.f32 %v380, %v402
    %v430 = vmul.f32 %v384, %v402
    %v431 = vmul.f32 %v388, %v402
    %v432 = vmul.f32 %v392, %v402
    %v433 = vmul.f32 %v396, %v402
    %v434 = vmul.f32 %v400, %v402
    %v435 = vadd.f32 %v242, %v403
    %v436 = vadd.f32 %v243, %v404
    %v437 = vadd.f32 %v244, %v405
    %v438 = vadd.f32 %v245, %v406
    %v439 = vadd.f32 %v246, %v407
    %v440 = vadd.f32 %v247, %v408
    %v441 = vadd.f32 %v248, %v409
    %v442 = vadd.f32 %v249, %v410
    %v443 = vadd.f32 %v250, %v411
    %v444 = vadd.f32 %v251, %v412
    %v445 = vadd.f32 %v252, %v413
    %v446 = vadd.f32 %v253, %v414
    %v447 = vadd.f32 %v254, %v415
    %v448 = vadd.f32 %v255, %v416
    %v449 = vadd.f32 %v256, %v417
    %v450 = vadd.f32 %v257, %v418
    %v451 = vadd.f32 %v258, %v419
    %v452 = vadd.f32 %v259, %v420
    %v453 = vadd.f32 %v260, %v421
    %v454 = vadd.f32 %v261, %v422
    %v455 = vadd.f32 %v262, %v423
    %v456 = vadd.f32 %v263, %v424
    %v457 = vadd.f32 %v264, %v425
    %v458 = vadd.f32 %v265, %v426
    %v459 = vadd.f32 %v266, %v427
    %v460 = vadd.f32 %v267, %v428
    %v461 = vadd.f32 %v268, %v429
    %v462 = vadd.f32 %v269, %v430
    %v463 = vadd.f32 %v270, %v431
    %v464 = vadd.f32 %v271, %v432
    %v465 = vadd.f32 %v272, %v433
    %v466 = vadd.f32 %v273, %v434
    %467 = vset.pattern.permute.xlu0 2
    %468 = vperm.xlu0 %467, %v48
    %v469 = vpop.permute.xlu0 %468
    %471 = vset.pattern.permute.xlu0 2
    %472 = vperm.xlu0 %471, %v49
    %v473 = vpop.permute.xlu0 %472
    %475 = vset.pattern.permute.xlu0 2
    %476 = vperm.xlu0 %475, %v50
    %v477 = vpop.permute.xlu0 %476
    %479 = vset.pattern.permute.xlu0 2
    %480 = vperm.xlu0 %479, %v51
    %v481 = vpop.permute.xlu0 %480
    %483 = vset.pattern.permute.xlu0 2
    %484 = vperm.xlu0 %483, %v52
    %v485 = vpop.permute.xlu0 %484
    %487 = vset.pattern.permute.xlu0 2
    %488 = vperm.xlu0 %487, %v53
    %v489 = vpop.permute.xlu0 %488
    %491 = vset.pattern.permute.xlu0 2
    %492 = vperm.xlu0 %491, %v54
    %v493 = vpop.permute.xlu0 %492
    %495 = vset.pattern.permute.xlu0 2
    %496 = vperm.xlu0 %495, %v55
    %v497 = vpop.permute.xlu0 %496
    %499 = vset.pattern.permute.xlu0 2
    %500 = vperm.xlu0 %499, %v56
    %v501 = vpop.permute.xlu0 %500
    %503 = vset.pattern.permute.xlu0 2
    %504 = vperm.xlu0 %503, %v57
    %v505 = vpop.permute.xlu0 %504
    %507 = vset.pattern.permute.xlu0 2
    %508 = vperm.xlu0 %507, %v58
    %v509 = vpop.permute.xlu0 %508
    %511 = vset.pattern.permute.xlu0 2
    %512 = vperm.xlu0 %511, %v59
    %v513 = vpop.permute.xlu0 %512
    %515 = vset.pattern.permute.xlu0 2
    %516 = vperm.xlu0 %515, %v60
    %v517 = vpop.permute.xlu0 %516
    %519 = vset.pattern.permute.xlu0 2
    %520 = vperm.xlu0 %519, %v61
    %v521 = vpop.permute.xlu0 %520
    %523 = vset.pattern.permute.xlu0 2
    %524 = vperm.xlu0 %523, %v62
    %v525 = vpop.permute.xlu0 %524
    %527 = vset.pattern.permute.xlu0 2
    %528 = vperm.xlu0 %527, %v63
    %v529 = vpop.permute.xlu0 %528
    %531 = vset.pattern.permute.xlu0 2
    %532 = vperm.xlu0 %531, %v64
    %v533 = vpop.permute.xlu0 %532
    %535 = vset.pattern.permute.xlu0 2
    %536 = vperm.xlu0 %535, %v65
    %v537 = vpop.permute.xlu0 %536
    %539 = vset.pattern.permute.xlu0 2
    %540 = vperm.xlu0 %539, %v66
    %v541 = vpop.permute.xlu0 %540
    %543 = vset.pattern.permute.xlu0 2
    %544 = vperm.xlu0 %543, %v67
    %v545 = vpop.permute.xlu0 %544
    %547 = vset.pattern.permute.xlu0 2
    %548 = vperm.xlu0 %547, %v68
    %v549 = vpop.permute.xlu0 %548
    %551 = vset.pattern.permute.xlu0 2
    %552 = vperm.xlu0 %551, %v69
    %v553 = vpop.permute.xlu0 %552
    %555 = vset.pattern.permute.xlu0 2
    %556 = vperm.xlu0 %555, %v70
    %v557 = vpop.permute.xlu0 %556
    %559 = vset.pattern.permute.xlu0 2
    %560 = vperm.xlu0 %559, %v71
    %v561 = vpop.permute.xlu0 %560
    %563 = vset.pattern.permute.xlu0 2
    %564 = vperm.xlu0 %563, %v72
    %v565 = vpop.permute.xlu0 %564
    %567 = vset.pattern.permute.xlu0 2
    %568 = vperm.xlu0 %567, %v73
    %v569 = vpop.permute.xlu0 %568
    %571 = vset.pattern.permute.xlu0 2
    %572 = vperm.xlu0 %571, %v74
    %v573 = vpop.permute.xlu0 %572
    %575 = vset.pattern.permute.xlu0 2
    %576 = vperm.xlu0 %575, %v75
    %v577 = vpop.permute.xlu0 %576
    %579 = vset.pattern.permute.xlu0 2
    %580 = vperm.xlu0 %579, %v76
    %v581 = vpop.permute.xlu0 %580
    %583 = vset.pattern.permute.xlu0 2
    %584 = vperm.xlu0 %583, %v77
    %v585 = vpop.permute.xlu0 %584
    %587 = vset.pattern.permute.xlu0 2
    %588 = vperm.xlu0 %587, %v78
    %v589 = vpop.permute.xlu0 %588
    %591 = vset.pattern.permute.xlu0 2
    %592 = vperm.xlu0 %591, %v79
    %v593 = vpop.permute.xlu0 %592
    %v595 = vperm.slane %v80, 2
    %v596 = vmul.f32 %v469, %v595
    %v597 = vmul.f32 %v473, %v595
    %v598 = vmul.f32 %v477, %v595
    %v599 = vmul.f32 %v481, %v595
    %v600 = vmul.f32 %v485, %v595
    %v601 = vmul.f32 %v489, %v595
    %v602 = vmul.f32 %v493, %v595
    %v603 = vmul.f32 %v497, %v595
    %v604 = vmul.f32 %v501, %v595
    %v605 = vmul.f32 %v505, %v595
    %v606 = vmul.f32 %v509, %v595
    %v607 = vmul.f32 %v513, %v595
    %v608 = vmul.f32 %v517, %v595
    %v609 = vmul.f32 %v521, %v595
    %v610 = vmul.f32 %v525, %v595
    %v611 = vmul.f32 %v529, %v595
    %v612 = vmul.f32 %v533, %v595
    %v613 = vmul.f32 %v537, %v595
    %v614 = vmul.f32 %v541, %v595
    %v615 = vmul.f32 %v545, %v595
    %v616 = vmul.f32 %v549, %v595
    %v617 = vmul.f32 %v553, %v595
    %v618 = vmul.f32 %v557, %v595
    %v619 = vmul.f32 %v561, %v595
    %v620 = vmul.f32 %v565, %v595
    %v621 = vmul.f32 %v569, %v595
    %v622 = vmul.f32 %v573, %v595
    %v623 = vmul.f32 %v577, %v595
    %v624 = vmul.f32 %v581, %v595
    %v625 = vmul.f32 %v585, %v595
    %v626 = vmul.f32 %v589, %v595
    %v627 = vmul.f32 %v593, %v595
    %v628 = vadd.f32 %v435, %v596
    %v629 = vadd.f32 %v436, %v597
    %v630 = vadd.f32 %v437, %v598
    %v631 = vadd.f32 %v438, %v599
    %v632 = vadd.f32 %v439, %v600
    %v633 = vadd.f32 %v440, %v601
    %v634 = vadd.f32 %v441, %v602
    %v635 = vadd.f32 %v442, %v603
    %v636 = vadd.f32 %v443, %v604
    %v637 = vadd.f32 %v444, %v605
    %v638 = vadd.f32 %v445, %v606
    %v639 = vadd.f32 %v446, %v607
    %v640 = vadd.f32 %v447, %v608
    %v641 = vadd.f32 %v448, %v609
    %v642 = vadd.f32 %v449, %v610
    %v643 = vadd.f32 %v450, %v611
    %v644 = vadd.f32 %v451, %v612
    %v645 = vadd.f32 %v452, %v613
    %v646 = vadd.f32 %v453, %v614
    %v647 = vadd.f32 %v454, %v615
    %v648 = vadd.f32 %v455, %v616
    %v649 = vadd.f32 %v456, %v617
    %v650 = vadd.f32 %v457, %v618
    %v651 = vadd.f32 %v458, %v619
    %v652 = vadd.f32 %v459, %v620
    %v653 = vadd.f32 %v460, %v621
    %v654 = vadd.f32 %v461, %v622
    %v655 = vadd.f32 %v462, %v623
    %v656 = vadd.f32 %v463, %v624
    %v657 = vadd.f32 %v464, %v625
    %v658 = vadd.f32 %v465, %v626
    %v659 = vadd.f32 %v466, %v627
    %v660 = vld [vmem:[%s2] sm:$0x1]
    %v662 = vperm.slane %v660, 0
    %v664 = vadd.f32 %v628, %v662
    %v665 = vadd.f32 %v629, %v662
    %v666 = vadd.f32 %v630, %v662
    %v667 = vadd.f32 %v631, %v662
    %v668 = vadd.f32 %v632, %v662
    %v669 = vadd.f32 %v633, %v662
    %v670 = vadd.f32 %v634, %v662
    %v671 = vadd.f32 %v635, %v662
    %v672 = vadd.f32 %v636, %v662
    %v673 = vadd.f32 %v637, %v662
    %v674 = vadd.f32 %v638, %v662
    %v675 = vadd.f32 %v639, %v662
    %v676 = vadd.f32 %v640, %v662
    %v677 = vadd.f32 %v641, %v662
    %v678 = vadd.f32 %v642, %v662
    %v679 = vadd.f32 %v643, %v662
    %v680 = vadd.f32 %v644, %v662
    %v681 = vadd.f32 %v645, %v662
    %v682 = vadd.f32 %v646, %v662
    %v683 = vadd.f32 %v647, %v662
    %v684 = vadd.f32 %v648, %v662
    %v685 = vadd.f32 %v649, %v662
    %v686 = vadd.f32 %v650, %v662
    %v687 = vadd.f32 %v651, %v662
    %v688 = vadd.f32 %v652, %v662
    %v689 = vadd.f32 %v653, %v662
    %v690 = vadd.f32 %v654, %v662
    %v691 = vadd.f32 %v655, %v662
    %v692 = vadd.f32 %v656, %v662
    %v693 = vadd.f32 %v657, %v662
    %v694 = vadd.f32 %v658, %v662
    %v695 = vadd.f32 %v659, %v662
    %696 = vadd.xlane.f32.xlu0 %v664
    %v697 = vpop.xlane.xlu0 %696
    %698 = vadd.xlane.f32.xlu0 %v665
    %v699 = vpop.xlane.xlu0 %698
    %700 = vadd.xlane.f32.xlu0 %v666
    %v701 = vpop.xlane.xlu0 %700
    %702 = vadd.xlane.f32.xlu0 %v667
    %v703 = vpop.xlane.xlu0 %702
    %704 = vadd.xlane.f32.xlu0 %v668
    %v705 = vpop.xlane.xlu0 %704
    %706 = vadd.xlane.f32.xlu0 %v669
    %v707 = vpop.xlane.xlu0 %706
    %708 = vadd.xlane.f32.xlu0 %v670
    %v709 = vpop.xlane.xlu0 %708
    %710 = vadd.xlane.f32.xlu0 %v671
    %v711 = vpop.xlane.xlu0 %710
    %712 = vadd.xlane.f32.xlu0 %v672
    %v713 = vpop.xlane.xlu0 %712
    %714 = vadd.xlane.f32.xlu0 %v673
    %v715 = vpop.xlane.xlu0 %714
    %716 = vadd.xlane.f32.xlu0 %v674
    %v717 = vpop.xlane.xlu0 %716
    %718 = vadd.xlane.f32.xlu0 %v675
    %v719 = vpop.xlane.xlu0 %718
    %720 = vadd.xlane.f32.xlu0 %v676
    %v721 = vpop.xlane.xlu0 %720
    %722 = vadd.xlane.f32.xlu0 %v677
    %v723 = vpop.xlane.xlu0 %722
    %724 = vadd.xlane.f32.xlu0 %v678
    %v725 = vpop.xlane.xlu0 %724
    %726 = vadd.xlane.f32.xlu0 %v679
    %v727 = vpop.xlane.xlu0 %726
    %728 = vadd.xlane.f32.xlu0 %v680
    %v729 = vpop.xlane.xlu0 %728
    %730 = vadd.xlane.f32.xlu0 %v681
    %v731 = vpop.xlane.xlu0 %730
    %732 = vadd.xlane.f32.xlu0 %v682
    %v733 = vpop.xlane.xlu0 %732
    %734 = vadd.xlane.f32.xlu0 %v683
    %v735 = vpop.xlane.xlu0 %734
    %736 = vadd.xlane.f32.xlu0 %v684
    %v737 = vpop.xlane.xlu0 %736
    %738 = vadd.xlane.f32.xlu0 %v685
    %v739 = vpop.xlane.xlu0 %738
    %740 = vadd.xlane.f32.xlu0 %v686
    %v741 = vpop.xlane.xlu0 %740
    %742 = vadd.xlane.f32.xlu0 %v687
    %v743 = vpop.xlane.xlu0 %742
    %744 = vadd.xlane.f32.xlu0 %v688
    %v745 = vpop.xlane.xlu0 %744
    %746 = vadd.xlane.f32.xlu0 %v689
    %v747 = vpop.xlane.xlu0 %746
    %748 = vadd.xlane.f32.xlu0 %v690
    %v749 = vpop.xlane.xlu0 %748
    %750 = vadd.xlane.f32.xlu0 %v691
    %v751 = vpop.xlane.xlu0 %750
    %752 = vadd.xlane.f32.xlu0 %v692
    %v753 = vpop.xlane.xlu0 %752
    %754 = vadd.xlane.f32.xlu0 %v693
    %v755 = vpop.xlane.xlu0 %754
    %756 = vadd.xlane.f32.xlu0 %v694
    %v757 = vpop.xlane.xlu0 %756
    %758 = vadd.xlane.f32.xlu0 %v695
    %v759 = vpop.xlane.xlu0 %758
    %v760 = vrcp.pop 128.0
    %v761 = vmul.f32 128.0, %v760
    %v762 = vsub.f32 1.0, %v761
    %v763 = vmul.f32 %v760, %v762
    %v764 = vadd.f32 %v760, %v763
    %vm765 = vweird.f32 %v760
    %v766 = vsel %vm765, %v760, %v764
    %v767 = vmul.f32 %v697, %v766
    %v768 = vmul.f32 %v699, %v766
    %v769 = vmul.f32 %v701, %v766
    %v770 = vmul.f32 %v703, %v766
    %v771 = vmul.f32 %v705, %v766
    %v772 = vmul.f32 %v707, %v766
    %v773 = vmul.f32 %v709, %v766
    %v774 = vmul.f32 %v711, %v766
    %v775 = vmul.f32 %v713, %v766
    %v776 = vmul.f32 %v715, %v766
    %v777 = vmul.f32 %v717, %v766
    %v778 = vmul.f32 %v719, %v766
    %v779 = vmul.f32 %v721, %v766
    %v780 = vmul.f32 %v723, %v766
    %v781 = vmul.f32 %v725, %v766
    %v782 = vmul.f32 %v727, %v766
    %v783 = vmul.f32 %v729, %v766
    %v784 = vmul.f32 %v731, %v766
    %v785 = vmul.f32 %v733, %v766
    %v786 = vmul.f32 %v735, %v766
    %v787 = vmul.f32 %v737, %v766
    %v788 = vmul.f32 %v739, %v766
    %v789 = vmul.f32 %v741, %v766
    %v790 = vmul.f32 %v743, %v766
    %v791 = vmul.f32 %v745, %v766
    %v792 = vmul.f32 %v747, %v766
    %v793 = vmul.f32 %v749, %v766
    %v794 = vmul.f32 %v751, %v766
    %v795 = vmul.f32 %v753, %v766
    %v796 = vmul.f32 %v755, %v766
    %v797 = vmul.f32 %v757, %v766
    %v798 = vmul.f32 %v759, %v766
    %v799 = vsub.f32 %v664, %v767
    %v800 = vsub.f32 %v665, %v768
    %v801 = vsub.f32 %v666, %v769
    %v802 = vsub.f32 %v667, %v770
    %v803 = vsub.f32 %v668, %v771
    %v804 = vsub.f32 %v669, %v772
    %v805 = vsub.f32 %v670, %v773
    %v806 = vsub.f32 %v671, %v774
    %v807 = vsub.f32 %v672, %v775
    %v808 = vsub.f32 %v673, %v776
    %v809 = vsub.f32 %v674, %v777
    %v810 = vsub.f32 %v675, %v778
    %v811 = vsub.f32 %v676, %v779
    %v812 = vsub.f32 %v677, %v780
    %v813 = vsub.f32 %v678, %v781
    %v814 = vsub.f32 %v679, %v782
    %v815 = vsub.f32 %v680, %v783
    %v816 = vsub.f32 %v681, %v784
    %v817 = vsub.f32 %v682, %v785
    %v818 = vsub.f32 %v683, %v786
    %v819 = vsub.f32 %v684, %v787
    %v820 = vsub.f32 %v685, %v788
    %v821 = vsub.f32 %v686, %v789
    %v822 = vsub.f32 %v687, %v790
    %v823 = vsub.f32 %v688, %v791
    %v824 = vsub.f32 %v689, %v792
    %v825 = vsub.f32 %v690, %v793
    %v826 = vsub.f32 %v691, %v794
    %v827 = vsub.f32 %v692, %v795
    %v828 = vsub.f32 %v693, %v796
    %v829 = vsub.f32 %v694, %v797
    %v830 = vsub.f32 %v695, %v798
    %v831 = vmul.f32 %v799, %v799
    %v832 = vmul.f32 %v800, %v800
    %v833 = vmul.f32 %v801, %v801
    %v834 = vmul.f32 %v802, %v802
    %v835 = vmul.f32 %v803, %v803
    %v836 = vmul.f32 %v804, %v804
    %v837 = vmul.f32 %v805, %v805
    %v838 = vmul.f32 %v806, %v806
    %v839 = vmul.f32 %v807, %v807
    %v840 = vmul.f32 %v808, %v808
    %v841 = vmul.f32 %v809, %v809
    %v842 = vmul.f32 %v810, %v810
    %v843 = vmul.f32 %v811, %v811
    %v844 = vmul.f32 %v812, %v812
    %v845 = vmul.f32 %v813, %v813
    %v846 = vmul.f32 %v814, %v814
    %v847 = vmul.f32 %v815, %v815
    %v848 = vmul.f32 %v816, %v816
    %v849 = vmul.f32 %v817, %v817
    %v850 = vmul.f32 %v818, %v818
    %v851 = vmul.f32 %v819, %v819
    %v852 = vmul.f32 %v820, %v820
    %v853 = vmul.f32 %v821, %v821
    %v854 = vmul.f32 %v822, %v822
    %v855 = vmul.f32 %v823, %v823
    %v856 = vmul.f32 %v824, %v824
    %v857 = vmul.f32 %v825, %v825
    %v858 = vmul.f32 %v826, %v826
    %v859 = vmul.f32 %v827, %v827
    %v860 = vmul.f32 %v828, %v828
    %v861 = vmul.f32 %v829, %v829
    %v862 = vmul.f32 %v830, %v830
    %863 = vadd.xlane.f32.xlu0 %v831
    %v864 = vpop.xlane.xlu0 %863
    %865 = vadd.xlane.f32.xlu0 %v832
    %v866 = vpop.xlane.xlu0 %865
    %867 = vadd.xlane.f32.xlu0 %v833
    %v868 = vpop.xlane.xlu0 %867
    %869 = vadd.xlane.f32.xlu0 %v834
    %v870 = vpop.xlane.xlu0 %869
    %871 = vadd.xlane.f32.xlu0 %v835
    %v872 = vpop.xlane.xlu0 %871
    %873 = vadd.xlane.f32.xlu0 %v836
    %v874 = vpop.xlane.xlu0 %873
    %875 = vadd.xlane.f32.xlu0 %v837
    %v876 = vpop.xlane.xlu0 %875
    %877 = vadd.xlane.f32.xlu0 %v838
    %v878 = vpop.xlane.xlu0 %877
    %879 = vadd.xlane.f32.xlu0 %v839
    %v880 = vpop.xlane.xlu0 %879
    %881 = vadd.xlane.f32.xlu0 %v840
    %v882 = vpop.xlane.xlu0 %881
    %883 = vadd.xlane.f32.xlu0 %v841
    %v884 = vpop.xlane.xlu0 %883
    %885 = vadd.xlane.f32.xlu0 %v842
    %v886 = vpop.xlane.xlu0 %885
    %887 = vadd.xlane.f32.xlu0 %v843
    %v888 = vpop.xlane.xlu0 %887
    %889 = vadd.xlane.f32.xlu0 %v844
    %v890 = vpop.xlane.xlu0 %889
    %891 = vadd.xlane.f32.xlu0 %v845
    %v892 = vpop.xlane.xlu0 %891
    %893 = vadd.xlane.f32.xlu0 %v846
    %v894 = vpop.xlane.xlu0 %893
    %895 = vadd.xlane.f32.xlu0 %v847
    %v896 = vpop.xlane.xlu0 %895
    %897 = vadd.xlane.f32.xlu0 %v848
    %v898 = vpop.xlane.xlu0 %897
    %899 = vadd.xlane.f32.xlu0 %v849
    %v900 = vpop.xlane.xlu0 %899
    %901 = vadd.xlane.f32.xlu0 %v850
    %v902 = vpop.xlane.xlu0 %901
    %903 = vadd.xlane.f32.xlu0 %v851
    %v904 = vpop.xlane.xlu0 %903
    %905 = vadd.xlane.f32.xlu0 %v852
    %v906 = vpop.xlane.xlu0 %905
    %907 = vadd.xlane.f32.xlu0 %v853
    %v908 = vpop.xlane.xlu0 %907
    %909 = vadd.xlane.f32.xlu0 %v854
    %v910 = vpop.xlane.xlu0 %909
    %911 = vadd.xlane.f32.xlu0 %v855
    %v912 = vpop.xlane.xlu0 %911
    %913 = vadd.xlane.f32.xlu0 %v856
    %v914 = vpop.xlane.xlu0 %913
    %915 = vadd.xlane.f32.xlu0 %v857
    %v916 = vpop.xlane.xlu0 %915
    %917 = vadd.xlane.f32.xlu0 %v858
    %v918 = vpop.xlane.xlu0 %917
    %919 = vadd.xlane.f32.xlu0 %v859
    %v920 = vpop.xlane.xlu0 %919
    %921 = vadd.xlane.f32.xlu0 %v860
    %v922 = vpop.xlane.xlu0 %921
    %923 = vadd.xlane.f32.xlu0 %v861
    %v924 = vpop.xlane.xlu0 %923
    %925 = vadd.xlane.f32.xlu0 %v862
    %v926 = vpop.xlane.xlu0 %925
    %v927 = vmul.f32 %v864, %v766
    %v928 = vmul.f32 %v866, %v766
    %v929 = vmul.f32 %v868, %v766
    %v930 = vmul.f32 %v870, %v766
    %v931 = vmul.f32 %v872, %v766
    %v932 = vmul.f32 %v874, %v766
    %v933 = vmul.f32 %v876, %v766
    %v934 = vmul.f32 %v878, %v766
    %v935 = vmul.f32 %v880, %v766
    %v936 = vmul.f32 %v882, %v766
    %v937 = vmul.f32 %v884, %v766
    %v938 = vmul.f32 %v886, %v766
    %v939 = vmul.f32 %v888, %v766
    %v940 = vmul.f32 %v890, %v766
    %v941 = vmul.f32 %v892, %v766
    %v942 = vmul.f32 %v894, %v766
    %v943 = vmul.f32 %v896, %v766
    %v944 = vmul.f32 %v898, %v766
    %v945 = vmul.f32 %v900, %v766
    %v946 = vmul.f32 %v902, %v766
    %v947 = vmul.f32 %v904, %v766
    %v948 = vmul.f32 %v906, %v766
    %v949 = vmul.f32 %v908, %v766
    %v950 = vmul.f32 %v910, %v766
    %v951 = vmul.f32 %v912, %v766
    %v952 = vmul.f32 %v914, %v766
    %v953 = vmul.f32 %v916, %v766
    %v954 = vmul.f32 %v918, %v766
    %v955 = vmul.f32 %v920, %v766
    %v956 = vmul.f32 %v922, %v766
    %v957 = vmul.f32 %v924, %v766
    %v958 = vmul.f32 %v926, %v766
    %v959 = vadd.f32 %v927, 1e-05
    %v960 = vadd.f32 %v928, 1e-05
    %v961 = vadd.f32 %v929, 1e-05
    %v962 = vadd.f32 %v930, 1e-05
    %v963 = vadd.f32 %v931, 1e-05
    %v964 = vadd.f32 %v932, 1e-05
    %v965 = vadd.f32 %v933, 1e-05
    %v966 = vadd.f32 %v934, 1e-05
    %v967 = vadd.f32 %v935, 1e-05
    %v968 = vadd.f32 %v936, 1e-05
    %v969 = vadd.f32 %v937, 1e-05
    %v970 = vadd.f32 %v938, 1e-05
    %v971 = vadd.f32 %v939, 1e-05
    %v972 = vadd.f32 %v940, 1e-05
    %v973 = vadd.f32 %v941, 1e-05
    %v974 = vadd.f32 %v942, 1e-05
    %v975 = vadd.f32 %v943, 1e-05
    %v976 = vadd.f32 %v944, 1e-05
    %v977 = vadd.f32 %v945, 1e-05
    %v978 = vadd.f32 %v946, 1e-05
    %v979 = vadd.f32 %v947, 1e-05
    %v980 = vadd.f32 %v948, 1e-05
    %v981 = vadd.f32 %v949, 1e-05
    %v982 = vadd.f32 %v950, 1e-05
    %v983 = vadd.f32 %v951, 1e-05
    %v984 = vadd.f32 %v952, 1e-05
    %v985 = vadd.f32 %v953, 1e-05
    %v986 = vadd.f32 %v954, 1e-05
    %v987 = vadd.f32 %v955, 1e-05
    %v988 = vadd.f32 %v956, 1e-05
    %v989 = vadd.f32 %v957, 1e-05
    %v990 = vadd.f32 %v958, 1e-05
    %v991 = vrsqrt.pop %v959
    %v992 = vmul.f32 %v991, %v959
    %v993 = vmul.f32 %v992, %v991
    %v994 = vmul.f32 0.5, %v993
    %v995 = vsub.f32 1.5, %v994
    %v996 = vmul.f32 %v991, %v995
    %vm997 = vweird.f32 %v959
    %vm998 = vweird.f32 %v991
    %vm999 = vmor %vm997, %vm998
    %v1000 = vsel %vm999, %v991, %v996
    %v1001 = vrsqrt.pop %v960
    %v1002 = vmul.f32 %v1001, %v960
    %v1003 = vmul.f32 %v1002, %v1001
    %v1004 = vmul.f32 0.5, %v1003
    %v1005 = vsub.f32 1.5, %v1004
    %v1006 = vmul.f32 %v1001, %v1005
    %vm1007 = vweird.f32 %v960
    %vm1008 = vweird.f32 %v1001
    %vm1009 = vmor %vm1007, %vm1008
    %v1010 = vsel %vm1009, %v1001, %v1006
    %v1011 = vrsqrt.pop %v961
    %v1012 = vmul.f32 %v1011, %v961
    %v1013 = vmul.f32 %v1012, %v1011
    %v1014 = vmul.f32 0.5, %v1013
    %v1015 = vsub.f32 1.5, %v1014
    %v1016 = vmul.f32 %v1011, %v1015
    %vm1017 = vweird.f32 %v961
    %vm1018 = vweird.f32 %v1011
    %vm1019 = vmor %vm1017, %vm1018
    %v1020 = vsel %vm1019, %v1011, %v1016
    %v1021 = vrsqrt.pop %v962
    %v1022 = vmul.f32 %v1021, %v962
    %v1023 = vmul.f32 %v1022, %v1021
    %v1024 = vmul.f32 0.5, %v1023
    %v1025 = vsub.f32 1.5, %v1024
    %v1026 = vmul.f32 %v1021, %v1025
    %vm1027 = vweird.f32 %v962
    %vm1028 = vweird.f32 %v1021
    %vm1029 = vmor %vm1027, %vm1028
    %v1030 = vsel %vm1029, %v1021, %v1026
    %v1031 = vrsqrt.pop %v963
    %v1032 = vmul.f32 %v1031, %v963
    %v1033 = vmul.f32 %v1032, %v1031
    %v1034 = vmul.f32 0.5, %v1033
    %v1035 = vsub.f32 1.5, %v1034
    %v1036 = vmul.f32 %v1031, %v1035
    %vm1037 = vweird.f32 %v963
    %vm1038 = vweird.f32 %v1031
    %vm1039 = vmor %vm1037, %vm1038
    %v1040 = vsel %vm1039, %v1031, %v1036
    %v1041 = vrsqrt.pop %v964
    %v1042 = vmul.f32 %v1041, %v964
    %v1043 = vmul.f32 %v1042, %v1041
    %v1044 = vmul.f32 0.5, %v1043
    %v1045 = vsub.f32 1.5, %v1044
    %v1046 = vmul.f32 %v1041, %v1045
    %vm1047 = vweird.f32 %v964
    %vm1048 = vweird.f32 %v1041
    %vm1049 = vmor %vm1047, %vm1048
    %v1050 = vsel %vm1049, %v1041, %v1046
    %v1051 = vrsqrt.pop %v965
    %v1052 = vmul.f32 %v1051, %v965
    %v1053 = vmul.f32 %v1052, %v1051
    %v1054 = vmul.f32 0.5, %v1053
    %v1055 = vsub.f32 1.5, %v1054
    %v1056 = vmul.f32 %v1051, %v1055
    %vm1057 = vweird.f32 %v965
    %vm1058 = vweird.f32 %v1051
    %vm1059 = vmor %vm1057, %vm1058
    %v1060 = vsel %vm1059, %v1051, %v1056
    %v1061 = vrsqrt.pop %v966
    %v1062 = vmul.f32 %v1061, %v966
    %v1063 = vmul.f32 %v1062, %v1061
    %v1064 = vmul.f32 0.5, %v1063
    %v1065 = vsub.f32 1.5, %v1064
    %v1066 = vmul.f32 %v1061, %v1065
    %vm1067 = vweird.f32 %v966
    %vm1068 = vweird.f32 %v1061
    %vm1069 = vmor %vm1067, %vm1068
    %v1070 = vsel %vm1069, %v1061, %v1066
    %v1071 = vrsqrt.pop %v967
    %v1072 = vmul.f32 %v1071, %v967
    %v1073 = vmul.f32 %v1072, %v1071
    %v1074 = vmul.f32 0.5, %v1073
    %v1075 = vsub.f32 1.5, %v1074
    %v1076 = vmul.f32 %v1071, %v1075
    %vm1077 = vweird.f32 %v967
    %vm1078 = vweird.f32 %v1071
    %vm1079 = vmor %vm1077, %vm1078
    %v1080 = vsel %vm1079, %v1071, %v1076
    %v1081 = vrsqrt.pop %v968
    %v1082 = vmul.f32 %v1081, %v968
    %v1083 = vmul.f32 %v1082, %v1081
    %v1084 = vmul.f32 0.5, %v1083
    %v1085 = vsub.f32 1.5, %v1084
    %v1086 = vmul.f32 %v1081, %v1085
    %vm1087 = vweird.f32 %v968
    %vm1088 = vweird.f32 %v1081
    %vm1089 = vmor %vm1087, %vm1088
    %v1090 = vsel %vm1089, %v1081, %v1086
    %v1091 = vrsqrt.pop %v969
    %v1092 = vmul.f32 %v1091, %v969
    %v1093 = vmul.f32 %v1092, %v1091
    %v1094 = vmul.f32 0.5, %v1093
    %v1095 = vsub.f32 1.5, %v1094
    %v1096 = vmul.f32 %v1091, %v1095
    %vm1097 = vweird.f32 %v969
    %vm1098 = vweird.f32 %v1091
    %vm1099 = vmor %vm1097, %vm1098
    %v1100 = vsel %vm1099, %v1091, %v1096
    %v1101 = vrsqrt.pop %v970
    %v1102 = vmul.f32 %v1101, %v970
    %v1103 = vmul.f32 %v1102, %v1101
    %v1104 = vmul.f32 0.5, %v1103
    %v1105 = vsub.f32 1.5, %v1104
    %v1106 = vmul.f32 %v1101, %v1105
    %vm1107 = vweird.f32 %v970
    %vm1108 = vweird.f32 %v1101
    %vm1109 = vmor %vm1107, %vm1108
    %v1110 = vsel %vm1109, %v1101, %v1106
    %v1111 = vrsqrt.pop %v971
    %v1112 = vmul.f32 %v1111, %v971
    %v1113 = vmul.f32 %v1112, %v1111
    %v1114 = vmul.f32 0.5, %v1113
    %v1115 = vsub.f32 1.5, %v1114
    %v1116 = vmul.f32 %v1111, %v1115
    %vm1117 = vweird.f32 %v971
    %vm1118 = vweird.f32 %v1111
    %vm1119 = vmor %vm1117, %vm1118
    %v1120 = vsel %vm1119, %v1111, %v1116
    %v1121 = vrsqrt.pop %v972
    %v1122 = vmul.f32 %v1121, %v972
    %v1123 = vmul.f32 %v1122, %v1121
    %v1124 = vmul.f32 0.5, %v1123
    %v1125 = vsub.f32 1.5, %v1124
    %v1126 = vmul.f32 %v1121, %v1125
    %vm1127 = vweird.f32 %v972
    %vm1128 = vweird.f32 %v1121
    %vm1129 = vmor %vm1127, %vm1128
    %v1130 = vsel %vm1129, %v1121, %v1126
    %v1131 = vrsqrt.pop %v973
    %v1132 = vmul.f32 %v1131, %v973
    %v1133 = vmul.f32 %v1132, %v1131
    %v1134 = vmul.f32 0.5, %v1133
    %v1135 = vsub.f32 1.5, %v1134
    %v1136 = vmul.f32 %v1131, %v1135
    %vm1137 = vweird.f32 %v973
    %vm1138 = vweird.f32 %v1131
    %vm1139 = vmor %vm1137, %vm1138
    %v1140 = vsel %vm1139, %v1131, %v1136
    %v1141 = vrsqrt.pop %v974
    %v1142 = vmul.f32 %v1141, %v974
    %v1143 = vmul.f32 %v1142, %v1141
    %v1144 = vmul.f32 0.5, %v1143
    %v1145 = vsub.f32 1.5, %v1144
    %v1146 = vmul.f32 %v1141, %v1145
    %vm1147 = vweird.f32 %v974
    %vm1148 = vweird.f32 %v1141
    %vm1149 = vmor %vm1147, %vm1148
    %v1150 = vsel %vm1149, %v1141, %v1146
    %v1151 = vrsqrt.pop %v975
    %v1152 = vmul.f32 %v1151, %v975
    %v1153 = vmul.f32 %v1152, %v1151
    %v1154 = vmul.f32 0.5, %v1153
    %v1155 = vsub.f32 1.5, %v1154
    %v1156 = vmul.f32 %v1151, %v1155
    %vm1157 = vweird.f32 %v975
    %vm1158 = vweird.f32 %v1151
    %vm1159 = vmor %vm1157, %vm1158
    %v1160 = vsel %vm1159, %v1151, %v1156
    %v1161 = vrsqrt.pop %v976
    %v1162 = vmul.f32 %v1161, %v976
    %v1163 = vmul.f32 %v1162, %v1161
    %v1164 = vmul.f32 0.5, %v1163
    %v1165 = vsub.f32 1.5, %v1164
    %v1166 = vmul.f32 %v1161, %v1165
    %vm1167 = vweird.f32 %v976
    %vm1168 = vweird.f32 %v1161
    %vm1169 = vmor %vm1167, %vm1168
    %v1170 = vsel %vm1169, %v1161, %v1166
    %v1171 = vrsqrt.pop %v977
    %v1172 = vmul.f32 %v1171, %v977
    %v1173 = vmul.f32 %v1172, %v1171
    %v1174 = vmul.f32 0.5, %v1173
    %v1175 = vsub.f32 1.5, %v1174
    %v1176 = vmul.f32 %v1171, %v1175
    %vm1177 = vweird.f32 %v977
    %vm1178 = vweird.f32 %v1171
    %vm1179 = vmor %vm1177, %vm1178
    %v1180 = vsel %vm1179, %v1171, %v1176
    %v1181 = vrsqrt.pop %v978
    %v1182 = vmul.f32 %v1181, %v978
    %v1183 = vmul.f32 %v1182, %v1181
    %v1184 = vmul.f32 0.5, %v1183
    %v1185 = vsub.f32 1.5, %v1184
    %v1186 = vmul.f32 %v1181, %v1185
    %vm1187 = vweird.f32 %v978
    %vm1188 = vweird.f32 %v1181
    %vm1189 = vmor %vm1187, %vm1188
    %v1190 = vsel %vm1189, %v1181, %v1186
    %v1191 = vrsqrt.pop %v979
    %v1192 = vmul.f32 %v1191, %v979
    %v1193 = vmul.f32 %v1192, %v1191
    %v1194 = vmul.f32 0.5, %v1193
    %v1195 = vsub.f32 1.5, %v1194
    %v1196 = vmul.f32 %v1191, %v1195
    %vm1197 = vweird.f32 %v979
    %vm1198 = vweird.f32 %v1191
    %vm1199 = vmor %vm1197, %vm1198
    %v1200 = vsel %vm1199, %v1191, %v1196
    %v1201 = vrsqrt.pop %v980
    %v1202 = vmul.f32 %v1201, %v980
    %v1203 = vmul.f32 %v1202, %v1201
    %v1204 = vmul.f32 0.5, %v1203
    %v1205 = vsub.f32 1.5, %v1204
    %v1206 = vmul.f32 %v1201, %v1205
    %vm1207 = vweird.f32 %v980
    %vm1208 = vweird.f32 %v1201
    %vm1209 = vmor %vm1207, %vm1208
    %v1210 = vsel %vm1209, %v1201, %v1206
    %v1211 = vrsqrt.pop %v981
    %v1212 = vmul.f32 %v1211, %v981
    %v1213 = vmul.f32 %v1212, %v1211
    %v1214 = vmul.f32 0.5, %v1213
    %v1215 = vsub.f32 1.5, %v1214
    %v1216 = vmul.f32 %v1211, %v1215
    %vm1217 = vweird.f32 %v981
    %vm1218 = vweird.f32 %v1211
    %vm1219 = vmor %vm1217, %vm1218
    %v1220 = vsel %vm1219, %v1211, %v1216
    %v1221 = vrsqrt.pop %v982
    %v1222 = vmul.f32 %v1221, %v982
    %v1223 = vmul.f32 %v1222, %v1221
    %v1224 = vmul.f32 0.5, %v1223
    %v1225 = vsub.f32 1.5, %v1224
    %v1226 = vmul.f32 %v1221, %v1225
    %vm1227 = vweird.f32 %v982
    %vm1228 = vweird.f32 %v1221
    %vm1229 = vmor %vm1227, %vm1228
    %v1230 = vsel %vm1229, %v1221, %v1226
    %v1231 = vrsqrt.pop %v983
    %v1232 = vmul.f32 %v1231, %v983
    %v1233 = vmul.f32 %v1232, %v1231
    %v1234 = vmul.f32 0.5, %v1233
    %v1235 = vsub.f32 1.5, %v1234
    %v1236 = vmul.f32 %v1231, %v1235
    %vm1237 = vweird.f32 %v983
    %vm1238 = vweird.f32 %v1231
    %vm1239 = vmor %vm1237, %vm1238
    %v1240 = vsel %vm1239, %v1231, %v1236
    %v1241 = vrsqrt.pop %v984
    %v1242 = vmul.f32 %v1241, %v984
    %v1243 = vmul.f32 %v1242, %v1241
    %v1244 = vmul.f32 0.5, %v1243
    %v1245 = vsub.f32 1.5, %v1244
    %v1246 = vmul.f32 %v1241, %v1245
    %vm1247 = vweird.f32 %v984
    %vm1248 = vweird.f32 %v1241
    %vm1249 = vmor %vm1247, %vm1248
    %v1250 = vsel %vm1249, %v1241, %v1246
    %v1251 = vrsqrt.pop %v985
    %v1252 = vmul.f32 %v1251, %v985
    %v1253 = vmul.f32 %v1252, %v1251
    %v1254 = vmul.f32 0.5, %v1253
    %v1255 = vsub.f32 1.5, %v1254
    %v1256 = vmul.f32 %v1251, %v1255
    %vm1257 = vweird.f32 %v985
    %vm1258 = vweird.f32 %v1251
    %vm1259 = vmor %vm1257, %vm1258
    %v1260 = vsel %vm1259, %v1251, %v1256
    %v1261 = vrsqrt.pop %v986
    %v1262 = vmul.f32 %v1261, %v986
    %v1263 = vmul.f32 %v1262, %v1261
    %v1264 = vmul.f32 0.5, %v1263
    %v1265 = vsub.f32 1.5, %v1264
    %v1266 = vmul.f32 %v1261, %v1265
    %vm1267 = vweird.f32 %v986
    %vm1268 = vweird.f32 %v1261
    %vm1269 = vmor %vm1267, %vm1268
    %v1270 = vsel %vm1269, %v1261, %v1266
    %v1271 = vrsqrt.pop %v987
    %v1272 = vmul.f32 %v1271, %v987
    %v1273 = vmul.f32 %v1272, %v1271
    %v1274 = vmul.f32 0.5, %v1273
    %v1275 = vsub.f32 1.5, %v1274
    %v1276 = vmul.f32 %v1271, %v1275
    %vm1277 = vweird.f32 %v987
    %vm1278 = vweird.f32 %v1271
    %vm1279 = vmor %vm1277, %vm1278
    %v1280 = vsel %vm1279, %v1271, %v1276
    %v1281 = vrsqrt.pop %v988
    %v1282 = vmul.f32 %v1281, %v988
    %v1283 = vmul.f32 %v1282, %v1281
    %v1284 = vmul.f32 0.5, %v1283
    %v1285 = vsub.f32 1.5, %v1284
    %v1286 = vmul.f32 %v1281, %v1285
    %vm1287 = vweird.f32 %v988
    %vm1288 = vweird.f32 %v1281
    %vm1289 = vmor %vm1287, %vm1288
    %v1290 = vsel %vm1289, %v1281, %v1286
    %v1291 = vrsqrt.pop %v989
    %v1292 = vmul.f32 %v1291, %v989
    %v1293 = vmul.f32 %v1292, %v1291
    %v1294 = vmul.f32 0.5, %v1293
    %v1295 = vsub.f32 1.5, %v1294
    %v1296 = vmul.f32 %v1291, %v1295
    %vm1297 = vweird.f32 %v989
    %vm1298 = vweird.f32 %v1291
    %vm1299 = vmor %vm1297, %vm1298
    %v1300 = vsel %vm1299, %v1291, %v1296
    %v1301 = vrsqrt.pop %v990
    %v1302 = vmul.f32 %v1301, %v990
    %v1303 = vmul.f32 %v1302, %v1301
    %v1304 = vmul.f32 0.5, %v1303
    %v1305 = vsub.f32 1.5, %v1304
    %v1306 = vmul.f32 %v1301, %v1305
    %vm1307 = vweird.f32 %v990
    %vm1308 = vweird.f32 %v1301
    %vm1309 = vmor %vm1307, %vm1308
    %v1310 = vsel %vm1309, %v1301, %v1306
    %v1311 = vmul.f32 %v799, %v1000
    %v1312 = vmul.f32 %v800, %v1010
    %v1313 = vmul.f32 %v801, %v1020
    %v1314 = vmul.f32 %v802, %v1030
    %v1315 = vmul.f32 %v803, %v1040
    %v1316 = vmul.f32 %v804, %v1050
    %v1317 = vmul.f32 %v805, %v1060
    %v1318 = vmul.f32 %v806, %v1070
    %v1319 = vmul.f32 %v807, %v1080
    %v1320 = vmul.f32 %v808, %v1090
    %v1321 = vmul.f32 %v809, %v1100
    %v1322 = vmul.f32 %v810, %v1110
    %v1323 = vmul.f32 %v811, %v1120
    %v1324 = vmul.f32 %v812, %v1130
    %v1325 = vmul.f32 %v813, %v1140
    %v1326 = vmul.f32 %v814, %v1150
    %v1327 = vmul.f32 %v815, %v1160
    %v1328 = vmul.f32 %v816, %v1170
    %v1329 = vmul.f32 %v817, %v1180
    %v1330 = vmul.f32 %v818, %v1190
    %v1331 = vmul.f32 %v819, %v1200
    %v1332 = vmul.f32 %v820, %v1210
    %v1333 = vmul.f32 %v821, %v1220
    %v1334 = vmul.f32 %v822, %v1230
    %v1335 = vmul.f32 %v823, %v1240
    %v1336 = vmul.f32 %v824, %v1250
    %v1337 = vmul.f32 %v825, %v1260
    %v1338 = vmul.f32 %v826, %v1270
    %v1339 = vmul.f32 %v827, %v1280
    %v1340 = vmul.f32 %v828, %v1290
    %v1341 = vmul.f32 %v829, %v1300
    %v1342 = vmul.f32 %v830, %v1310
    %vm1343 = vcmp.ge.f32.partialorder %v1311, 0.0
    %vm1344 = vcmp.ge.f32.partialorder %v1312, 0.0
    %vm1345 = vcmp.ge.f32.partialorder %v1313, 0.0
    %vm1346 = vcmp.ge.f32.partialorder %v1314, 0.0
    %vm1347 = vcmp.ge.f32.partialorder %v1315, 0.0
    %vm1348 = vcmp.ge.f32.partialorder %v1316, 0.0
    %vm1349 = vcmp.ge.f32.partialorder %v1317, 0.0
    %vm1350 = vcmp.ge.f32.partialorder %v1318, 0.0
    %vm1351 = vcmp.ge.f32.partialorder %v1319, 0.0
    %vm1352 = vcmp.ge.f32.partialorder %v1320, 0.0
    %vm1353 = vcmp.ge.f32.partialorder %v1321, 0.0
    %vm1354 = vcmp.ge.f32.partialorder %v1322, 0.0
    %vm1355 = vcmp.ge.f32.partialorder %v1323, 0.0
    %vm1356 = vcmp.ge.f32.partialorder %v1324, 0.0
    %vm1357 = vcmp.ge.f32.partialorder %v1325, 0.0
    %vm1358 = vcmp.ge.f32.partialorder %v1326, 0.0
    %vm1359 = vcmp.ge.f32.partialorder %v1327, 0.0
    %vm1360 = vcmp.ge.f32.partialorder %v1328, 0.0
    %vm1361 = vcmp.ge.f32.partialorder %v1329, 0.0
    %vm1362 = vcmp.ge.f32.partialorder %v1330, 0.0
    %vm1363 = vcmp.ge.f32.partialorder %v1331, 0.0
    %vm1364 = vcmp.ge.f32.partialorder %v1332, 0.0
    %vm1365 = vcmp.ge.f32.partialorder %v1333, 0.0
    %vm1366 = vcmp.ge.f32.partialorder %v1334, 0.0
    %vm1367 = vcmp.ge.f32.partialorder %v1335, 0.0
    %vm1368 = vcmp.ge.f32.partialorder %v1336, 0.0
    %vm1369 = vcmp.ge.f32.partialorder %v1337, 0.0
    %vm1370 = vcmp.ge.f32.partialorder %v1338, 0.0
    %vm1371 = vcmp.ge.f32.partialorder %v1339, 0.0
    %vm1372 = vcmp.ge.f32.partialorder %v1340, 0.0
    %vm1373 = vcmp.ge.f32.partialorder %v1341, 0.0
    %vm1374 = vcmp.ge.f32.partialorder %v1342, 0.0
    %v1375 = vmul.f32 %v1311, 0.2
    %v1376 = vmul.f32 %v1312, 0.2
    %v1377 = vmul.f32 %v1313, 0.2
    %v1378 = vmul.f32 %v1314, 0.2
    %v1379 = vmul.f32 %v1315, 0.2
    %v1380 = vmul.f32 %v1316, 0.2
    %v1381 = vmul.f32 %v1317, 0.2
    %v1382 = vmul.f32 %v1318, 0.2
    %v1383 = vmul.f32 %v1319, 0.2
    %v1384 = vmul.f32 %v1320, 0.2
    %v1385 = vmul.f32 %v1321, 0.2
    %v1386 = vmul.f32 %v1322, 0.2
    %v1387 = vmul.f32 %v1323, 0.2
    %v1388 = vmul.f32 %v1324, 0.2
    %v1389 = vmul.f32 %v1325, 0.2
    %v1390 = vmul.f32 %v1326, 0.2
    %v1391 = vmul.f32 %v1327, 0.2
    %v1392 = vmul.f32 %v1328, 0.2
    %v1393 = vmul.f32 %v1329, 0.2
    %v1394 = vmul.f32 %v1330, 0.2
    %v1395 = vmul.f32 %v1331, 0.2
    %v1396 = vmul.f32 %v1332, 0.2
    %v1397 = vmul.f32 %v1333, 0.2
    %v1398 = vmul.f32 %v1334, 0.2
    %v1399 = vmul.f32 %v1335, 0.2
    %v1400 = vmul.f32 %v1336, 0.2
    %v1401 = vmul.f32 %v1337, 0.2
    %v1402 = vmul.f32 %v1338, 0.2
    %v1403 = vmul.f32 %v1339, 0.2
    %v1404 = vmul.f32 %v1340, 0.2
    %v1405 = vmul.f32 %v1341, 0.2
    %v1406 = vmul.f32 %v1342, 0.2
    %v1407 = vsel %vm1343, %v1311, %v1375
    %v1408 = vsel %vm1344, %v1312, %v1376
    %v1409 = vsel %vm1345, %v1313, %v1377
    %v1410 = vsel %vm1346, %v1314, %v1378
    %v1411 = vsel %vm1347, %v1315, %v1379
    %v1412 = vsel %vm1348, %v1316, %v1380
    %v1413 = vsel %vm1349, %v1317, %v1381
    %v1414 = vsel %vm1350, %v1318, %v1382
    %v1415 = vsel %vm1351, %v1319, %v1383
    %v1416 = vsel %vm1352, %v1320, %v1384
    %v1417 = vsel %vm1353, %v1321, %v1385
    %v1418 = vsel %vm1354, %v1322, %v1386
    %v1419 = vsel %vm1355, %v1323, %v1387
    %v1420 = vsel %vm1356, %v1324, %v1388
    %v1421 = vsel %vm1357, %v1325, %v1389
    %v1422 = vsel %vm1358, %v1326, %v1390
    %v1423 = vsel %vm1359, %v1327, %v1391
    %v1424 = vsel %vm1360, %v1328, %v1392
    %v1425 = vsel %vm1361, %v1329, %v1393
    %v1426 = vsel %vm1362, %v1330, %v1394
    %v1427 = vsel %vm1363, %v1331, %v1395
    %v1428 = vsel %vm1364, %v1332, %v1396
    %v1429 = vsel %vm1365, %v1333, %v1397
    %v1430 = vsel %vm1366, %v1334, %v1398
    %v1431 = vsel %vm1367, %v1335, %v1399
    %v1432 = vsel %vm1368, %v1336, %v1400
    %v1433 = vsel %vm1369, %v1337, %v1401
    %v1434 = vsel %vm1370, %v1338, %v1402
    %v1435 = vsel %vm1371, %v1339, %v1403
    %v1436 = vsel %vm1372, %v1340, %v1404
    %v1437 = vsel %vm1373, %v1341, %v1405
    %v1438 = vsel %vm1374, %v1342, %v1406
    %v1439 = vld [vmem:[%s3] sm:$0xff]
    %v1440 = vld [vmem:[%s3 + $0x8] sm:$0xff]
    %v1441 = vld [vmem:[%s3 + $0x10] sm:$0xff]
    %v1442 = vld [vmem:[%s3 + $0x18] sm:$0xff]
    %v1443 = vld [vmem:[%s3 + $0x20] sm:$0xff]
    %v1444 = vld [vmem:[%s3 + $0x28] sm:$0xff]
    %v1445 = vld [vmem:[%s3 + $0x30] sm:$0xff]
    %v1446 = vld [vmem:[%s3 + $0x38] sm:$0xff]
    %v1447 = vld [vmem:[%s3 + $0x40] sm:$0xff]
    %v1448 = vld [vmem:[%s3 + $0x48] sm:$0xff]
    %v1449 = vld [vmem:[%s3 + $0x50] sm:$0xff]
    %v1450 = vld [vmem:[%s3 + $0x58] sm:$0xff]
    %v1451 = vld [vmem:[%s3 + $0x60] sm:$0xff]
    %v1452 = vld [vmem:[%s3 + $0x68] sm:$0xff]
    %v1453 = vld [vmem:[%s3 + $0x70] sm:$0xff]
    %v1454 = vld [vmem:[%s3 + $0x78] sm:$0xff]
    %v1455 = vld [vmem:[%s3 + $0x80] sm:$0xff]
    %v1456 = vld [vmem:[%s3 + $0x88] sm:$0xff]
    %v1457 = vld [vmem:[%s3 + $0x90] sm:$0xff]
    %v1458 = vld [vmem:[%s3 + $0x98] sm:$0xff]
    %v1459 = vld [vmem:[%s3 + $0xa0] sm:$0xff]
    %v1460 = vld [vmem:[%s3 + $0xa8] sm:$0xff]
    %v1461 = vld [vmem:[%s3 + $0xb0] sm:$0xff]
    %v1462 = vld [vmem:[%s3 + $0xb8] sm:$0xff]
    %v1463 = vld [vmem:[%s3 + $0xc0] sm:$0xff]
    %v1464 = vld [vmem:[%s3 + $0xc8] sm:$0xff]
    %v1465 = vld [vmem:[%s3 + $0xd0] sm:$0xff]
    %v1466 = vld [vmem:[%s3 + $0xd8] sm:$0xff]
    %v1467 = vld [vmem:[%s3 + $0xe0] sm:$0xff]
    %v1468 = vld [vmem:[%s3 + $0xe8] sm:$0xff]
    %v1469 = vld [vmem:[%s3 + $0xf0] sm:$0xff]
    %v1470 = vld [vmem:[%s3 + $0xf8] sm:$0xff]
    %v1471 = vld [vmem:[%s4] sm:$0x3]
    %v1473 = vperm.slane %v1471, 0
    %v1474 = vperm.slane %v1471, 1
    %1477 = vmatpush.msra.mxu0 %v1469
    %1478 = vmatpush.msra.mxu0 %v1467
    %1479 = vmatpush.msra.mxu0 %v1465
    %1480 = vmatpush.msra.mxu0 %v1463
    %1481 = vmatpush.msra.mxu0 %v1461
    %1482 = vmatpush.msra.mxu0 %v1459
    %1483 = vmatpush.msra.mxu0 %v1457
    %1484 = vmatpush.msra.mxu0 %v1455
    %1485 = vmatpush.msra.mxu0 %v1453
    %1486 = vmatpush.msra.mxu0 %v1451
    %1487 = vmatpush.msra.mxu0 %v1449
    %1488 = vmatpush.msra.mxu0 %v1447
    %1489 = vmatpush.msra.mxu0 %v1445
    %1490 = vmatpush.msra.mxu0 %v1443
    %1491 = vmatpush.msra.mxu0 %v1441
    %1492 = vmatpush.msra.mxu0 %v1439
    %1493 = vmatmul.f32.gmra.mxu0 %v1407
    %v1494 = vpop.f32.mrf.mxu0
    %v1495 = vadd.f32 %v1473, %v1494
    %1496 = vmatmul.f32.gmra.mxu0 %v1408
    %v1497 = vpop.f32.mrf.mxu0
    %v1498 = vadd.f32 %v1473, %v1497
    %1499 = vmatmul.f32.gmra.mxu0 %v1409
    %v1500 = vpop.f32.mrf.mxu0
    %v1501 = vadd.f32 %v1473, %v1500
    %1502 = vmatmul.f32.gmra.mxu0 %v1410
    %v1503 = vpop.f32.mrf.mxu0
    %v1504 = vadd.f32 %v1473, %v1503
    %1505 = vmatmul.f32.gmra.mxu0 %v1411
    %v1506 = vpop.f32.mrf.mxu0
    %v1507 = vadd.f32 %v1473, %v1506
    %1508 = vmatmul.f32.gmra.mxu0 %v1412
    %v1509 = vpop.f32.mrf.mxu0
    %v1510 = vadd.f32 %v1473, %v1509
    %1511 = vmatmul.f32.gmra.mxu0 %v1413
    %v1512 = vpop.f32.mrf.mxu0
    %v1513 = vadd.f32 %v1473, %v1512
    %1514 = vmatmul.f32.gmra.mxu0 %v1414
    %v1515 = vpop.f32.mrf.mxu0
    %v1516 = vadd.f32 %v1473, %v1515
    %1517 = vmatmul.f32.gmra.mxu0 %v1415
    %v1518 = vpop.f32.mrf.mxu0
    %v1519 = vadd.f32 %v1473, %v1518
    %1520 = vmatmul.f32.gmra.mxu0 %v1416
    %v1521 = vpop.f32.mrf.mxu0
    %v1522 = vadd.f32 %v1473, %v1521
    %1523 = vmatmul.f32.gmra.mxu0 %v1417
    %v1524 = vpop.f32.mrf.mxu0
    %v1525 = vadd.f32 %v1473, %v1524
    %1526 = vmatmul.f32.gmra.mxu0 %v1418
    %v1527 = vpop.f32.mrf.mxu0
    %v1528 = vadd.f32 %v1473, %v1527
    %1529 = vmatmul.f32.gmra.mxu0 %v1419
    %v1530 = vpop.f32.mrf.mxu0
    %v1531 = vadd.f32 %v1473, %v1530
    %1532 = vmatmul.f32.gmra.mxu0 %v1420
    %v1533 = vpop.f32.mrf.mxu0
    %v1534 = vadd.f32 %v1473, %v1533
    %1535 = vmatmul.f32.gmra.mxu0 %v1421
    %v1536 = vpop.f32.mrf.mxu0
    %v1537 = vadd.f32 %v1473, %v1536
    %1538 = vmatmul.f32.gmra.mxu0 %v1422
    %v1539 = vpop.f32.mrf.mxu0
    %v1540 = vadd.f32 %v1473, %v1539
    %1541 = vmatmul.f32.gmra.mxu0 %v1423
    %v1542 = vpop.f32.mrf.mxu0
    %v1543 = vadd.f32 %v1473, %v1542
    %1544 = vmatmul.f32.gmra.mxu0 %v1424
    %v1545 = vpop.f32.mrf.mxu0
    %v1546 = vadd.f32 %v1473, %v1545
    %1547 = vmatmul.f32.gmra.mxu0 %v1425
    %v1548 = vpop.f32.mrf.mxu0
    %v1549 = vadd.f32 %v1473, %v1548
    %1550 = vmatmul.f32.gmra.mxu0 %v1426
    %v1551 = vpop.f32.mrf.mxu0
    %v1552 = vadd.f32 %v1473, %v1551
    %1553 = vmatmul.f32.gmra.mxu0 %v1427
    %v1554 = vpop.f32.mrf.mxu0
    %v1555 = vadd.f32 %v1473, %v1554
    %1556 = vmatmul.f32.gmra.mxu0 %v1428
    %v1557 = vpop.f32.mrf.mxu0
    %v1558 = vadd.f32 %v1473, %v1557
    %1559 = vmatmul.f32.gmra.mxu0 %v1429
    %v1560 = vpop.f32.mrf.mxu0
    %v1561 = vadd.f32 %v1473, %v1560
    %1562 = vmatmul.f32.gmra.mxu0 %v1430
    %v1563 = vpop.f32.mrf.mxu0
    %v1564 = vadd.f32 %v1473, %v1563
    %1565 = vmatmul.f32.gmra.mxu0 %v1431
    %v1566 = vpop.f32.mrf.mxu0
    %v1567 = vadd.f32 %v1473, %v1566
    %1568 = vmatmul.f32.gmra.mxu0 %v1432
    %v1569 = vpop.f32.mrf.mxu0
    %v1570 = vadd.f32 %v1473, %v1569
    %1571 = vmatmul.f32.gmra.mxu0 %v1433
    %v1572 = vpop.f32.mrf.mxu0
    %v1573 = vadd.f32 %v1473, %v1572
    %1574 = vmatmul.f32.gmra.mxu0 %v1434
    %v1575 = vpop.f32.mrf.mxu0
    %v1576 = vadd.f32 %v1473, %v1575
    %1577 = vmatmul.f32.gmra.mxu0 %v1435
    %v1578 = vpop.f32.mrf.mxu0
    %v1579 = vadd.f32 %v1473, %v1578
    %1580 = vmatmul.f32.gmra.mxu0 %v1436
    %v1581 = vpop.f32.mrf.mxu0
    %v1582 = vadd.f32 %v1473, %v1581
    %1583 = vmatmul.f32.gmra.mxu0 %v1437
    %v1584 = vpop.f32.mrf.mxu0
    %v1585 = vadd.f32 %v1473, %v1584
    %1586 = vmatmul.f32.gmra.mxu0 %v1438
    %v1587 = vpop.f32.mrf.mxu0
    %v1588 = vadd.f32 %v1473, %v1587
    %1589 = vdwg.mxu0
    %1590 = vmatpush.msra.mxu0 %v1470
    %1591 = vmatpush.msra.mxu0 %v1468
    %1592 = vmatpush.msra.mxu0 %v1466
    %1593 = vmatpush.msra.mxu0 %v1464
    %1594 = vmatpush.msra.mxu0 %v1462
    %1595 = vmatpush.msra.mxu0 %v1460
    %1596 = vmatpush.msra.mxu0 %v1458
    %1597 = vmatpush.msra.mxu0 %v1456
    %1598 = vmatpush.msra.mxu0 %v1454
    %1599 = vmatpush.msra.mxu0 %v1452
    %1600 = vmatpush.msra.mxu0 %v1450
    %1601 = vmatpush.msra.mxu0 %v1448
    %1602 = vmatpush.msra.mxu0 %v1446
    %1603 = vmatpush.msra.mxu0 %v1444
    %1604 = vmatpush.msra.mxu0 %v1442
    %1605 = vmatpush.msra.mxu0 %v1440
    %1606 = vmatmul.f32.gmra.mxu0 %v1407
    %v1607 = vpop.f32.mrf.mxu0
    %v1608 = vadd.f32 %v1474, %v1607
    %1609 = vmatmul.f32.gmra.mxu0 %v1408
    %v1610 = vpop.f32.mrf.mxu0
    %v1611 = vadd.f32 %v1474, %v1610
    %1612 = vmatmul.f32.gmra.mxu0 %v1409
    %v1613 = vpop.f32.mrf.mxu0
    %v1614 = vadd.f32 %v1474, %v1613
    %1615 = vmatmul.f32.gmra.mxu0 %v1410
    %v1616 = vpop.f32.mrf.mxu0
    %v1617 = vadd.f32 %v1474, %v1616
    %1618 = vmatmul.f32.gmra.mxu0 %v1411
    %v1619 = vpop.f32.mrf.mxu0
    %v1620 = vadd.f32 %v1474, %v1619
    %1621 = vmatmul.f32.gmra.mxu0 %v1412
    %v1622 = vpop.f32.mrf.mxu0
    %v1623 = vadd.f32 %v1474, %v1622
    %1624 = vmatmul.f32.gmra.mxu0 %v1413
    %v1625 = vpop.f32.mrf.mxu0
    %v1626 = vadd.f32 %v1474, %v1625
    %1627 = vmatmul.f32.gmra.mxu0 %v1414
    %v1628 = vpop.f32.mrf.mxu0
    %v1629 = vadd.f32 %v1474, %v1628
    %1630 = vmatmul.f32.gmra.mxu0 %v1415
    %v1631 = vpop.f32.mrf.mxu0
    %v1632 = vadd.f32 %v1474, %v1631
    %1633 = vmatmul.f32.gmra.mxu0 %v1416
    %v1634 = vpop.f32.mrf.mxu0
    %v1635 = vadd.f32 %v1474, %v1634
    %1636 = vmatmul.f32.gmra.mxu0 %v1417
    %v1637 = vpop.f32.mrf.mxu0
    %v1638 = vadd.f32 %v1474, %v1637
    %1639 = vmatmul.f32.gmra.mxu0 %v1418
    %v1640 = vpop.f32.mrf.mxu0
    %v1641 = vadd.f32 %v1474, %v1640
    %1642 = vmatmul.f32.gmra.mxu0 %v1419
    %v1643 = vpop.f32.mrf.mxu0
    %v1644 = vadd.f32 %v1474, %v1643
    %1645 = vmatmul.f32.gmra.mxu0 %v1420
    %v1646 = vpop.f32.mrf.mxu0
    %v1647 = vadd.f32 %v1474, %v1646
    %1648 = vmatmul.f32.gmra.mxu0 %v1421
    %v1649 = vpop.f32.mrf.mxu0
    %v1650 = vadd.f32 %v1474, %v1649
    %1651 = vmatmul.f32.gmra.mxu0 %v1422
    %v1652 = vpop.f32.mrf.mxu0
    %v1653 = vadd.f32 %v1474, %v1652
    %1654 = vmatmul.f32.gmra.mxu0 %v1423
    %v1655 = vpop.f32.mrf.mxu0
    %v1656 = vadd.f32 %v1474, %v1655
    %1657 = vmatmul.f32.gmra.mxu0 %v1424
    %v1658 = vpop.f32.mrf.mxu0
    %v1659 = vadd.f32 %v1474, %v1658
    %1660 = vmatmul.f32.gmra.mxu0 %v1425
    %v1661 = vpop.f32.mrf.mxu0
    %v1662 = vadd.f32 %v1474, %v1661
    %1663 = vmatmul.f32.gmra.mxu0 %v1426
    %v1664 = vpop.f32.mrf.mxu0
    %v1665 = vadd.f32 %v1474, %v1664
    %1666 = vmatmul.f32.gmra.mxu0 %v1427
    %v1667 = vpop.f32.mrf.mxu0
    %v1668 = vadd.f32 %v1474, %v1667
    %1669 = vmatmul.f32.gmra.mxu0 %v1428
    %v1670 = vpop.f32.mrf.mxu0
    %v1671 = vadd.f32 %v1474, %v1670
    %1672 = vmatmul.f32.gmra.mxu0 %v1429
    %v1673 = vpop.f32.mrf.mxu0
    %v1674 = vadd.f32 %v1474, %v1673
    %1675 = vmatmul.f32.gmra.mxu0 %v1430
    %v1676 = vpop.f32.mrf.mxu0
    %v1677 = vadd.f32 %v1474, %v1676
    %1678 = vmatmul.f32.gmra.mxu0 %v1431
    %v1679 = vpop.f32.mrf.mxu0
    %v1680 = vadd.f32 %v1474, %v1679
    %1681 = vmatmul.f32.gmra.mxu0 %v1432
    %v1682 = vpop.f32.mrf.mxu0
    %v1683 = vadd.f32 %v1474, %v1682
    %1684 = vmatmul.f32.gmra.mxu0 %v1433
    %v1685 = vpop.f32.mrf.mxu0
    %v1686 = vadd.f32 %v1474, %v1685
    %1687 = vmatmul.f32.gmra.mxu0 %v1434
    %v1688 = vpop.f32.mrf.mxu0
    %v1689 = vadd.f32 %v1474, %v1688
    %1690 = vmatmul.f32.gmra.mxu0 %v1435
    %v1691 = vpop.f32.mrf.mxu0
    %v1692 = vadd.f32 %v1474, %v1691
    %1693 = vmatmul.f32.gmra.mxu0 %v1436
    %v1694 = vpop.f32.mrf.mxu0
    %v1695 = vadd.f32 %v1474, %v1694
    %1696 = vmatmul.f32.gmra.mxu0 %v1437
    %v1697 = vpop.f32.mrf.mxu0
    %v1698 = vadd.f32 %v1474, %v1697
    %1699 = vmatmul.f32.gmra.mxu0 %v1438
    %v1700 = vpop.f32.mrf.mxu0
    %v1701 = vadd.f32 %v1474, %v1700
    %1702 = vdwg.mxu0
    %v1703 = vadd.f32 %v1495, %v1608
    %1704 = vadd.xlane.f32.xlu0 %v1703
    %v1705 = vpop.xlane.xlu0 %1704
    %v1706 = vadd.f32 %v1498, %v1611
    %1707 = vadd.xlane.f32.xlu0 %v1706
    %v1708 = vpop.xlane.xlu0 %1707
    %v1709 = vadd.f32 %v1501, %v1614
    %1710 = vadd.xlane.f32.xlu0 %v1709
    %v1711 = vpop.xlane.xlu0 %1710
    %v1712 = vadd.f32 %v1504, %v1617
    %1713 = vadd.xlane.f32.xlu0 %v1712
    %v1714 = vpop.xlane.xlu0 %1713
    %v1715 = vadd.f32 %v1507, %v1620
    %1716 = vadd.xlane.f32.xlu0 %v1715
    %v1717 = vpop.xlane.xlu0 %1716
    %v1718 = vadd.f32 %v1510, %v1623
    %1719 = vadd.xlane.f32.xlu0 %v1718
    %v1720 = vpop.xlane.xlu0 %1719
    %v1721 = vadd.f32 %v1513, %v1626
    %1722 = vadd.xlane.f32.xlu0 %v1721
    %v1723 = vpop.xlane.xlu0 %1722
    %v1724 = vadd.f32 %v1516, %v1629
    %1725 = vadd.xlane.f32.xlu0 %v1724
    %v1726 = vpop.xlane.xlu0 %1725
    %v1727 = vadd.f32 %v1519, %v1632
    %1728 = vadd.xlane.f32.xlu0 %v1727
    %v1729 = vpop.xlane.xlu0 %1728
    %v1730 = vadd.f32 %v1522, %v1635
    %1731 = vadd.xlane.f32.xlu0 %v1730
    %v1732 = vpop.xlane.xlu0 %1731
    %v1733 = vadd.f32 %v1525, %v1638
    %1734 = vadd.xlane.f32.xlu0 %v1733
    %v1735 = vpop.xlane.xlu0 %1734
    %v1736 = vadd.f32 %v1528, %v1641
    %1737 = vadd.xlane.f32.xlu0 %v1736
    %v1738 = vpop.xlane.xlu0 %1737
    %v1739 = vadd.f32 %v1531, %v1644
    %1740 = vadd.xlane.f32.xlu0 %v1739
    %v1741 = vpop.xlane.xlu0 %1740
    %v1742 = vadd.f32 %v1534, %v1647
    %1743 = vadd.xlane.f32.xlu0 %v1742
    %v1744 = vpop.xlane.xlu0 %1743
    %v1745 = vadd.f32 %v1537, %v1650
    %1746 = vadd.xlane.f32.xlu0 %v1745
    %v1747 = vpop.xlane.xlu0 %1746
    %v1748 = vadd.f32 %v1540, %v1653
    %1749 = vadd.xlane.f32.xlu0 %v1748
    %v1750 = vpop.xlane.xlu0 %1749
    %v1751 = vadd.f32 %v1543, %v1656
    %1752 = vadd.xlane.f32.xlu0 %v1751
    %v1753 = vpop.xlane.xlu0 %1752
    %v1754 = vadd.f32 %v1546, %v1659
    %1755 = vadd.xlane.f32.xlu0 %v1754
    %v1756 = vpop.xlane.xlu0 %1755
    %v1757 = vadd.f32 %v1549, %v1662
    %1758 = vadd.xlane.f32.xlu0 %v1757
    %v1759 = vpop.xlane.xlu0 %1758
    %v1760 = vadd.f32 %v1552, %v1665
    %1761 = vadd.xlane.f32.xlu0 %v1760
    %v1762 = vpop.xlane.xlu0 %1761
    %v1763 = vadd.f32 %v1555, %v1668
    %1764 = vadd.xlane.f32.xlu0 %v1763
    %v1765 = vpop.xlane.xlu0 %1764
    %v1766 = vadd.f32 %v1558, %v1671
    %1767 = vadd.xlane.f32.xlu0 %v1766
    %v1768 = vpop.xlane.xlu0 %1767
    %v1769 = vadd.f32 %v1561, %v1674
    %1770 = vadd.xlane.f32.xlu0 %v1769
    %v1771 = vpop.xlane.xlu0 %1770
    %v1772 = vadd.f32 %v1564, %v1677
    %1773 = vadd.xlane.f32.xlu0 %v1772
    %v1774 = vpop.xlane.xlu0 %1773
    %v1775 = vadd.f32 %v1567, %v1680
    %1776 = vadd.xlane.f32.xlu0 %v1775
    %v1777 = vpop.xlane.xlu0 %1776
    %v1778 = vadd.f32 %v1570, %v1683
    %1779 = vadd.xlane.f32.xlu0 %v1778
    %v1780 = vpop.xlane.xlu0 %1779
    %v1781 = vadd.f32 %v1573, %v1686
    %1782 = vadd.xlane.f32.xlu0 %v1781
    %v1783 = vpop.xlane.xlu0 %1782
    %v1784 = vadd.f32 %v1576, %v1689
    %1785 = vadd.xlane.f32.xlu0 %v1784
    %v1786 = vpop.xlane.xlu0 %1785
    %v1787 = vadd.f32 %v1579, %v1692
    %1788 = vadd.xlane.f32.xlu0 %v1787
    %v1789 = vpop.xlane.xlu0 %1788
    %v1790 = vadd.f32 %v1582, %v1695
    %1791 = vadd.xlane.f32.xlu0 %v1790
    %v1792 = vpop.xlane.xlu0 %1791
    %v1793 = vadd.f32 %v1585, %v1698
    %1794 = vadd.xlane.f32.xlu0 %v1793
    %v1795 = vpop.xlane.xlu0 %1794
    %v1796 = vadd.f32 %v1588, %v1701
    %1797 = vadd.xlane.f32.xlu0 %v1796
    %v1798 = vpop.xlane.xlu0 %1797
    %v1799 = vrcp.pop 256.0
    %v1800 = vmul.f32 256.0, %v1799
    %v1801 = vsub.f32 1.0, %v1800
    %v1802 = vmul.f32 %v1799, %v1801
    %v1803 = vadd.f32 %v1799, %v1802
    %vm1804 = vweird.f32 %v1799
    %v1805 = vsel %vm1804, %v1799, %v1803
    %v1806 = vmul.f32 %v1705, %v1805
    %v1807 = vmul.f32 %v1708, %v1805
    %v1808 = vmul.f32 %v1711, %v1805
    %v1809 = vmul.f32 %v1714, %v1805
    %v1810 = vmul.f32 %v1717, %v1805
    %v1811 = vmul.f32 %v1720, %v1805
    %v1812 = vmul.f32 %v1723, %v1805
    %v1813 = vmul.f32 %v1726, %v1805
    %v1814 = vmul.f32 %v1729, %v1805
    %v1815 = vmul.f32 %v1732, %v1805
    %v1816 = vmul.f32 %v1735, %v1805
    %v1817 = vmul.f32 %v1738, %v1805
    %v1818 = vmul.f32 %v1741, %v1805
    %v1819 = vmul.f32 %v1744, %v1805
    %v1820 = vmul.f32 %v1747, %v1805
    %v1821 = vmul.f32 %v1750, %v1805
    %v1822 = vmul.f32 %v1753, %v1805
    %v1823 = vmul.f32 %v1756, %v1805
    %v1824 = vmul.f32 %v1759, %v1805
    %v1825 = vmul.f32 %v1762, %v1805
    %v1826 = vmul.f32 %v1765, %v1805
    %v1827 = vmul.f32 %v1768, %v1805
    %v1828 = vmul.f32 %v1771, %v1805
    %v1829 = vmul.f32 %v1774, %v1805
    %v1830 = vmul.f32 %v1777, %v1805
    %v1831 = vmul.f32 %v1780, %v1805
    %v1832 = vmul.f32 %v1783, %v1805
    %v1833 = vmul.f32 %v1786, %v1805
    %v1834 = vmul.f32 %v1789, %v1805
    %v1835 = vmul.f32 %v1792, %v1805
    %v1836 = vmul.f32 %v1795, %v1805
    %v1837 = vmul.f32 %v1798, %v1805
    %v1838 = vsub.f32 %v1495, %v1806
    %v1839 = vsub.f32 %v1608, %v1806
    %v1840 = vsub.f32 %v1498, %v1807
    %v1841 = vsub.f32 %v1611, %v1807
    %v1842 = vsub.f32 %v1501, %v1808
    %v1843 = vsub.f32 %v1614, %v1808
    %v1844 = vsub.f32 %v1504, %v1809
    %v1845 = vsub.f32 %v1617, %v1809
    %v1846 = vsub.f32 %v1507, %v1810
    %v1847 = vsub.f32 %v1620, %v1810
    %v1848 = vsub.f32 %v1510, %v1811
    %v1849 = vsub.f32 %v1623, %v1811
    %v1850 = vsub.f32 %v1513, %v1812
    %v1851 = vsub.f32 %v1626, %v1812
    %v1852 = vsub.f32 %v1516, %v1813
    %v1853 = vsub.f32 %v1629, %v1813
    %v1854 = vsub.f32 %v1519, %v1814
    %v1855 = vsub.f32 %v1632, %v1814
    %v1856 = vsub.f32 %v1522, %v1815
    %v1857 = vsub.f32 %v1635, %v1815
    %v1858 = vsub.f32 %v1525, %v1816
    %v1859 = vsub.f32 %v1638, %v1816
    %v1860 = vsub.f32 %v1528, %v1817
    %v1861 = vsub.f32 %v1641, %v1817
    %v1862 = vsub.f32 %v1531, %v1818
    %v1863 = vsub.f32 %v1644, %v1818
    %v1864 = vsub.f32 %v1534, %v1819
    %v1865 = vsub.f32 %v1647, %v1819
    %v1866 = vsub.f32 %v1537, %v1820
    %v1867 = vsub.f32 %v1650, %v1820
    %v1868 = vsub.f32 %v1540, %v1821
    %v1869 = vsub.f32 %v1653, %v1821
    %v1870 = vsub.f32 %v1543, %v1822
    %v1871 = vsub.f32 %v1656, %v1822
    %v1872 = vsub.f32 %v1546, %v1823
    %v1873 = vsub.f32 %v1659, %v1823
    %v1874 = vsub.f32 %v1549, %v1824
    %v1875 = vsub.f32 %v1662, %v1824
    %v1876 = vsub.f32 %v1552, %v1825
    %v1877 = vsub.f32 %v1665, %v1825
    %v1878 = vsub.f32 %v1555, %v1826
    %v1879 = vsub.f32 %v1668, %v1826
    %v1880 = vsub.f32 %v1558, %v1827
    %v1881 = vsub.f32 %v1671, %v1827
    %v1882 = vsub.f32 %v1561, %v1828
    %v1883 = vsub.f32 %v1674, %v1828
    %v1884 = vsub.f32 %v1564, %v1829
    %v1885 = vsub.f32 %v1677, %v1829
    %v1886 = vsub.f32 %v1567, %v1830
    %v1887 = vsub.f32 %v1680, %v1830
    %v1888 = vsub.f32 %v1570, %v1831
    %v1889 = vsub.f32 %v1683, %v1831
    %v1890 = vsub.f32 %v1573, %v1832
    %v1891 = vsub.f32 %v1686, %v1832
    %v1892 = vsub.f32 %v1576, %v1833
    %v1893 = vsub.f32 %v1689, %v1833
    %v1894 = vsub.f32 %v1579, %v1834
    %v1895 = vsub.f32 %v1692, %v1834
    %v1896 = vsub.f32 %v1582, %v1835
    %v1897 = vsub.f32 %v1695, %v1835
    %v1898 = vsub.f32 %v1585, %v1836
    %v1899 = vsub.f32 %v1698, %v1836
    %v1900 = vsub.f32 %v1588, %v1837
    %v1901 = vsub.f32 %v1701, %v1837
    %v1902 = vmul.f32 %v1838, %v1838
    %v1903 = vmul.f32 %v1839, %v1839
    %v1904 = vmul.f32 %v1840, %v1840
    %v1905 = vmul.f32 %v1841, %v1841
    %v1906 = vmul.f32 %v1842, %v1842
    %v1907 = vmul.f32 %v1843, %v1843
    %v1908 = vmul.f32 %v1844, %v1844
    %v1909 = vmul.f32 %v1845, %v1845
    %v1910 = vmul.f32 %v1846, %v1846
    %v1911 = vmul.f32 %v1847, %v1847
    %v1912 = vmul.f32 %v1848, %v1848
    %v1913 = vmul.f32 %v1849, %v1849
    %v1914 = vmul.f32 %v1850, %v1850
    %v1915 = vmul.f32 %v1851, %v1851
    %v1916 = vmul.f32 %v1852, %v1852
    %v1917 = vmul.f32 %v1853, %v1853
    %v1918 = vmul.f32 %v1854, %v1854
    %v1919 = vmul.f32 %v1855, %v1855
    %v1920 = vmul.f32 %v1856, %v1856
    %v1921 = vmul.f32 %v1857, %v1857
    %v1922 = vmul.f32 %v1858, %v1858
    %v1923 = vmul.f32 %v1859, %v1859
    %v1924 = vmul.f32 %v1860, %v1860
    %v1925 = vmul.f32 %v1861, %v1861
    %v1926 = vmul.f32 %v1862, %v1862
    %v1927 = vmul.f32 %v1863, %v1863
    %v1928 = vmul.f32 %v1864, %v1864
    %v1929 = vmul.f32 %v1865, %v1865
    %v1930 = vmul.f32 %v1866, %v1866
    %v1931 = vmul.f32 %v1867, %v1867
    %v1932 = vmul.f32 %v1868, %v1868
    %v1933 = vmul.f32 %v1869, %v1869
    %v1934 = vmul.f32 %v1870, %v1870
    %v1935 = vmul.f32 %v1871, %v1871
    %v1936 = vmul.f32 %v1872, %v1872
    %v1937 = vmul.f32 %v1873, %v1873
    %v1938 = vmul.f32 %v1874, %v1874
    %v1939 = vmul.f32 %v1875, %v1875
    %v1940 = vmul.f32 %v1876, %v1876
    %v1941 = vmul.f32 %v1877, %v1877
    %v1942 = vmul.f32 %v1878, %v1878
    %v1943 = vmul.f32 %v1879, %v1879
    %v1944 = vmul.f32 %v1880, %v1880
    %v1945 = vmul.f32 %v1881, %v1881
    %v1946 = vmul.f32 %v1882, %v1882
    %v1947 = vmul.f32 %v1883, %v1883
    %v1948 = vmul.f32 %v1884, %v1884
    %v1949 = vmul.f32 %v1885, %v1885
    %v1950 = vmul.f32 %v1886, %v1886
    %v1951 = vmul.f32 %v1887, %v1887
    %v1952 = vmul.f32 %v1888, %v1888
    %v1953 = vmul.f32 %v1889, %v1889
    %v1954 = vmul.f32 %v1890, %v1890
    %v1955 = vmul.f32 %v1891, %v1891
    %v1956 = vmul.f32 %v1892, %v1892
    %v1957 = vmul.f32 %v1893, %v1893
    %v1958 = vmul.f32 %v1894, %v1894
    %v1959 = vmul.f32 %v1895, %v1895
    %v1960 = vmul.f32 %v1896, %v1896
    %v1961 = vmul.f32 %v1897, %v1897
    %v1962 = vmul.f32 %v1898, %v1898
    %v1963 = vmul.f32 %v1899, %v1899
    %v1964 = vmul.f32 %v1900, %v1900
    %v1965 = vmul.f32 %v1901, %v1901
    %v1966 = vadd.f32 %v1902, %v1903
    %1967 = vadd.xlane.f32.xlu0 %v1966
    %v1968 = vpop.xlane.xlu0 %1967
    %v1969 = vadd.f32 %v1904, %v1905
    %1970 = vadd.xlane.f32.xlu0 %v1969
    %v1971 = vpop.xlane.xlu0 %1970
    %v1972 = vadd.f32 %v1906, %v1907
    %1973 = vadd.xlane.f32.xlu0 %v1972
    %v1974 = vpop.xlane.xlu0 %1973
    %v1975 = vadd.f32 %v1908, %v1909
    %1976 = vadd.xlane.f32.xlu0 %v1975
    %v1977 = vpop.xlane.xlu0 %1976
    %v1978 = vadd.f32 %v1910, %v1911
    %1979 = vadd.xlane.f32.xlu0 %v1978
    %v1980 = vpop.xlane.xlu0 %1979
    %v1981 = vadd.f32 %v1912, %v1913
    %1982 = vadd.xlane.f32.xlu0 %v1981
    %v1983 = vpop.xlane.xlu0 %1982
    %v1984 = vadd.f32 %v1914, %v1915
    %1985 = vadd.xlane.f32.xlu0 %v1984
    %v1986 = vpop.xlane.xlu0 %1985
    %v1987 = vadd.f32 %v1916, %v1917
    %1988 = vadd.xlane.f32.xlu0 %v1987
    %v1989 = vpop.xlane.xlu0 %1988
    %v1990 = vadd.f32 %v1918, %v1919
    %1991 = vadd.xlane.f32.xlu0 %v1990
    %v1992 = vpop.xlane.xlu0 %1991
    %v1993 = vadd.f32 %v1920, %v1921
    %1994 = vadd.xlane.f32.xlu0 %v1993
    %v1995 = vpop.xlane.xlu0 %1994
    %v1996 = vadd.f32 %v1922, %v1923
    %1997 = vadd.xlane.f32.xlu0 %v1996
    %v1998 = vpop.xlane.xlu0 %1997
    %v1999 = vadd.f32 %v1924, %v1925
    %2000 = vadd.xlane.f32.xlu0 %v1999
    %v2001 = vpop.xlane.xlu0 %2000
    %v2002 = vadd.f32 %v1926, %v1927
    %2003 = vadd.xlane.f32.xlu0 %v2002
    %v2004 = vpop.xlane.xlu0 %2003
    %v2005 = vadd.f32 %v1928, %v1929
    %2006 = vadd.xlane.f32.xlu0 %v2005
    %v2007 = vpop.xlane.xlu0 %2006
    %v2008 = vadd.f32 %v1930, %v1931
    %2009 = vadd.xlane.f32.xlu0 %v2008
    %v2010 = vpop.xlane.xlu0 %2009
    %v2011 = vadd.f32 %v1932, %v1933
    %2012 = vadd.xlane.f32.xlu0 %v2011
    %v2013 = vpop.xlane.xlu0 %2012
    %v2014 = vadd.f32 %v1934, %v1935
    %2015 = vadd.xlane.f32.xlu0 %v2014
    %v2016 = vpop.xlane.xlu0 %2015
    %v2017 = vadd.f32 %v1936, %v1937
    %2018 = vadd.xlane.f32.xlu0 %v2017
    %v2019 = vpop.xlane.xlu0 %2018
    %v2020 = vadd.f32 %v1938, %v1939
    %2021 = vadd.xlane.f32.xlu0 %v2020
    %v2022 = vpop.xlane.xlu0 %2021
    %v2023 = vadd.f32 %v1940, %v1941
    %2024 = vadd.xlane.f32.xlu0 %v2023
    %v2025 = vpop.xlane.xlu0 %2024
    %v2026 = vadd.f32 %v1942, %v1943
    %2027 = vadd.xlane.f32.xlu0 %v2026
    %v2028 = vpop.xlane.xlu0 %2027
    %v2029 = vadd.f32 %v1944, %v1945
    %2030 = vadd.xlane.f32.xlu0 %v2029
    %v2031 = vpop.xlane.xlu0 %2030
    %v2032 = vadd.f32 %v1946, %v1947
    %2033 = vadd.xlane.f32.xlu0 %v2032
    %v2034 = vpop.xlane.xlu0 %2033
    %v2035 = vadd.f32 %v1948, %v1949
    %2036 = vadd.xlane.f32.xlu0 %v2035
    %v2037 = vpop.xlane.xlu0 %2036
    %v2038 = vadd.f32 %v1950, %v1951
    %2039 = vadd.xlane.f32.xlu0 %v2038
    %v2040 = vpop.xlane.xlu0 %2039
    %v2041 = vadd.f32 %v1952, %v1953
    %2042 = vadd.xlane.f32.xlu0 %v2041
    %v2043 = vpop.xlane.xlu0 %2042
    %v2044 = vadd.f32 %v1954, %v1955
    %2045 = vadd.xlane.f32.xlu0 %v2044
    %v2046 = vpop.xlane.xlu0 %2045
    %v2047 = vadd.f32 %v1956, %v1957
    %2048 = vadd.xlane.f32.xlu0 %v2047
    %v2049 = vpop.xlane.xlu0 %2048
    %v2050 = vadd.f32 %v1958, %v1959
    %2051 = vadd.xlane.f32.xlu0 %v2050
    %v2052 = vpop.xlane.xlu0 %2051
    %v2053 = vadd.f32 %v1960, %v1961
    %2054 = vadd.xlane.f32.xlu0 %v2053
    %v2055 = vpop.xlane.xlu0 %2054
    %v2056 = vadd.f32 %v1962, %v1963
    %2057 = vadd.xlane.f32.xlu0 %v2056
    %v2058 = vpop.xlane.xlu0 %2057
    %v2059 = vadd.f32 %v1964, %v1965
    %2060 = vadd.xlane.f32.xlu0 %v2059
    %v2061 = vpop.xlane.xlu0 %2060
    %v2062 = vmul.f32 %v1968, %v1805
    %v2063 = vmul.f32 %v1971, %v1805
    %v2064 = vmul.f32 %v1974, %v1805
    %v2065 = vmul.f32 %v1977, %v1805
    %v2066 = vmul.f32 %v1980, %v1805
    %v2067 = vmul.f32 %v1983, %v1805
    %v2068 = vmul.f32 %v1986, %v1805
    %v2069 = vmul.f32 %v1989, %v1805
    %v2070 = vmul.f32 %v1992, %v1805
    %v2071 = vmul.f32 %v1995, %v1805
    %v2072 = vmul.f32 %v1998, %v1805
    %v2073 = vmul.f32 %v2001, %v1805
    %v2074 = vmul.f32 %v2004, %v1805
    %v2075 = vmul.f32 %v2007, %v1805
    %v2076 = vmul.f32 %v2010, %v1805
    %v2077 = vmul.f32 %v2013, %v1805
    %v2078 = vmul.f32 %v2016, %v1805
    %v2079 = vmul.f32 %v2019, %v1805
    %v2080 = vmul.f32 %v2022, %v1805
    %v2081 = vmul.f32 %v2025, %v1805
    %v2082 = vmul.f32 %v2028, %v1805
    %v2083 = vmul.f32 %v2031, %v1805
    %v2084 = vmul.f32 %v2034, %v1805
    %v2085 = vmul.f32 %v2037, %v1805
    %v2086 = vmul.f32 %v2040, %v1805
    %v2087 = vmul.f32 %v2043, %v1805
    %v2088 = vmul.f32 %v2046, %v1805
    %v2089 = vmul.f32 %v2049, %v1805
    %v2090 = vmul.f32 %v2052, %v1805
    %v2091 = vmul.f32 %v2055, %v1805
    %v2092 = vmul.f32 %v2058, %v1805
    %v2093 = vmul.f32 %v2061, %v1805
    %v2094 = vadd.f32 %v2062, 1e-05
    %v2095 = vadd.f32 %v2063, 1e-05
    %v2096 = vadd.f32 %v2064, 1e-05
    %v2097 = vadd.f32 %v2065, 1e-05
    %v2098 = vadd.f32 %v2066, 1e-05
    %v2099 = vadd.f32 %v2067, 1e-05
    %v2100 = vadd.f32 %v2068, 1e-05
    %v2101 = vadd.f32 %v2069, 1e-05
    %v2102 = vadd.f32 %v2070, 1e-05
    %v2103 = vadd.f32 %v2071, 1e-05
    %v2104 = vadd.f32 %v2072, 1e-05
    %v2105 = vadd.f32 %v2073, 1e-05
    %v2106 = vadd.f32 %v2074, 1e-05
    %v2107 = vadd.f32 %v2075, 1e-05
    %v2108 = vadd.f32 %v2076, 1e-05
    %v2109 = vadd.f32 %v2077, 1e-05
    %v2110 = vadd.f32 %v2078, 1e-05
    %v2111 = vadd.f32 %v2079, 1e-05
    %v2112 = vadd.f32 %v2080, 1e-05
    %v2113 = vadd.f32 %v2081, 1e-05
    %v2114 = vadd.f32 %v2082, 1e-05
    %v2115 = vadd.f32 %v2083, 1e-05
    %v2116 = vadd.f32 %v2084, 1e-05
    %v2117 = vadd.f32 %v2085, 1e-05
    %v2118 = vadd.f32 %v2086, 1e-05
    %v2119 = vadd.f32 %v2087, 1e-05
    %v2120 = vadd.f32 %v2088, 1e-05
    %v2121 = vadd.f32 %v2089, 1e-05
    %v2122 = vadd.f32 %v2090, 1e-05
    %v2123 = vadd.f32 %v2091, 1e-05
    %v2124 = vadd.f32 %v2092, 1e-05
    %v2125 = vadd.f32 %v2093, 1e-05
    %v2126 = vrsqrt.pop %v2094
    %v2127 = vmul.f32 %v2126, %v2094
    %v2128 = vmul.f32 %v2127, %v2126
    %v2129 = vmul.f32 0.5, %v2128
    %v2130 = vsub.f32 1.5, %v2129
    %v2131 = vmul.f32 %v2126, %v2130
    %vm2132 = vweird.f32 %v2094
    %vm2133 = vweird.f32 %v2126
    %vm2134 = vmor %vm2132, %vm2133
    %v2135 = vsel %vm2134, %v2126, %v2131
    %v2136 = vrsqrt.pop %v2095
    %v2137 = vmul.f32 %v2136, %v2095
    %v2138 = vmul.f32 %v2137, %v2136
    %v2139 = vmul.f32 0.5, %v2138
    %v2140 = vsub.f32 1.5, %v2139
    %v2141 = vmul.f32 %v2136, %v2140
    %vm2142 = vweird.f32 %v2095
    %vm2143 = vweird.f32 %v2136
    %vm2144 = vmor %vm2142, %vm2143
    %v2145 = vsel %vm2144, %v2136, %v2141
    %v2146 = vrsqrt.pop %v2096
    %v2147 = vmul.f32 %v2146, %v2096
    %v2148 = vmul.f32 %v2147, %v2146
    %v2149 = vmul.f32 0.5, %v2148
    %v2150 = vsub.f32 1.5, %v2149
    %v2151 = vmul.f32 %v2146, %v2150
    %vm2152 = vweird.f32 %v2096
    %vm2153 = vweird.f32 %v2146
    %vm2154 = vmor %vm2152, %vm2153
    %v2155 = vsel %vm2154, %v2146, %v2151
    %v2156 = vrsqrt.pop %v2097
    %v2157 = vmul.f32 %v2156, %v2097
    %v2158 = vmul.f32 %v2157, %v2156
    %v2159 = vmul.f32 0.5, %v2158
    %v2160 = vsub.f32 1.5, %v2159
    %v2161 = vmul.f32 %v2156, %v2160
    %vm2162 = vweird.f32 %v2097
    %vm2163 = vweird.f32 %v2156
    %vm2164 = vmor %vm2162, %vm2163
    %v2165 = vsel %vm2164, %v2156, %v2161
    %v2166 = vrsqrt.pop %v2098
    %v2167 = vmul.f32 %v2166, %v2098
    %v2168 = vmul.f32 %v2167, %v2166
    %v2169 = vmul.f32 0.5, %v2168
    %v2170 = vsub.f32 1.5, %v2169
    %v2171 = vmul.f32 %v2166, %v2170
    %vm2172 = vweird.f32 %v2098
    %vm2173 = vweird.f32 %v2166
    %vm2174 = vmor %vm2172, %vm2173
    %v2175 = vsel %vm2174, %v2166, %v2171
    %v2176 = vrsqrt.pop %v2099
    %v2177 = vmul.f32 %v2176, %v2099
    %v2178 = vmul.f32 %v2177, %v2176
    %v2179 = vmul.f32 0.5, %v2178
    %v2180 = vsub.f32 1.5, %v2179
    %v2181 = vmul.f32 %v2176, %v2180
    %vm2182 = vweird.f32 %v2099
    %vm2183 = vweird.f32 %v2176
    %vm2184 = vmor %vm2182, %vm2183
    %v2185 = vsel %vm2184, %v2176, %v2181
    %v2186 = vrsqrt.pop %v2100
    %v2187 = vmul.f32 %v2186, %v2100
    %v2188 = vmul.f32 %v2187, %v2186
    %v2189 = vmul.f32 0.5, %v2188
    %v2190 = vsub.f32 1.5, %v2189
    %v2191 = vmul.f32 %v2186, %v2190
    %vm2192 = vweird.f32 %v2100
    %vm2193 = vweird.f32 %v2186
    %vm2194 = vmor %vm2192, %vm2193
    %v2195 = vsel %vm2194, %v2186, %v2191
    %v2196 = vrsqrt.pop %v2101
    %v2197 = vmul.f32 %v2196, %v2101
    %v2198 = vmul.f32 %v2197, %v2196
    %v2199 = vmul.f32 0.5, %v2198
    %v2200 = vsub.f32 1.5, %v2199
    %v2201 = vmul.f32 %v2196, %v2200
    %vm2202 = vweird.f32 %v2101
    %vm2203 = vweird.f32 %v2196
    %vm2204 = vmor %vm2202, %vm2203
    %v2205 = vsel %vm2204, %v2196, %v2201
    %v2206 = vrsqrt.pop %v2102
    %v2207 = vmul.f32 %v2206, %v2102
    %v2208 = vmul.f32 %v2207, %v2206
    %v2209 = vmul.f32 0.5, %v2208
    %v2210 = vsub.f32 1.5, %v2209
    %v2211 = vmul.f32 %v2206, %v2210
    %vm2212 = vweird.f32 %v2102
    %vm2213 = vweird.f32 %v2206
    %vm2214 = vmor %vm2212, %vm2213
    %v2215 = vsel %vm2214, %v2206, %v2211
    %v2216 = vrsqrt.pop %v2103
    %v2217 = vmul.f32 %v2216, %v2103
    %v2218 = vmul.f32 %v2217, %v2216
    %v2219 = vmul.f32 0.5, %v2218
    %v2220 = vsub.f32 1.5, %v2219
    %v2221 = vmul.f32 %v2216, %v2220
    %vm2222 = vweird.f32 %v2103
    %vm2223 = vweird.f32 %v2216
    %vm2224 = vmor %vm2222, %vm2223
    %v2225 = vsel %vm2224, %v2216, %v2221
    %v2226 = vrsqrt.pop %v2104
    %v2227 = vmul.f32 %v2226, %v2104
    %v2228 = vmul.f32 %v2227, %v2226
    %v2229 = vmul.f32 0.5, %v2228
    %v2230 = vsub.f32 1.5, %v2229
    %v2231 = vmul.f32 %v2226, %v2230
    %vm2232 = vweird.f32 %v2104
    %vm2233 = vweird.f32 %v2226
    %vm2234 = vmor %vm2232, %vm2233
    %v2235 = vsel %vm2234, %v2226, %v2231
    %v2236 = vrsqrt.pop %v2105
    %v2237 = vmul.f32 %v2236, %v2105
    %v2238 = vmul.f32 %v2237, %v2236
    %v2239 = vmul.f32 0.5, %v2238
    %v2240 = vsub.f32 1.5, %v2239
    %v2241 = vmul.f32 %v2236, %v2240
    %vm2242 = vweird.f32 %v2105
    %vm2243 = vweird.f32 %v2236
    %vm2244 = vmor %vm2242, %vm2243
    %v2245 = vsel %vm2244, %v2236, %v2241
    %v2246 = vrsqrt.pop %v2106
    %v2247 = vmul.f32 %v2246, %v2106
    %v2248 = vmul.f32 %v2247, %v2246
    %v2249 = vmul.f32 0.5, %v2248
    %v2250 = vsub.f32 1.5, %v2249
    %v2251 = vmul.f32 %v2246, %v2250
    %vm2252 = vweird.f32 %v2106
    %vm2253 = vweird.f32 %v2246
    %vm2254 = vmor %vm2252, %vm2253
    %v2255 = vsel %vm2254, %v2246, %v2251
    %v2256 = vrsqrt.pop %v2107
    %v2257 = vmul.f32 %v2256, %v2107
    %v2258 = vmul.f32 %v2257, %v2256
    %v2259 = vmul.f32 0.5, %v2258
    %v2260 = vsub.f32 1.5, %v2259
    %v2261 = vmul.f32 %v2256, %v2260
    %vm2262 = vweird.f32 %v2107
    %vm2263 = vweird.f32 %v2256
    %vm2264 = vmor %vm2262, %vm2263
    %v2265 = vsel %vm2264, %v2256, %v2261
    %v2266 = vrsqrt.pop %v2108
    %v2267 = vmul.f32 %v2266, %v2108
    %v2268 = vmul.f32 %v2267, %v2266
    %v2269 = vmul.f32 0.5, %v2268
    %v2270 = vsub.f32 1.5, %v2269
    %v2271 = vmul.f32 %v2266, %v2270
    %vm2272 = vweird.f32 %v2108
    %vm2273 = vweird.f32 %v2266
    %vm2274 = vmor %vm2272, %vm2273
    %v2275 = vsel %vm2274, %v2266, %v2271
    %v2276 = vrsqrt.pop %v2109
    %v2277 = vmul.f32 %v2276, %v2109
    %v2278 = vmul.f32 %v2277, %v2276
    %v2279 = vmul.f32 0.5, %v2278
    %v2280 = vsub.f32 1.5, %v2279
    %v2281 = vmul.f32 %v2276, %v2280
    %vm2282 = vweird.f32 %v2109
    %vm2283 = vweird.f32 %v2276
    %vm2284 = vmor %vm2282, %vm2283
    %v2285 = vsel %vm2284, %v2276, %v2281
    %v2286 = vrsqrt.pop %v2110
    %v2287 = vmul.f32 %v2286, %v2110
    %v2288 = vmul.f32 %v2287, %v2286
    %v2289 = vmul.f32 0.5, %v2288
    %v2290 = vsub.f32 1.5, %v2289
    %v2291 = vmul.f32 %v2286, %v2290
    %vm2292 = vweird.f32 %v2110
    %vm2293 = vweird.f32 %v2286
    %vm2294 = vmor %vm2292, %vm2293
    %v2295 = vsel %vm2294, %v2286, %v2291
    %v2296 = vrsqrt.pop %v2111
    %v2297 = vmul.f32 %v2296, %v2111
    %v2298 = vmul.f32 %v2297, %v2296
    %v2299 = vmul.f32 0.5, %v2298
    %v2300 = vsub.f32 1.5, %v2299
    %v2301 = vmul.f32 %v2296, %v2300
    %vm2302 = vweird.f32 %v2111
    %vm2303 = vweird.f32 %v2296
    %vm2304 = vmor %vm2302, %vm2303
    %v2305 = vsel %vm2304, %v2296, %v2301
    %v2306 = vrsqrt.pop %v2112
    %v2307 = vmul.f32 %v2306, %v2112
    %v2308 = vmul.f32 %v2307, %v2306
    %v2309 = vmul.f32 0.5, %v2308
    %v2310 = vsub.f32 1.5, %v2309
    %v2311 = vmul.f32 %v2306, %v2310
    %vm2312 = vweird.f32 %v2112
    %vm2313 = vweird.f32 %v2306
    %vm2314 = vmor %vm2312, %vm2313
    %v2315 = vsel %vm2314, %v2306, %v2311
    %v2316 = vrsqrt.pop %v2113
    %v2317 = vmul.f32 %v2316, %v2113
    %v2318 = vmul.f32 %v2317, %v2316
    %v2319 = vmul.f32 0.5, %v2318
    %v2320 = vsub.f32 1.5, %v2319
    %v2321 = vmul.f32 %v2316, %v2320
    %vm2322 = vweird.f32 %v2113
    %vm2323 = vweird.f32 %v2316
    %vm2324 = vmor %vm2322, %vm2323
    %v2325 = vsel %vm2324, %v2316, %v2321
    %v2326 = vrsqrt.pop %v2114
    %v2327 = vmul.f32 %v2326, %v2114
    %v2328 = vmul.f32 %v2327, %v2326
    %v2329 = vmul.f32 0.5, %v2328
    %v2330 = vsub.f32 1.5, %v2329
    %v2331 = vmul.f32 %v2326, %v2330
    %vm2332 = vweird.f32 %v2114
    %vm2333 = vweird.f32 %v2326
    %vm2334 = vmor %vm2332, %vm2333
    %v2335 = vsel %vm2334, %v2326, %v2331
    %v2336 = vrsqrt.pop %v2115
    %v2337 = vmul.f32 %v2336, %v2115
    %v2338 = vmul.f32 %v2337, %v2336
    %v2339 = vmul.f32 0.5, %v2338
    %v2340 = vsub.f32 1.5, %v2339
    %v2341 = vmul.f32 %v2336, %v2340
    %vm2342 = vweird.f32 %v2115
    %vm2343 = vweird.f32 %v2336
    %vm2344 = vmor %vm2342, %vm2343
    %v2345 = vsel %vm2344, %v2336, %v2341
    %v2346 = vrsqrt.pop %v2116
    %v2347 = vmul.f32 %v2346, %v2116
    %v2348 = vmul.f32 %v2347, %v2346
    %v2349 = vmul.f32 0.5, %v2348
    %v2350 = vsub.f32 1.5, %v2349
    %v2351 = vmul.f32 %v2346, %v2350
    %vm2352 = vweird.f32 %v2116
    %vm2353 = vweird.f32 %v2346
    %vm2354 = vmor %vm2352, %vm2353
    %v2355 = vsel %vm2354, %v2346, %v2351
    %v2356 = vrsqrt.pop %v2117
    %v2357 = vmul.f32 %v2356, %v2117
    %v2358 = vmul.f32 %v2357, %v2356
    %v2359 = vmul.f32 0.5, %v2358
    %v2360 = vsub.f32 1.5, %v2359
    %v2361 = vmul.f32 %v2356, %v2360
    %vm2362 = vweird.f32 %v2117
    %vm2363 = vweird.f32 %v2356
    %vm2364 = vmor %vm2362, %vm2363
    %v2365 = vsel %vm2364, %v2356, %v2361
    %v2366 = vrsqrt.pop %v2118
    %v2367 = vmul.f32 %v2366, %v2118
    %v2368 = vmul.f32 %v2367, %v2366
    %v2369 = vmul.f32 0.5, %v2368
    %v2370 = vsub.f32 1.5, %v2369
    %v2371 = vmul.f32 %v2366, %v2370
    %vm2372 = vweird.f32 %v2118
    %vm2373 = vweird.f32 %v2366
    %vm2374 = vmor %vm2372, %vm2373
    %v2375 = vsel %vm2374, %v2366, %v2371
    %v2376 = vrsqrt.pop %v2119
    %v2377 = vmul.f32 %v2376, %v2119
    %v2378 = vmul.f32 %v2377, %v2376
    %v2379 = vmul.f32 0.5, %v2378
    %v2380 = vsub.f32 1.5, %v2379
    %v2381 = vmul.f32 %v2376, %v2380
    %vm2382 = vweird.f32 %v2119
    %vm2383 = vweird.f32 %v2376
    %vm2384 = vmor %vm2382, %vm2383
    %v2385 = vsel %vm2384, %v2376, %v2381
    %v2386 = vrsqrt.pop %v2120
    %v2387 = vmul.f32 %v2386, %v2120
    %v2388 = vmul.f32 %v2387, %v2386
    %v2389 = vmul.f32 0.5, %v2388
    %v2390 = vsub.f32 1.5, %v2389
    %v2391 = vmul.f32 %v2386, %v2390
    %vm2392 = vweird.f32 %v2120
    %vm2393 = vweird.f32 %v2386
    %vm2394 = vmor %vm2392, %vm2393
    %v2395 = vsel %vm2394, %v2386, %v2391
    %v2396 = vrsqrt.pop %v2121
    %v2397 = vmul.f32 %v2396, %v2121
    %v2398 = vmul.f32 %v2397, %v2396
    %v2399 = vmul.f32 0.5, %v2398
    %v2400 = vsub.f32 1.5, %v2399
    %v2401 = vmul.f32 %v2396, %v2400
    %vm2402 = vweird.f32 %v2121
    %vm2403 = vweird.f32 %v2396
    %vm2404 = vmor %vm2402, %vm2403
    %v2405 = vsel %vm2404, %v2396, %v2401
    %v2406 = vrsqrt.pop %v2122
    %v2407 = vmul.f32 %v2406, %v2122
    %v2408 = vmul.f32 %v2407, %v2406
    %v2409 = vmul.f32 0.5, %v2408
    %v2410 = vsub.f32 1.5, %v2409
    %v2411 = vmul.f32 %v2406, %v2410
    %vm2412 = vweird.f32 %v2122
    %vm2413 = vweird.f32 %v2406
    %vm2414 = vmor %vm2412, %vm2413
    %v2415 = vsel %vm2414, %v2406, %v2411
    %v2416 = vrsqrt.pop %v2123
    %v2417 = vmul.f32 %v2416, %v2123
    %v2418 = vmul.f32 %v2417, %v2416
    %v2419 = vmul.f32 0.5, %v2418
    %v2420 = vsub.f32 1.5, %v2419
    %v2421 = vmul.f32 %v2416, %v2420
    %vm2422 = vweird.f32 %v2123
    %vm2423 = vweird.f32 %v2416
    %vm2424 = vmor %vm2422, %vm2423
    %v2425 = vsel %vm2424, %v2416, %v2421
    %v2426 = vrsqrt.pop %v2124
    %v2427 = vmul.f32 %v2426, %v2124
    %v2428 = vmul.f32 %v2427, %v2426
    %v2429 = vmul.f32 0.5, %v2428
    %v2430 = vsub.f32 1.5, %v2429
    %v2431 = vmul.f32 %v2426, %v2430
    %vm2432 = vweird.f32 %v2124
    %vm2433 = vweird.f32 %v2426
    %vm2434 = vmor %vm2432, %vm2433
    %v2435 = vsel %vm2434, %v2426, %v2431
    %v2436 = vrsqrt.pop %v2125
    %v2437 = vmul.f32 %v2436, %v2125
    %v2438 = vmul.f32 %v2437, %v2436
    %v2439 = vmul.f32 0.5, %v2438
    %v2440 = vsub.f32 1.5, %v2439
    %v2441 = vmul.f32 %v2436, %v2440
    %vm2442 = vweird.f32 %v2125
    %vm2443 = vweird.f32 %v2436
    %vm2444 = vmor %vm2442, %vm2443
    %v2445 = vsel %vm2444, %v2436, %v2441
    %v2446 = vmul.f32 %v1838, %v2135
    %v2447 = vmul.f32 %v1839, %v2135
    %v2448 = vmul.f32 %v1840, %v2145
    %v2449 = vmul.f32 %v1841, %v2145
    %v2450 = vmul.f32 %v1842, %v2155
    %v2451 = vmul.f32 %v1843, %v2155
    %v2452 = vmul.f32 %v1844, %v2165
    %v2453 = vmul.f32 %v1845, %v2165
    %v2454 = vmul.f32 %v1846, %v2175
    %v2455 = vmul.f32 %v1847, %v2175
    %v2456 = vmul.f32 %v1848, %v2185
    %v2457 = vmul.f32 %v1849, %v2185
    %v2458 = vmul.f32 %v1850, %v2195
    %v2459 = vmul.f32 %v1851, %v2195
    %v2460 = vmul.f32 %v1852, %v2205
    %v2461 = vmul.f32 %v1853, %v2205
    %v2462 = vmul.f32 %v1854, %v2215
    %v2463 = vmul.f32 %v1855, %v2215
    %v2464 = vmul.f32 %v1856, %v2225
    %v2465 = vmul.f32 %v1857, %v2225
    %v2466 = vmul.f32 %v1858, %v2235
    %v2467 = vmul.f32 %v1859, %v2235
    %v2468 = vmul.f32 %v1860, %v2245
    %v2469 = vmul.f32 %v1861, %v2245
    %v2470 = vmul.f32 %v1862, %v2255
    %v2471 = vmul.f32 %v1863, %v2255
    %v2472 = vmul.f32 %v1864, %v2265
    %v2473 = vmul.f32 %v1865, %v2265
    %v2474 = vmul.f32 %v1866, %v2275
    %v2475 = vmul.f32 %v1867, %v2275
    %v2476 = vmul.f32 %v1868, %v2285
    %v2477 = vmul.f32 %v1869, %v2285
    %v2478 = vmul.f32 %v1870, %v2295
    %v2479 = vmul.f32 %v1871, %v2295
    %v2480 = vmul.f32 %v1872, %v2305
    %v2481 = vmul.f32 %v1873, %v2305
    %v2482 = vmul.f32 %v1874, %v2315
    %v2483 = vmul.f32 %v1875, %v2315
    %v2484 = vmul.f32 %v1876, %v2325
    %v2485 = vmul.f32 %v1877, %v2325
    %v2486 = vmul.f32 %v1878, %v2335
    %v2487 = vmul.f32 %v1879, %v2335
    %v2488 = vmul.f32 %v1880, %v2345
    %v2489 = vmul.f32 %v1881, %v2345
    %v2490 = vmul.f32 %v1882, %v2355
    %v2491 = vmul.f32 %v1883, %v2355
    %v2492 = vmul.f32 %v1884, %v2365
    %v2493 = vmul.f32 %v1885, %v2365
    %v2494 = vmul.f32 %v1886, %v2375
    %v2495 = vmul.f32 %v1887, %v2375
    %v2496 = vmul.f32 %v1888, %v2385
    %v2497 = vmul.f32 %v1889, %v2385
    %v2498 = vmul.f32 %v1890, %v2395
    %v2499 = vmul.f32 %v1891, %v2395
    %v2500 = vmul.f32 %v1892, %v2405
    %v2501 = vmul.f32 %v1893, %v2405
    %v2502 = vmul.f32 %v1894, %v2415
    %v2503 = vmul.f32 %v1895, %v2415
    %v2504 = vmul.f32 %v1896, %v2425
    %v2505 = vmul.f32 %v1897, %v2425
    %v2506 = vmul.f32 %v1898, %v2435
    %v2507 = vmul.f32 %v1899, %v2435
    %v2508 = vmul.f32 %v1900, %v2445
    %v2509 = vmul.f32 %v1901, %v2445
    %vm2510 = vcmp.ge.f32.partialorder %v2446, 0.0
    %vm2511 = vcmp.ge.f32.partialorder %v2447, 0.0
    %vm2512 = vcmp.ge.f32.partialorder %v2448, 0.0
    %vm2513 = vcmp.ge.f32.partialorder %v2449, 0.0
    %vm2514 = vcmp.ge.f32.partialorder %v2450, 0.0
    %vm2515 = vcmp.ge.f32.partialorder %v2451, 0.0
    %vm2516 = vcmp.ge.f32.partialorder %v2452, 0.0
    %vm2517 = vcmp.ge.f32.partialorder %v2453, 0.0
    %vm2518 = vcmp.ge.f32.partialorder %v2454, 0.0
    %vm2519 = vcmp.ge.f32.partialorder %v2455, 0.0
    %vm2520 = vcmp.ge.f32.partialorder %v2456, 0.0
    %vm2521 = vcmp.ge.f32.partialorder %v2457, 0.0
    %vm2522 = vcmp.ge.f32.partialorder %v2458, 0.0
    %vm2523 = vcmp.ge.f32.partialorder %v2459, 0.0
    %vm2524 = vcmp.ge.f32.partialorder %v2460, 0.0
    %vm2525 = vcmp.ge.f32.partialorder %v2461, 0.0
    %vm2526 = vcmp.ge.f32.partialorder %v2462, 0.0
    %vm2527 = vcmp.ge.f32.partialorder %v2463, 0.0
    %vm2528 = vcmp.ge.f32.partialorder %v2464, 0.0
    %vm2529 = vcmp.ge.f32.partialorder %v2465, 0.0
    %vm2530 = vcmp.ge.f32.partialorder %v2466, 0.0
    %vm2531 = vcmp.ge.f32.partialorder %v2467, 0.0
    %vm2532 = vcmp.ge.f32.partialorder %v2468, 0.0
    %vm2533 = vcmp.ge.f32.partialorder %v2469, 0.0
    %vm2534 = vcmp.ge.f32.partialorder %v2470, 0.0
    %vm2535 = vcmp.ge.f32.partialorder %v2471, 0.0
    %vm2536 = vcmp.ge.f32.partialorder %v2472, 0.0
    %vm2537 = vcmp.ge.f32.partialorder %v2473, 0.0
    %vm2538 = vcmp.ge.f32.partialorder %v2474, 0.0
    %vm2539 = vcmp.ge.f32.partialorder %v2475, 0.0
    %vm2540 = vcmp.ge.f32.partialorder %v2476, 0.0
    %vm2541 = vcmp.ge.f32.partialorder %v2477, 0.0
    %vm2542 = vcmp.ge.f32.partialorder %v2478, 0.0
    %vm2543 = vcmp.ge.f32.partialorder %v2479, 0.0
    %vm2544 = vcmp.ge.f32.partialorder %v2480, 0.0
    %vm2545 = vcmp.ge.f32.partialorder %v2481, 0.0
    %vm2546 = vcmp.ge.f32.partialorder %v2482, 0.0
    %vm2547 = vcmp.ge.f32.partialorder %v2483, 0.0
    %vm2548 = vcmp.ge.f32.partialorder %v2484, 0.0
    %vm2549 = vcmp.ge.f32.partialorder %v2485, 0.0
    %vm2550 = vcmp.ge.f32.partialorder %v2486, 0.0
    %vm2551 = vcmp.ge.f32.partialorder %v2487, 0.0
    %vm2552 = vcmp.ge.f32.partialorder %v2488, 0.0
    %vm2553 = vcmp.ge.f32.partialorder %v2489, 0.0
    %vm2554 = vcmp.ge.f32.partialorder %v2490, 0.0
    %vm2555 = vcmp.ge.f32.partialorder %v2491, 0.0
    %vm2556 = vcmp.ge.f32.partialorder %v2492, 0.0
    %vm2557 = vcmp.ge.f32.partialorder %v2493, 0.0
    %vm2558 = vcmp.ge.f32.partialorder %v2494, 0.0
    %vm2559 = vcmp.ge.f32.partialorder %v2495, 0.0
    %vm2560 = vcmp.ge.f32.partialorder %v2496, 0.0
    %vm2561 = vcmp.ge.f32.partialorder %v2497, 0.0
    %vm2562 = vcmp.ge.f32.partialorder %v2498, 0.0
    %vm2563 = vcmp.ge.f32.partialorder %v2499, 0.0
    %vm2564 = vcmp.ge.f32.partialorder %v2500, 0.0
    %vm2565 = vcmp.ge.f32.partialorder %v2501, 0.0
    %vm2566 = vcmp.ge.f32.partialorder %v2502, 0.0
    %vm2567 = vcmp.ge.f32.partialorder %v2503, 0.0
    %vm2568 = vcmp.ge.f32.partialorder %v2504, 0.0
    %vm2569 = vcmp.ge.f32.partialorder %v2505, 0.0
    %vm2570 = vcmp.ge.f32.partialorder %v2506, 0.0
    %vm2571 = vcmp.ge.f32.partialorder %v2507, 0.0
    %vm2572 = vcmp.ge.f32.partialorder %v2508, 0.0
    %vm2573 = vcmp.ge.f32.partialorder %v2509, 0.0
    %v2574 = vmul.f32 %v2446, 0.2
    %v2575 = vmul.f32 %v2447, 0.2
    %v2576 = vmul.f32 %v2448, 0.2
    %v2577 = vmul.f32 %v2449, 0.2
    %v2578 = vmul.f32 %v2450, 0.2
    %v2579 = vmul.f32 %v2451, 0.2
    %v2580 = vmul.f32 %v2452, 0.2
    %v2581 = vmul.f32 %v2453, 0.2
    %v2582 = vmul.f32 %v2454, 0.2
    %v2583 = vmul.f32 %v2455, 0.2
    %v2584 = vmul.f32 %v2456, 0.2
    %v2585 = vmul.f32 %v2457, 0.2
    %v2586 = vmul.f32 %v2458, 0.2
    %v2587 = vmul.f32 %v2459, 0.2
    %v2588 = vmul.f32 %v2460, 0.2
    %v2589 = vmul.f32 %v2461, 0.2
    %v2590 = vmul.f32 %v2462, 0.2
    %v2591 = vmul.f32 %v2463, 0.2
    %v2592 = vmul.f32 %v2464, 0.2
    %v2593 = vmul.f32 %v2465, 0.2
    %v2594 = vmul.f32 %v2466, 0.2
    %v2595 = vmul.f32 %v2467, 0.2
    %v2596 = vmul.f32 %v2468, 0.2
    %v2597 = vmul.f32 %v2469, 0.2
    %v2598 = vmul.f32 %v2470, 0.2
    %v2599 = vmul.f32 %v2471, 0.2
    %v2600 = vmul.f32 %v2472, 0.2
    %v2601 = vmul.f32 %v2473, 0.2
    %v2602 = vmul.f32 %v2474, 0.2
    %v2603 = vmul.f32 %v2475, 0.2
    %v2604 = vmul.f32 %v2476, 0.2
    %v2605 = vmul.f32 %v2477, 0.2
    %v2606 = vmul.f32 %v2478, 0.2
    %v2607 = vmul.f32 %v2479, 0.2
    %v2608 = vmul.f32 %v2480, 0.2
    %v2609 = vmul.f32 %v2481, 0.2
    %v2610 = vmul.f32 %v2482, 0.2
    %v2611 = vmul.f32 %v2483, 0.2
    %v2612 = vmul.f32 %v2484, 0.2
    %v2613 = vmul.f32 %v2485, 0.2
    %v2614 = vmul.f32 %v2486, 0.2
    %v2615 = vmul.f32 %v2487, 0.2
    %v2616 = vmul.f32 %v2488, 0.2
    %v2617 = vmul.f32 %v2489, 0.2
    %v2618 = vmul.f32 %v2490, 0.2
    %v2619 = vmul.f32 %v2491, 0.2
    %v2620 = vmul.f32 %v2492, 0.2
    %v2621 = vmul.f32 %v2493, 0.2
    %v2622 = vmul.f32 %v2494, 0.2
    %v2623 = vmul.f32 %v2495, 0.2
    %v2624 = vmul.f32 %v2496, 0.2
    %v2625 = vmul.f32 %v2497, 0.2
    %v2626 = vmul.f32 %v2498, 0.2
    %v2627 = vmul.f32 %v2499, 0.2
    %v2628 = vmul.f32 %v2500, 0.2
    %v2629 = vmul.f32 %v2501, 0.2
    %v2630 = vmul.f32 %v2502, 0.2
    %v2631 = vmul.f32 %v2503, 0.2
    %v2632 = vmul.f32 %v2504, 0.2
    %v2633 = vmul.f32 %v2505, 0.2
    %v2634 = vmul.f32 %v2506, 0.2
    %v2635 = vmul.f32 %v2507, 0.2
    %v2636 = vmul.f32 %v2508, 0.2
    %v2637 = vmul.f32 %v2509, 0.2
    %v2638 = vsel %vm2510, %v2446, %v2574
    %v2639 = vsel %vm2511, %v2447, %v2575
    %v2640 = vsel %vm2512, %v2448, %v2576
    %v2641 = vsel %vm2513, %v2449, %v2577
    %v2642 = vsel %vm2514, %v2450, %v2578
    %v2643 = vsel %vm2515, %v2451, %v2579
    %v2644 = vsel %vm2516, %v2452, %v2580
    %v2645 = vsel %vm2517, %v2453, %v2581
    %v2646 = vsel %vm2518, %v2454, %v2582
    %v2647 = vsel %vm2519, %v2455, %v2583
    %v2648 = vsel %vm2520, %v2456, %v2584
    %v2649 = vsel %vm2521, %v2457, %v2585
    %v2650 = vsel %vm2522, %v2458, %v2586
    %v2651 = vsel %vm2523, %v2459, %v2587
    %v2652 = vsel %vm2524, %v2460, %v2588
    %v2653 = vsel %vm2525, %v2461, %v2589
    %v2654 = vsel %vm2526, %v2462, %v2590
    %v2655 = vsel %vm2527, %v2463, %v2591
    %v2656 = vsel %vm2528, %v2464, %v2592
    %v2657 = vsel %vm2529, %v2465, %v2593
    %v2658 = vsel %vm2530, %v2466, %v2594
    %v2659 = vsel %vm2531, %v2467, %v2595
    %v2660 = vsel %vm2532, %v2468, %v2596
    %v2661 = vsel %vm2533, %v2469, %v2597
    %v2662 = vsel %vm2534, %v2470, %v2598
    %v2663 = vsel %vm2535, %v2471, %v2599
    %v2664 = vsel %vm2536, %v2472, %v2600
    %v2665 = vsel %vm2537, %v2473, %v2601
    %v2666 = vsel %vm2538, %v2474, %v2602
    %v2667 = vsel %vm2539, %v2475, %v2603
    %v2668 = vsel %vm2540, %v2476, %v2604
    %v2669 = vsel %vm2541, %v2477, %v2605
    %v2670 = vsel %vm2542, %v2478, %v2606
    %v2671 = vsel %vm2543, %v2479, %v2607
    %v2672 = vsel %vm2544, %v2480, %v2608
    %v2673 = vsel %vm2545, %v2481, %v2609
    %v2674 = vsel %vm2546, %v2482, %v2610
    %v2675 = vsel %vm2547, %v2483, %v2611
    %v2676 = vsel %vm2548, %v2484, %v2612
    %v2677 = vsel %vm2549, %v2485, %v2613
    %v2678 = vsel %vm2550, %v2486, %v2614
    %v2679 = vsel %vm2551, %v2487, %v2615
    %v2680 = vsel %vm2552, %v2488, %v2616
    %v2681 = vsel %vm2553, %v2489, %v2617
    %v2682 = vsel %vm2554, %v2490, %v2618
    %v2683 = vsel %vm2555, %v2491, %v2619
    %v2684 = vsel %vm2556, %v2492, %v2620
    %v2685 = vsel %vm2557, %v2493, %v2621
    %v2686 = vsel %vm2558, %v2494, %v2622
    %v2687 = vsel %vm2559, %v2495, %v2623
    %v2688 = vsel %vm2560, %v2496, %v2624
    %v2689 = vsel %vm2561, %v2497, %v2625
    %v2690 = vsel %vm2562, %v2498, %v2626
    %v2691 = vsel %vm2563, %v2499, %v2627
    %v2692 = vsel %vm2564, %v2500, %v2628
    %v2693 = vsel %vm2565, %v2501, %v2629
    %v2694 = vsel %vm2566, %v2502, %v2630
    %v2695 = vsel %vm2567, %v2503, %v2631
    %v2696 = vsel %vm2568, %v2504, %v2632
    %v2697 = vsel %vm2569, %v2505, %v2633
    %v2698 = vsel %vm2570, %v2506, %v2634
    %v2699 = vsel %vm2571, %v2507, %v2635
    %v2700 = vsel %vm2572, %v2508, %v2636
    %v2701 = vsel %vm2573, %v2509, %v2637
    %v2702 = vld [vmem:[#allocation2] sm:$0xff]
    %v2703 = vld [vmem:[#allocation2 + $0x8] sm:$0xff]
    %v2704 = vld [vmem:[#allocation2 + $0x10] sm:$0xff]
    %v2705 = vld [vmem:[#allocation2 + $0x18] sm:$0xff]
    %v2706 = vld [vmem:[#allocation2 + $0x20] sm:$0xff]
    %v2707 = vld [vmem:[#allocation2 + $0x28] sm:$0xff]
    %v2708 = vld [vmem:[#allocation2 + $0x30] sm:$0xff]
    %v2709 = vld [vmem:[#allocation2 + $0x38] sm:$0xff]
    %v2710 = vld [vmem:[#allocation2 + $0x40] sm:$0xff]
    %v2711 = vld [vmem:[#allocation2 + $0x48] sm:$0xff]
    %v2712 = vld [vmem:[#allocation2 + $0x50] sm:$0xff]
    %v2713 = vld [vmem:[#allocation2 + $0x58] sm:$0xff]
    %v2714 = vld [vmem:[#allocation2 + $0x60] sm:$0xff]
    %v2715 = vld [vmem:[#allocation2 + $0x68] sm:$0xff]
    %v2716 = vld [vmem:[#allocation2 + $0x70] sm:$0xff]
    %v2717 = vld [vmem:[#allocation2 + $0x78] sm:$0xff]
    %v2718 = vld [vmem:[#allocation2 + $0x80] sm:$0xff]
    %v2719 = vld [vmem:[#allocation2 + $0x88] sm:$0xff]
    %v2720 = vld [vmem:[#allocation2 + $0x90] sm:$0xff]
    %v2721 = vld [vmem:[#allocation2 + $0x98] sm:$0xff]
    %v2722 = vld [vmem:[#allocation2 + $0xa0] sm:$0xff]
    %v2723 = vld [vmem:[#allocation2 + $0xa8] sm:$0xff]
    %v2724 = vld [vmem:[#allocation2 + $0xb0] sm:$0xff]
    %v2725 = vld [vmem:[#allocation2 + $0xb8] sm:$0xff]
    %v2726 = vld [vmem:[#allocation2 + $0xc0] sm:$0xff]
    %v2727 = vld [vmem:[#allocation2 + $0xc8] sm:$0xff]
    %v2728 = vld [vmem:[#allocation2 + $0xd0] sm:$0xff]
    %v2729 = vld [vmem:[#allocation2 + $0xd8] sm:$0xff]
    %v2730 = vld [vmem:[#allocation2 + $0xe0] sm:$0xff]
    %v2731 = vld [vmem:[#allocation2 + $0xe8] sm:$0xff]
    %v2732 = vld [vmem:[#allocation2 + $0xf0] sm:$0xff]
    %v2733 = vld [vmem:[#allocation2 + $0xf8] sm:$0xff]
    %v2734 = vld [vmem:[%s6] sm:$0x1]
    %v2736 = vperm.slane %v2734, 0
    %2738 = vmatpush.msra.mxu0 %v2717
    %2739 = vmatpush.msra.mxu0 %v2716
    %2740 = vmatpush.msra.mxu0 %v2715
    %2741 = vmatpush.msra.mxu0 %v2714
    %2742 = vmatpush.msra.mxu0 %v2713
    %2743 = vmatpush.msra.mxu0 %v2712
    %2744 = vmatpush.msra.mxu0 %v2711
    %2745 = vmatpush.msra.mxu0 %v2710
    %2746 = vmatpush.msra.mxu0 %v2709
    %2747 = vmatpush.msra.mxu0 %v2708
    %2748 = vmatpush.msra.mxu0 %v2707
    %2749 = vmatpush.msra.mxu0 %v2706
    %2750 = vmatpush.msra.mxu0 %v2705
    %2751 = vmatpush.msra.mxu0 %v2704
    %2752 = vmatpush.msra.mxu0 %v2703
    %2753 = vmatpush.msra.mxu0 %v2702
    %2754 = vmatmul.f32.gmra.mxu0 %v2638
    %v2755 = vpop.f32.mrf.mxu0
    %v2756 = vadd.f32 %v2736, %v2755
    %2757 = vmatmul.f32.gmra.mxu0 %v2640
    %v2758 = vpop.f32.mrf.mxu0
    %v2759 = vadd.f32 %v2736, %v2758
    %2760 = vmatmul.f32.gmra.mxu0 %v2642
    %v2761 = vpop.f32.mrf.mxu0
    %v2762 = vadd.f32 %v2736, %v2761
    %2763 = vmatmul.f32.gmra.mxu0 %v2644
    %v2764 = vpop.f32.mrf.mxu0
    %v2765 = vadd.f32 %v2736, %v2764
    %2766 = vmatmul.f32.gmra.mxu0 %v2646
    %v2767 = vpop.f32.mrf.mxu0
    %v2768 = vadd.f32 %v2736, %v2767
    %2769 = vmatmul.f32.gmra.mxu0 %v2648
    %v2770 = vpop.f32.mrf.mxu0
    %v2771 = vadd.f32 %v2736, %v2770
    %2772 = vmatmul.f32.gmra.mxu0 %v2650
    %v2773 = vpop.f32.mrf.mxu0
    %v2774 = vadd.f32 %v2736, %v2773
    %2775 = vmatmul.f32.gmra.mxu0 %v2652
    %v2776 = vpop.f32.mrf.mxu0
    %v2777 = vadd.f32 %v2736, %v2776
    %2778 = vmatmul.f32.gmra.mxu0 %v2654
    %v2779 = vpop.f32.mrf.mxu0
    %v2780 = vadd.f32 %v2736, %v2779
    %2781 = vmatmul.f32.gmra.mxu0 %v2656
    %v2782 = vpop.f32.mrf.mxu0
    %v2783 = vadd.f32 %v2736, %v2782
    %2784 = vmatmul.f32.gmra.mxu0 %v2658
    %v2785 = vpop.f32.mrf.mxu0
    %v2786 = vadd.f32 %v2736, %v2785
    %2787 = vmatmul.f32.gmra.mxu0 %v2660
    %v2788 = vpop.f32.mrf.mxu0
    %v2789 = vadd.f32 %v2736, %v2788
    %2790 = vmatmul.f32.gmra.mxu0 %v2662
    %v2791 = vpop.f32.mrf.mxu0
    %v2792 = vadd.f32 %v2736, %v2791
    %2793 = vmatmul.f32.gmra.mxu0 %v2664
    %v2794 = vpop.f32.mrf.mxu0
    %v2795 = vadd.f32 %v2736, %v2794
    %2796 = vmatmul.f32.gmra.mxu0 %v2666
    %v2797 = vpop.f32.mrf.mxu0
    %v2798 = vadd.f32 %v2736, %v2797
    %2799 = vmatmul.f32.gmra.mxu0 %v2668
    %v2800 = vpop.f32.mrf.mxu0
    %v2801 = vadd.f32 %v2736, %v2800
    %2802 = vmatmul.f32.gmra.mxu0 %v2670
    %v2803 = vpop.f32.mrf.mxu0
    %v2804 = vadd.f32 %v2736, %v2803
    %2805 = vmatmul.f32.gmra.mxu0 %v2672
    %v2806 = vpop.f32.mrf.mxu0
    %v2807 = vadd.f32 %v2736, %v2806
    %2808 = vmatmul.f32.gmra.mxu0 %v2674
    %v2809 = vpop.f32.mrf.mxu0
    %v2810 = vadd.f32 %v2736, %v2809
    %2811 = vmatmul.f32.gmra.mxu0 %v2676
    %v2812 = vpop.f32.mrf.mxu0
    %v2813 = vadd.f32 %v2736, %v2812
    %2814 = vmatmul.f32.gmra.mxu0 %v2678
    %v2815 = vpop.f32.mrf.mxu0
    %v2816 = vadd.f32 %v2736, %v2815
    %2817 = vmatmul.f32.gmra.mxu0 %v2680
    %v2818 = vpop.f32.mrf.mxu0
    %v2819 = vadd.f32 %v2736, %v2818
    %2820 = vmatmul.f32.gmra.mxu0 %v2682
    %v2821 = vpop.f32.mrf.mxu0
    %v2822 = vadd.f32 %v2736, %v2821
    %2823 = vmatmul.f32.gmra.mxu0 %v2684
    %v2824 = vpop.f32.mrf.mxu0
    %v2825 = vadd.f32 %v2736, %v2824
    %2826 = vmatmul.f32.gmra.mxu0 %v2686
    %v2827 = vpop.f32.mrf.mxu0
    %v2828 = vadd.f32 %v2736, %v2827
    %2829 = vmatmul.f32.gmra.mxu0 %v2688
    %v2830 = vpop.f32.mrf.mxu0
    %v2831 = vadd.f32 %v2736, %v2830
    %2832 = vmatmul.f32.gmra.mxu0 %v2690
    %v2833 = vpop.f32.mrf.mxu0
    %v2834 = vadd.f32 %v2736, %v2833
    %2835 = vmatmul.f32.gmra.mxu0 %v2692
    %v2836 = vpop.f32.mrf.mxu0
    %v2837 = vadd.f32 %v2736, %v2836
    %2838 = vmatmul.f32.gmra.mxu0 %v2694
    %v2839 = vpop.f32.mrf.mxu0
    %v2840 = vadd.f32 %v2736, %v2839
    %2841 = vmatmul.f32.gmra.mxu0 %v2696
    %v2842 = vpop.f32.mrf.mxu0
    %v2843 = vadd.f32 %v2736, %v2842
    %2844 = vmatmul.f32.gmra.mxu0 %v2698
    %v2845 = vpop.f32.mrf.mxu0
    %v2846 = vadd.f32 %v2736, %v2845
    %2847 = vmatmul.f32.gmra.mxu0 %v2700
    %v2848 = vpop.f32.mrf.mxu0
    %v2849 = vadd.f32 %v2736, %v2848
    %2850 = vdwg.mxu0
    %2851 = vmatpush.msra.mxu0 %v2733
    %2852 = vmatpush.msra.mxu0 %v2732
    %2853 = vmatpush.msra.mxu0 %v2731
    %2854 = vmatpush.msra.mxu0 %v2730
    %2855 = vmatpush.msra.mxu0 %v2729
    %2856 = vmatpush.msra.mxu0 %v2728
    %2857 = vmatpush.msra.mxu0 %v2727
    %2858 = vmatpush.msra.mxu0 %v2726
    %2859 = vmatpush.msra.mxu0 %v2725
    %2860 = vmatpush.msra.mxu0 %v2724
    %2861 = vmatpush.msra.mxu0 %v2723
    %2862 = vmatpush.msra.mxu0 %v2722
    %2863 = vmatpush.msra.mxu0 %v2721
    %2864 = vmatpush.msra.mxu0 %v2720
    %2865 = vmatpush.msra.mxu0 %v2719
    %2866 = vmatpush.msra.mxu0 %v2718
    %2867 = vmatmul.f32.gmra.mxu0 %v2639
    %v2868 = vpop.f32.mrf.mxu0
    %v2869 = vadd.f32 %v2756, %v2868
    %2870 = vmatmul.f32.gmra.mxu0 %v2641
    %v2871 = vpop.f32.mrf.mxu0
    %v2872 = vadd.f32 %v2759, %v2871
    %2873 = vmatmul.f32.gmra.mxu0 %v2643
    %v2874 = vpop.f32.mrf.mxu0
    %v2875 = vadd.f32 %v2762, %v2874
    %2876 = vmatmul.f32.gmra.mxu0 %v2645
    %v2877 = vpop.f32.mrf.mxu0
    %v2878 = vadd.f32 %v2765, %v2877
    %2879 = vmatmul.f32.gmra.mxu0 %v2647
    %v2880 = vpop.f32.mrf.mxu0
    %v2881 = vadd.f32 %v2768, %v2880
    %2882 = vmatmul.f32.gmra.mxu0 %v2649
    %v2883 = vpop.f32.mrf.mxu0
    %v2884 = vadd.f32 %v2771, %v2883
    %2885 = vmatmul.f32.gmra.mxu0 %v2651
    %v2886 = vpop.f32.mrf.mxu0
    %v2887 = vadd.f32 %v2774, %v2886
    %2888 = vmatmul.f32.gmra.mxu0 %v2653
    %v2889 = vpop.f32.mrf.mxu0
    %v2890 = vadd.f32 %v2777, %v2889
    %2891 = vmatmul.f32.gmra.mxu0 %v2655
    %v2892 = vpop.f32.mrf.mxu0
    %v2893 = vadd.f32 %v2780, %v2892
    %2894 = vmatmul.f32.gmra.mxu0 %v2657
    %v2895 = vpop.f32.mrf.mxu0
    %v2896 = vadd.f32 %v2783, %v2895
    %2897 = vmatmul.f32.gmra.mxu0 %v2659
    %v2898 = vpop.f32.mrf.mxu0
    %v2899 = vadd.f32 %v2786, %v2898
    %2900 = vmatmul.f32.gmra.mxu0 %v2661
    %v2901 = vpop.f32.mrf.mxu0
    %v2902 = vadd.f32 %v2789, %v2901
    %2903 = vmatmul.f32.gmra.mxu0 %v2663
    %v2904 = vpop.f32.mrf.mxu0
    %v2905 = vadd.f32 %v2792, %v2904
    %2906 = vmatmul.f32.gmra.mxu0 %v2665
    %v2907 = vpop.f32.mrf.mxu0
    %v2908 = vadd.f32 %v2795, %v2907
    %2909 = vmatmul.f32.gmra.mxu0 %v2667
    %v2910 = vpop.f32.mrf.mxu0
    %v2911 = vadd.f32 %v2798, %v2910
    %2912 = vmatmul.f32.gmra.mxu0 %v2669
    %v2913 = vpop.f32.mrf.mxu0
    %v2914 = vadd.f32 %v2801, %v2913
    %2915 = vmatmul.f32.gmra.mxu0 %v2671
    %v2916 = vpop.f32.mrf.mxu0
    %v2917 = vadd.f32 %v2804, %v2916
    %2918 = vmatmul.f32.gmra.mxu0 %v2673
    %v2919 = vpop.f32.mrf.mxu0
    %v2920 = vadd.f32 %v2807, %v2919
    %2921 = vmatmul.f32.gmra.mxu0 %v2675
    %v2922 = vpop.f32.mrf.mxu0
    %v2923 = vadd.f32 %v2810, %v2922
    %2924 = vmatmul.f32.gmra.mxu0 %v2677
    %v2925 = vpop.f32.mrf.mxu0
    %v2926 = vadd.f32 %v2813, %v2925
    %2927 = vmatmul.f32.gmra.mxu0 %v2679
    %v2928 = vpop.f32.mrf.mxu0
    %v2929 = vadd.f32 %v2816, %v2928
    %2930 = vmatmul.f32.gmra.mxu0 %v2681
    %v2931 = vpop.f32.mrf.mxu0
    %v2932 = vadd.f32 %v2819, %v2931
    %2933 = vmatmul.f32.gmra.mxu0 %v2683
    %v2934 = vpop.f32.mrf.mxu0
    %v2935 = vadd.f32 %v2822, %v2934
    %2936 = vmatmul.f32.gmra.mxu0 %v2685
    %v2937 = vpop.f32.mrf.mxu0
    %v2938 = vadd.f32 %v2825, %v2937
    %2939 = vmatmul.f32.gmra.mxu0 %v2687
    %v2940 = vpop.f32.mrf.mxu0
    %v2941 = vadd.f32 %v2828, %v2940
    %2942 = vmatmul.f32.gmra.mxu0 %v2689
    %v2943 = vpop.f32.mrf.mxu0
    %v2944 = vadd.f32 %v2831, %v2943
    %2945 = vmatmul.f32.gmra.mxu0 %v2691
    %v2946 = vpop.f32.mrf.mxu0
    %v2947 = vadd.f32 %v2834, %v2946
    %2948 = vmatmul.f32.gmra.mxu0 %v2693
    %v2949 = vpop.f32.mrf.mxu0
    %v2950 = vadd.f32 %v2837, %v2949
    %2951 = vmatmul.f32.gmra.mxu0 %v2695
    %v2952 = vpop.f32.mrf.mxu0
    %v2953 = vadd.f32 %v2840, %v2952
    %2954 = vmatmul.f32.gmra.mxu0 %v2697
    %v2955 = vpop.f32.mrf.mxu0
    %v2956 = vadd.f32 %v2843, %v2955
    %2957 = vmatmul.f32.gmra.mxu0 %v2699
    %v2958 = vpop.f32.mrf.mxu0
    %v2959 = vadd.f32 %v2846, %v2958
    %2960 = vmatmul.f32.gmra.mxu0 %v2701
    %v2961 = vpop.f32.mrf.mxu0
    %v2962 = vadd.f32 %v2849, %v2961
    %2963 = vdwg.mxu0
    %2964 = vadd.xlane.f32.xlu0 %v2869
    %v2965 = vpop.xlane.xlu0 %2964
    %2966 = vadd.xlane.f32.xlu0 %v2872
    %v2967 = vpop.xlane.xlu0 %2966
    %2968 = vadd.xlane.f32.xlu0 %v2875
    %v2969 = vpop.xlane.xlu0 %2968
    %2970 = vadd.xlane.f32.xlu0 %v2878
    %v2971 = vpop.xlane.xlu0 %2970
    %2972 = vadd.xlane.f32.xlu0 %v2881
    %v2973 = vpop.xlane.xlu0 %2972
    %2974 = vadd.xlane.f32.xlu0 %v2884
    %v2975 = vpop.xlane.xlu0 %2974
    %2976 = vadd.xlane.f32.xlu0 %v2887
    %v2977 = vpop.xlane.xlu0 %2976
    %2978 = vadd.xlane.f32.xlu0 %v2890
    %v2979 = vpop.xlane.xlu0 %2978
    %2980 = vadd.xlane.f32.xlu0 %v2893
    %v2981 = vpop.xlane.xlu0 %2980
    %2982 = vadd.xlane.f32.xlu0 %v2896
    %v2983 = vpop.xlane.xlu0 %2982
    %2984 = vadd.xlane.f32.xlu0 %v2899
    %v2985 = vpop.xlane.xlu0 %2984
    %2986 = vadd.xlane.f32.xlu0 %v2902
    %v2987 = vpop.xlane.xlu0 %2986
    %2988 = vadd.xlane.f32.xlu0 %v2905
    %v2989 = vpop.xlane.xlu0 %2988
    %2990 = vadd.xlane.f32.xlu0 %v2908
    %v2991 = vpop.xlane.xlu0 %2990
    %2992 = vadd.xlane.f32.xlu0 %v2911
    %v2993 = vpop.xlane.xlu0 %2992
    %2994 = vadd.xlane.f32.xlu0 %v2914
    %v2995 = vpop.xlane.xlu0 %2994
    %2996 = vadd.xlane.f32.xlu0 %v2917
    %v2997 = vpop.xlane.xlu0 %2996
    %2998 = vadd.xlane.f32.xlu0 %v2920
    %v2999 = vpop.xlane.xlu0 %2998
    %3000 = vadd.xlane.f32.xlu0 %v2923
    %v3001 = vpop.xlane.xlu0 %3000
    %3002 = vadd.xlane.f32.xlu0 %v2926
    %v3003 = vpop.xlane.xlu0 %3002
    %3004 = vadd.xlane.f32.xlu0 %v2929
    %v3005 = vpop.xlane.xlu0 %3004
    %3006 = vadd.xlane.f32.xlu0 %v2932
    %v3007 = vpop.xlane.xlu0 %3006
    %3008 = vadd.xlane.f32.xlu0 %v2935
    %v3009 = vpop.xlane.xlu0 %3008
    %3010 = vadd.xlane.f32.xlu0 %v2938
    %v3011 = vpop.xlane.xlu0 %3010
    %3012 = vadd.xlane.f32.xlu0 %v2941
    %v3013 = vpop.xlane.xlu0 %3012
    %3014 = vadd.xlane.f32.xlu0 %v2944
    %v3015 = vpop.xlane.xlu0 %3014
    %3016 = vadd.xlane.f32.xlu0 %v2947
    %v3017 = vpop.xlane.xlu0 %3016
    %3018 = vadd.xlane.f32.xlu0 %v2950
    %v3019 = vpop.xlane.xlu0 %3018
    %3020 = vadd.xlane.f32.xlu0 %v2953
    %v3021 = vpop.xlane.xlu0 %3020
    %3022 = vadd.xlane.f32.xlu0 %v2956
    %v3023 = vpop.xlane.xlu0 %3022
    %3024 = vadd.xlane.f32.xlu0 %v2959
    %v3025 = vpop.xlane.xlu0 %3024
    %3026 = vadd.xlane.f32.xlu0 %v2962
    %v3027 = vpop.xlane.xlu0 %3026
    %v3028 = vmul.f32 %v2965, %v766
    %v3029 = vmul.f32 %v2967, %v766
    %v3030 = vmul.f32 %v2969, %v766
    %v3031 = vmul.f32 %v2971, %v766
    %v3032 = vmul.f32 %v2973, %v766
    %v3033 = vmul.f32 %v2975, %v766
    %v3034 = vmul.f32 %v2977, %v766
    %v3035 = vmul.f32 %v2979, %v766
    %v3036 = vmul.f32 %v2981, %v766
    %v3037 = vmul.f32 %v2983, %v766
    %v3038 = vmul.f32 %v2985, %v766
    %v3039 = vmul.f32 %v2987, %v766
    %v3040 = vmul.f32 %v2989, %v766
    %v3041 = vmul.f32 %v2991, %v766
    %v3042 = vmul.f32 %v2993, %v766
    %v3043 = vmul.f32 %v2995, %v766
    %v3044 = vmul.f32 %v2997, %v766
    %v3045 = vmul.f32 %v2999, %v766
    %v3046 = vmul.f32 %v3001, %v766
    %v3047 = vmul.f32 %v3003, %v766
    %v3048 = vmul.f32 %v3005, %v766
    %v3049 = vmul.f32 %v3007, %v766
    %v3050 = vmul.f32 %v3009, %v766
    %v3051 = vmul.f32 %v3011, %v766
    %v3052 = vmul.f32 %v3013, %v766
    %v3053 = vmul.f32 %v3015, %v766
    %v3054 = vmul.f32 %v3017, %v766
    %v3055 = vmul.f32 %v3019, %v766
    %v3056 = vmul.f32 %v3021, %v766
    %v3057 = vmul.f32 %v3023, %v766
    %v3058 = vmul.f32 %v3025, %v766
    %v3059 = vmul.f32 %v3027, %v766
    %v3060 = vsub.f32 %v2869, %v3028
    %v3061 = vsub.f32 %v2872, %v3029
    %v3062 = vsub.f32 %v2875, %v3030
    %v3063 = vsub.f32 %v2878, %v3031
    %v3064 = vsub.f32 %v2881, %v3032
    %v3065 = vsub.f32 %v2884, %v3033
    %v3066 = vsub.f32 %v2887, %v3034
    %v3067 = vsub.f32 %v2890, %v3035
    %v3068 = vsub.f32 %v2893, %v3036
    %v3069 = vsub.f32 %v2896, %v3037
    %v3070 = vsub.f32 %v2899, %v3038
    %v3071 = vsub.f32 %v2902, %v3039
    %v3072 = vsub.f32 %v2905, %v3040
    %v3073 = vsub.f32 %v2908, %v3041
    %v3074 = vsub.f32 %v2911, %v3042
    %v3075 = vsub.f32 %v2914, %v3043
    %v3076 = vsub.f32 %v2917, %v3044
    %v3077 = vsub.f32 %v2920, %v3045
    %v3078 = vsub.f32 %v2923, %v3046
    %v3079 = vsub.f32 %v2926, %v3047
    %v3080 = vsub.f32 %v2929, %v3048
    %v3081 = vsub.f32 %v2932, %v3049
    %v3082 = vsub.f32 %v2935, %v3050
    %v3083 = vsub.f32 %v2938, %v3051
    %v3084 = vsub.f32 %v2941, %v3052
    %v3085 = vsub.f32 %v2944, %v3053
    %v3086 = vsub.f32 %v2947, %v3054
    %v3087 = vsub.f32 %v2950, %v3055
    %v3088 = vsub.f32 %v2953, %v3056
    %v3089 = vsub.f32 %v2956, %v3057
    %v3090 = vsub.f32 %v2959, %v3058
    %v3091 = vsub.f32 %v2962, %v3059
    %v3092 = vmul.f32 %v3060, %v3060
    %v3093 = vmul.f32 %v3061, %v3061
    %v3094 = vmul.f32 %v3062, %v3062
    %v3095 = vmul.f32 %v3063, %v3063
    %v3096 = vmul.f32 %v3064, %v3064
    %v3097 = vmul.f32 %v3065, %v3065
    %v3098 = vmul.f32 %v3066, %v3066
    %v3099 = vmul.f32 %v3067, %v3067
    %v3100 = vmul.f32 %v3068, %v3068
    %v3101 = vmul.f32 %v3069, %v3069
    %v3102 = vmul.f32 %v3070, %v3070
    %v3103 = vmul.f32 %v3071, %v3071
    %v3104 = vmul.f32 %v3072, %v3072
    %v3105 = vmul.f32 %v3073, %v3073
    %v3106 = vmul.f32 %v3074, %v3074
    %v3107 = vmul.f32 %v3075, %v3075
    %v3108 = vmul.f32 %v3076, %v3076
    %v3109 = vmul.f32 %v3077, %v3077
    %v3110 = vmul.f32 %v3078, %v3078
    %v3111 = vmul.f32 %v3079, %v3079
    %v3112 = vmul.f32 %v3080, %v3080
    %v3113 = vmul.f32 %v3081, %v3081
    %v3114 = vmul.f32 %v3082, %v3082
    %v3115 = vmul.f32 %v3083, %v3083
    %v3116 = vmul.f32 %v3084, %v3084
    %v3117 = vmul.f32 %v3085, %v3085
    %v3118 = vmul.f32 %v3086, %v3086
    %v3119 = vmul.f32 %v3087, %v3087
    %v3120 = vmul.f32 %v3088, %v3088
    %v3121 = vmul.f32 %v3089, %v3089
    %v3122 = vmul.f32 %v3090, %v3090
    %v3123 = vmul.f32 %v3091, %v3091
    %3124 = vadd.xlane.f32.xlu0 %v3092
    %v3125 = vpop.xlane.xlu0 %3124
    %3126 = vadd.xlane.f32.xlu0 %v3093
    %v3127 = vpop.xlane.xlu0 %3126
    %3128 = vadd.xlane.f32.xlu0 %v3094
    %v3129 = vpop.xlane.xlu0 %3128
    %3130 = vadd.xlane.f32.xlu0 %v3095
    %v3131 = vpop.xlane.xlu0 %3130
    %3132 = vadd.xlane.f32.xlu0 %v3096
    %v3133 = vpop.xlane.xlu0 %3132
    %3134 = vadd.xlane.f32.xlu0 %v3097
    %v3135 = vpop.xlane.xlu0 %3134
    %3136 = vadd.xlane.f32.xlu0 %v3098
    %v3137 = vpop.xlane.xlu0 %3136
    %3138 = vadd.xlane.f32.xlu0 %v3099
    %v3139 = vpop.xlane.xlu0 %3138
    %3140 = vadd.xlane.f32.xlu0 %v3100
    %v3141 = vpop.xlane.xlu0 %3140
    %3142 = vadd.xlane.f32.xlu0 %v3101
    %v3143 = vpop.xlane.xlu0 %3142
    %3144 = vadd.xlane.f32.xlu0 %v3102
    %v3145 = vpop.xlane.xlu0 %3144
    %3146 = vadd.xlane.f32.xlu0 %v3103
    %v3147 = vpop.xlane.xlu0 %3146
    %3148 = vadd.xlane.f32.xlu0 %v3104
    %v3149 = vpop.xlane.xlu0 %3148
    %3150 = vadd.xlane.f32.xlu0 %v3105
    %v3151 = vpop.xlane.xlu0 %3150
    %3152 = vadd.xlane.f32.xlu0 %v3106
    %v3153 = vpop.xlane.xlu0 %3152
    %3154 = vadd.xlane.f32.xlu0 %v3107
    %v3155 = vpop.xlane.xlu0 %3154
    %3156 = vadd.xlane.f32.xlu0 %v3108
    %v3157 = vpop.xlane.xlu0 %3156
    %3158 = vadd.xlane.f32.xlu0 %v3109
    %v3159 = vpop.xlane.xlu0 %3158
    %3160 = vadd.xlane.f32.xlu0 %v3110
    %v3161 = vpop.xlane.xlu0 %3160
    %3162 = vadd.xlane.f32.xlu0 %v3111
    %v3163 = vpop.xlane.xlu0 %3162
    %3164 = vadd.xlane.f32.xlu0 %v3112
    %v3165 = vpop.xlane.xlu0 %3164
    %3166 = vadd.xlane.f32.xlu0 %v3113
    %v3167 = vpop.xlane.xlu0 %3166
    %3168 = vadd.xlane.f32.xlu0 %v3114
    %v3169 = vpop.xlane.xlu0 %3168
    %3170 = vadd.xlane.f32.xlu0 %v3115
    %v3171 = vpop.xlane.xlu0 %3170
    %3172 = vadd.xlane.f32.xlu0 %v3116
    %v3173 = vpop.xlane.xlu0 %3172
    %3174 = vadd.xlane.f32.xlu0 %v3117
    %v3175 = vpop.xlane.xlu0 %3174
    %3176 = vadd.xlane.f32.xlu0 %v3118
    %v3177 = vpop.xlane.xlu0 %3176
    %3178 = vadd.xlane.f32.xlu0 %v3119
    %v3179 = vpop.xlane.xlu0 %3178
    %3180 = vadd.xlane.f32.xlu0 %v3120
    %v3181 = vpop.xlane.xlu0 %3180
    %3182 = vadd.xlane.f32.xlu0 %v3121
    %v3183 = vpop.xlane.xlu0 %3182
    %3184 = vadd.xlane.f32.xlu0 %v3122
    %v3185 = vpop.xlane.xlu0 %3184
    %3186 = vadd.xlane.f32.xlu0 %v3123
    %v3187 = vpop.xlane.xlu0 %3186
    %v3188 = vmul.f32 %v3125, %v766
    %v3189 = vmul.f32 %v3127, %v766
    %v3190 = vmul.f32 %v3129, %v766
    %v3191 = vmul.f32 %v3131, %v766
    %v3192 = vmul.f32 %v3133, %v766
    %v3193 = vmul.f32 %v3135, %v766
    %v3194 = vmul.f32 %v3137, %v766
    %v3195 = vmul.f32 %v3139, %v766
    %v3196 = vmul.f32 %v3141, %v766
    %v3197 = vmul.f32 %v3143, %v766
    %v3198 = vmul.f32 %v3145, %v766
    %v3199 = vmul.f32 %v3147, %v766
    %v3200 = vmul.f32 %v3149, %v766
    %v3201 = vmul.f32 %v3151, %v766
    %v3202 = vmul.f32 %v3153, %v766
    %v3203 = vmul.f32 %v3155, %v766
    %v3204 = vmul.f32 %v3157, %v766
    %v3205 = vmul.f32 %v3159, %v766
    %v3206 = vmul.f32 %v3161, %v766
    %v3207 = vmul.f32 %v3163, %v766
    %v3208 = vmul.f32 %v3165, %v766
    %v3209 = vmul.f32 %v3167, %v766
    %v3210 = vmul.f32 %v3169, %v766
    %v3211 = vmul.f32 %v3171, %v766
    %v3212 = vmul.f32 %v3173, %v766
    %v3213 = vmul.f32 %v3175, %v766
    %v3214 = vmul.f32 %v3177, %v766
    %v3215 = vmul.f32 %v3179, %v766
    %v3216 = vmul.f32 %v3181, %v766
    %v3217 = vmul.f32 %v3183, %v766
    %v3218 = vmul.f32 %v3185, %v766
    %v3219 = vmul.f32 %v3187, %v766
    %v3220 = vadd.f32 %v3188, 1e-05
    %v3221 = vadd.f32 %v3189, 1e-05
    %v3222 = vadd.f32 %v3190, 1e-05
    %v3223 = vadd.f32 %v3191, 1e-05
    %v3224 = vadd.f32 %v3192, 1e-05
    %v3225 = vadd.f32 %v3193, 1e-05
    %v3226 = vadd.f32 %v3194, 1e-05
    %v3227 = vadd.f32 %v3195, 1e-05
    %v3228 = vadd.f32 %v3196, 1e-05
    %v3229 = vadd.f32 %v3197, 1e-05
    %v3230 = vadd.f32 %v3198, 1e-05
    %v3231 = vadd.f32 %v3199, 1e-05
    %v3232 = vadd.f32 %v3200, 1e-05
    %v3233 = vadd.f32 %v3201, 1e-05
    %v3234 = vadd.f32 %v3202, 1e-05
    %v3235 = vadd.f32 %v3203, 1e-05
    %v3236 = vadd.f32 %v3204, 1e-05
    %v3237 = vadd.f32 %v3205, 1e-05
    %v3238 = vadd.f32 %v3206, 1e-05
    %v3239 = vadd.f32 %v3207, 1e-05
    %v3240 = vadd.f32 %v3208, 1e-05
    %v3241 = vadd.f32 %v3209, 1e-05
    %v3242 = vadd.f32 %v3210, 1e-05
    %v3243 = vadd.f32 %v3211, 1e-05
    %v3244 = vadd.f32 %v3212, 1e-05
    %v3245 = vadd.f32 %v3213, 1e-05
    %v3246 = vadd.f32 %v3214, 1e-05
    %v3247 = vadd.f32 %v3215, 1e-05
    %v3248 = vadd.f32 %v3216, 1e-05
    %v3249 = vadd.f32 %v3217, 1e-05
    %v3250 = vadd.f32 %v3218, 1e-05
    %v3251 = vadd.f32 %v3219, 1e-05
    %v3252 = vrsqrt.pop %v3220
    %v3253 = vmul.f32 %v3252, %v3220
    %v3254 = vmul.f32 %v3253, %v3252
    %v3255 = vmul.f32 0.5, %v3254
    %v3256 = vsub.f32 1.5, %v3255
    %v3257 = vmul.f32 %v3252, %v3256
    %vm3258 = vweird.f32 %v3220
    %vm3259 = vweird.f32 %v3252
    %vm3260 = vmor %vm3258, %vm3259
    %v3261 = vsel %vm3260, %v3252, %v3257
    %v3262 = vrsqrt.pop %v3221
    %v3263 = vmul.f32 %v3262, %v3221
    %v3264 = vmul.f32 %v3263, %v3262
    %v3265 = vmul.f32 0.5, %v3264
    %v3266 = vsub.f32 1.5, %v3265
    %v3267 = vmul.f32 %v3262, %v3266
    %vm3268 = vweird.f32 %v3221
    %vm3269 = vweird.f32 %v3262
    %vm3270 = vmor %vm3268, %vm3269
    %v3271 = vsel %vm3270, %v3262, %v3267
    %v3272 = vrsqrt.pop %v3222
    %v3273 = vmul.f32 %v3272, %v3222
    %v3274 = vmul.f32 %v3273, %v3272
    %v3275 = vmul.f32 0.5, %v3274
    %v3276 = vsub.f32 1.5, %v3275
    %v3277 = vmul.f32 %v3272, %v3276
    %vm3278 = vweird.f32 %v3222
    %vm3279 = vweird.f32 %v3272
    %vm3280 = vmor %vm3278, %vm3279
    %v3281 = vsel %vm3280, %v3272, %v3277
    %v3282 = vrsqrt.pop %v3223
    %v3283 = vmul.f32 %v3282, %v3223
    %v3284 = vmul.f32 %v3283, %v3282
    %v3285 = vmul.f32 0.5, %v3284
    %v3286 = vsub.f32 1.5, %v3285
    %v3287 = vmul.f32 %v3282, %v3286
    %vm3288 = vweird.f32 %v3223
    %vm3289 = vweird.f32 %v3282
    %vm3290 = vmor %vm3288, %vm3289
    %v3291 = vsel %vm3290, %v3282, %v3287
    %v3292 = vrsqrt.pop %v3224
    %v3293 = vmul.f32 %v3292, %v3224
    %v3294 = vmul.f32 %v3293, %v3292
    %v3295 = vmul.f32 0.5, %v3294
    %v3296 = vsub.f32 1.5, %v3295
    %v3297 = vmul.f32 %v3292, %v3296
    %vm3298 = vweird.f32 %v3224
    %vm3299 = vweird.f32 %v3292
    %vm3300 = vmor %vm3298, %vm3299
    %v3301 = vsel %vm3300, %v3292, %v3297
    %v3302 = vrsqrt.pop %v3225
    %v3303 = vmul.f32 %v3302, %v3225
    %v3304 = vmul.f32 %v3303, %v3302
    %v3305 = vmul.f32 0.5, %v3304
    %v3306 = vsub.f32 1.5, %v3305
    %v3307 = vmul.f32 %v3302, %v3306
    %vm3308 = vweird.f32 %v3225
    %vm3309 = vweird.f32 %v3302
    %vm3310 = vmor %vm3308, %vm3309
    %v3311 = vsel %vm3310, %v3302, %v3307
    %v3312 = vrsqrt.pop %v3226
    %v3313 = vmul.f32 %v3312, %v3226
    %v3314 = vmul.f32 %v3313, %v3312
    %v3315 = vmul.f32 0.5, %v3314
    %v3316 = vsub.f32 1.5, %v3315
    %v3317 = vmul.f32 %v3312, %v3316
    %vm3318 = vweird.f32 %v3226
    %vm3319 = vweird.f32 %v3312
    %vm3320 = vmor %vm3318, %vm3319
    %v3321 = vsel %vm3320, %v3312, %v3317
    %v3322 = vrsqrt.pop %v3227
    %v3323 = vmul.f32 %v3322, %v3227
    %v3324 = vmul.f32 %v3323, %v3322
    %v3325 = vmul.f32 0.5, %v3324
    %v3326 = vsub.f32 1.5, %v3325
    %v3327 = vmul.f32 %v3322, %v3326
    %vm3328 = vweird.f32 %v3227
    %vm3329 = vweird.f32 %v3322
    %vm3330 = vmor %vm3328, %vm3329
    %v3331 = vsel %vm3330, %v3322, %v3327
    %v3332 = vrsqrt.pop %v3228
    %v3333 = vmul.f32 %v3332, %v3228
    %v3334 = vmul.f32 %v3333, %v3332
    %v3335 = vmul.f32 0.5, %v3334
    %v3336 = vsub.f32 1.5, %v3335
    %v3337 = vmul.f32 %v3332, %v3336
    %vm3338 = vweird.f32 %v3228
    %vm3339 = vweird.f32 %v3332
    %vm3340 = vmor %vm3338, %vm3339
    %v3341 = vsel %vm3340, %v3332, %v3337
    %v3342 = vrsqrt.pop %v3229
    %v3343 = vmul.f32 %v3342, %v3229
    %v3344 = vmul.f32 %v3343, %v3342
    %v3345 = vmul.f32 0.5, %v3344
    %v3346 = vsub.f32 1.5, %v3345
    %v3347 = vmul.f32 %v3342, %v3346
    %vm3348 = vweird.f32 %v3229
    %vm3349 = vweird.f32 %v3342
    %vm3350 = vmor %vm3348, %vm3349
    %v3351 = vsel %vm3350, %v3342, %v3347
    %v3352 = vrsqrt.pop %v3230
    %v3353 = vmul.f32 %v3352, %v3230
    %v3354 = vmul.f32 %v3353, %v3352
    %v3355 = vmul.f32 0.5, %v3354
    %v3356 = vsub.f32 1.5, %v3355
    %v3357 = vmul.f32 %v3352, %v3356
    %vm3358 = vweird.f32 %v3230
    %vm3359 = vweird.f32 %v3352
    %vm3360 = vmor %vm3358, %vm3359
    %v3361 = vsel %vm3360, %v3352, %v3357
    %v3362 = vrsqrt.pop %v3231
    %v3363 = vmul.f32 %v3362, %v3231
    %v3364 = vmul.f32 %v3363, %v3362
    %v3365 = vmul.f32 0.5, %v3364
    %v3366 = vsub.f32 1.5, %v3365
    %v3367 = vmul.f32 %v3362, %v3366
    %vm3368 = vweird.f32 %v3231
    %vm3369 = vweird.f32 %v3362
    %vm3370 = vmor %vm3368, %vm3369
    %v3371 = vsel %vm3370, %v3362, %v3367
    %v3372 = vrsqrt.pop %v3232
    %v3373 = vmul.f32 %v3372, %v3232
    %v3374 = vmul.f32 %v3373, %v3372
    %v3375 = vmul.f32 0.5, %v3374
    %v3376 = vsub.f32 1.5, %v3375
    %v3377 = vmul.f32 %v3372, %v3376
    %vm3378 = vweird.f32 %v3232
    %vm3379 = vweird.f32 %v3372
    %vm3380 = vmor %vm3378, %vm3379
    %v3381 = vsel %vm3380, %v3372, %v3377
    %v3382 = vrsqrt.pop %v3233
    %v3383 = vmul.f32 %v3382, %v3233
    %v3384 = vmul.f32 %v3383, %v3382
    %v3385 = vmul.f32 0.5, %v3384
    %v3386 = vsub.f32 1.5, %v3385
    %v3387 = vmul.f32 %v3382, %v3386
    %vm3388 = vweird.f32 %v3233
    %vm3389 = vweird.f32 %v3382
    %vm3390 = vmor %vm3388, %vm3389
    %v3391 = vsel %vm3390, %v3382, %v3387
    %v3392 = vrsqrt.pop %v3234
    %v3393 = vmul.f32 %v3392, %v3234
    %v3394 = vmul.f32 %v3393, %v3392
    %v3395 = vmul.f32 0.5, %v3394
    %v3396 = vsub.f32 1.5, %v3395
    %v3397 = vmul.f32 %v3392, %v3396
    %vm3398 = vweird.f32 %v3234
    %vm3399 = vweird.f32 %v3392
    %vm3400 = vmor %vm3398, %vm3399
    %v3401 = vsel %vm3400, %v3392, %v3397
    %v3402 = vrsqrt.pop %v3235
    %v3403 = vmul.f32 %v3402, %v3235
    %v3404 = vmul.f32 %v3403, %v3402
    %v3405 = vmul.f32 0.5, %v3404
    %v3406 = vsub.f32 1.5, %v3405
    %v3407 = vmul.f32 %v3402, %v3406
    %vm3408 = vweird.f32 %v3235
    %vm3409 = vweird.f32 %v3402
    %vm3410 = vmor %vm3408, %vm3409
    %v3411 = vsel %vm3410, %v3402, %v3407
    %v3412 = vrsqrt.pop %v3236
    %v3413 = vmul.f32 %v3412, %v3236
    %v3414 = vmul.f32 %v3413, %v3412
    %v3415 = vmul.f32 0.5, %v3414
    %v3416 = vsub.f32 1.5, %v3415
    %v3417 = vmul.f32 %v3412, %v3416
    %vm3418 = vweird.f32 %v3236
    %vm3419 = vweird.f32 %v3412
    %vm3420 = vmor %vm3418, %vm3419
    %v3421 = vsel %vm3420, %v3412, %v3417
    %v3422 = vrsqrt.pop %v3237
    %v3423 = vmul.f32 %v3422, %v3237
    %v3424 = vmul.f32 %v3423, %v3422
    %v3425 = vmul.f32 0.5, %v3424
    %v3426 = vsub.f32 1.5, %v3425
    %v3427 = vmul.f32 %v3422, %v3426
    %vm3428 = vweird.f32 %v3237
    %vm3429 = vweird.f32 %v3422
    %vm3430 = vmor %vm3428, %vm3429
    %v3431 = vsel %vm3430, %v3422, %v3427
    %v3432 = vrsqrt.pop %v3238
    %v3433 = vmul.f32 %v3432, %v3238
    %v3434 = vmul.f32 %v3433, %v3432
    %v3435 = vmul.f32 0.5, %v3434
    %v3436 = vsub.f32 1.5, %v3435
    %v3437 = vmul.f32 %v3432, %v3436
    %vm3438 = vweird.f32 %v3238
    %vm3439 = vweird.f32 %v3432
    %vm3440 = vmor %vm3438, %vm3439
    %v3441 = vsel %vm3440, %v3432, %v3437
    %v3442 = vrsqrt.pop %v3239
    %v3443 = vmul.f32 %v3442, %v3239
    %v3444 = vmul.f32 %v3443, %v3442
    %v3445 = vmul.f32 0.5, %v3444
    %v3446 = vsub.f32 1.5, %v3445
    %v3447 = vmul.f32 %v3442, %v3446
    %vm3448 = vweird.f32 %v3239
    %vm3449 = vweird.f32 %v3442
    %vm3450 = vmor %vm3448, %vm3449
    %v3451 = vsel %vm3450, %v3442, %v3447
    %v3452 = vrsqrt.pop %v3240
    %v3453 = vmul.f32 %v3452, %v3240
    %v3454 = vmul.f32 %v3453, %v3452
    %v3455 = vmul.f32 0.5, %v3454
    %v3456 = vsub.f32 1.5, %v3455
    %v3457 = vmul.f32 %v3452, %v3456
    %vm3458 = vweird.f32 %v3240
    %vm3459 = vweird.f32 %v3452
    %vm3460 = vmor %vm3458, %vm3459
    %v3461 = vsel %vm3460, %v3452, %v3457
    %v3462 = vrsqrt.pop %v3241
    %v3463 = vmul.f32 %v3462, %v3241
    %v3464 = vmul.f32 %v3463, %v3462
    %v3465 = vmul.f32 0.5, %v3464
    %v3466 = vsub.f32 1.5, %v3465
    %v3467 = vmul.f32 %v3462, %v3466
    %vm3468 = vweird.f32 %v3241
    %vm3469 = vweird.f32 %v3462
    %vm3470 = vmor %vm3468, %vm3469
    %v3471 = vsel %vm3470, %v3462, %v3467
    %v3472 = vrsqrt.pop %v3242
    %v3473 = vmul.f32 %v3472, %v3242
    %v3474 = vmul.f32 %v3473, %v3472
    %v3475 = vmul.f32 0.5, %v3474
    %v3476 = vsub.f32 1.5, %v3475
    %v3477 = vmul.f32 %v3472, %v3476
    %vm3478 = vweird.f32 %v3242
    %vm3479 = vweird.f32 %v3472
    %vm3480 = vmor %vm3478, %vm3479
    %v3481 = vsel %vm3480, %v3472, %v3477
    %v3482 = vrsqrt.pop %v3243
    %v3483 = vmul.f32 %v3482, %v3243
    %v3484 = vmul.f32 %v3483, %v3482
    %v3485 = vmul.f32 0.5, %v3484
    %v3486 = vsub.f32 1.5, %v3485
    %v3487 = vmul.f32 %v3482, %v3486
    %vm3488 = vweird.f32 %v3243
    %vm3489 = vweird.f32 %v3482
    %vm3490 = vmor %vm3488, %vm3489
    %v3491 = vsel %vm3490, %v3482, %v3487
    %v3492 = vrsqrt.pop %v3244
    %v3493 = vmul.f32 %v3492, %v3244
    %v3494 = vmul.f32 %v3493, %v3492
    %v3495 = vmul.f32 0.5, %v3494
    %v3496 = vsub.f32 1.5, %v3495
    %v3497 = vmul.f32 %v3492, %v3496
    %vm3498 = vweird.f32 %v3244
    %vm3499 = vweird.f32 %v3492
    %vm3500 = vmor %vm3498, %vm3499
    %v3501 = vsel %vm3500, %v3492, %v3497
    %v3502 = vrsqrt.pop %v3245
    %v3503 = vmul.f32 %v3502, %v3245
    %v3504 = vmul.f32 %v3503, %v3502
    %v3505 = vmul.f32 0.5, %v3504
    %v3506 = vsub.f32 1.5, %v3505
    %v3507 = vmul.f32 %v3502, %v3506
    %vm3508 = vweird.f32 %v3245
    %vm3509 = vweird.f32 %v3502
    %vm3510 = vmor %vm3508, %vm3509
    %v3511 = vsel %vm3510, %v3502, %v3507
    %v3512 = vrsqrt.pop %v3246
    %v3513 = vmul.f32 %v3512, %v3246
    %v3514 = vmul.f32 %v3513, %v3512
    %v3515 = vmul.f32 0.5, %v3514
    %v3516 = vsub.f32 1.5, %v3515
    %v3517 = vmul.f32 %v3512, %v3516
    %vm3518 = vweird.f32 %v3246
    %vm3519 = vweird.f32 %v3512
    %vm3520 = vmor %vm3518, %vm3519
    %v3521 = vsel %vm3520, %v3512, %v3517
    %v3522 = vrsqrt.pop %v3247
    %v3523 = vmul.f32 %v3522, %v3247
    %v3524 = vmul.f32 %v3523, %v3522
    %v3525 = vmul.f32 0.5, %v3524
    %v3526 = vsub.f32 1.5, %v3525
    %v3527 = vmul.f32 %v3522, %v3526
    %vm3528 = vweird.f32 %v3247
    %vm3529 = vweird.f32 %v3522
    %vm3530 = vmor %vm3528, %vm3529
    %v3531 = vsel %vm3530, %v3522, %v3527
    %v3532 = vrsqrt.pop %v3248
    %v3533 = vmul.f32 %v3532, %v3248
    %v3534 = vmul.f32 %v3533, %v3532
    %v3535 = vmul.f32 0.5, %v3534
    %v3536 = vsub.f32 1.5, %v3535
    %v3537 = vmul.f32 %v3532, %v3536
    %vm3538 = vweird.f32 %v3248
    %vm3539 = vweird.f32 %v3532
    %vm3540 = vmor %vm3538, %vm3539
    %v3541 = vsel %vm3540, %v3532, %v3537
    %v3542 = vrsqrt.pop %v3249
    %v3543 = vmul.f32 %v3542, %v3249
    %v3544 = vmul.f32 %v3543, %v3542
    %v3545 = vmul.f32 0.5, %v3544
    %v3546 = vsub.f32 1.5, %v3545
    %v3547 = vmul.f32 %v3542, %v3546
    %vm3548 = vweird.f32 %v3249
    %vm3549 = vweird.f32 %v3542
    %vm3550 = vmor %vm3548, %vm3549
    %v3551 = vsel %vm3550, %v3542, %v3547
    %v3552 = vrsqrt.pop %v3250
    %v3553 = vmul.f32 %v3552, %v3250
    %v3554 = vmul.f32 %v3553, %v3552
    %v3555 = vmul.f32 0.5, %v3554
    %v3556 = vsub.f32 1.5, %v3555
    %v3557 = vmul.f32 %v3552, %v3556
    %vm3558 = vweird.f32 %v3250
    %vm3559 = vweird.f32 %v3552
    %vm3560 = vmor %vm3558, %vm3559
    %v3561 = vsel %vm3560, %v3552, %v3557
    %v3562 = vrsqrt.pop %v3251
    %v3563 = vmul.f32 %v3562, %v3251
    %v3564 = vmul.f32 %v3563, %v3562
    %v3565 = vmul.f32 0.5, %v3564
    %v3566 = vsub.f32 1.5, %v3565
    %v3567 = vmul.f32 %v3562, %v3566
    %vm3568 = vweird.f32 %v3251
    %vm3569 = vweird.f32 %v3562
    %vm3570 = vmor %vm3568, %vm3569
    %v3571 = vsel %vm3570, %v3562, %v3567
    %v3572 = vmul.f32 %v3060, %v3261
    %v3573 = vmul.f32 %v3061, %v3271
    %v3574 = vmul.f32 %v3062, %v3281
    %v3575 = vmul.f32 %v3063, %v3291
    %v3576 = vmul.f32 %v3064, %v3301
    %v3577 = vmul.f32 %v3065, %v3311
    %v3578 = vmul.f32 %v3066, %v3321
    %v3579 = vmul.f32 %v3067, %v3331
    %v3580 = vmul.f32 %v3068, %v3341
    %v3581 = vmul.f32 %v3069, %v3351
    %v3582 = vmul.f32 %v3070, %v3361
    %v3583 = vmul.f32 %v3071, %v3371
    %v3584 = vmul.f32 %v3072, %v3381
    %v3585 = vmul.f32 %v3073, %v3391
    %v3586 = vmul.f32 %v3074, %v3401
    %v3587 = vmul.f32 %v3075, %v3411
    %v3588 = vmul.f32 %v3076, %v3421
    %v3589 = vmul.f32 %v3077, %v3431
    %v3590 = vmul.f32 %v3078, %v3441
    %v3591 = vmul.f32 %v3079, %v3451
    %v3592 = vmul.f32 %v3080, %v3461
    %v3593 = vmul.f32 %v3081, %v3471
    %v3594 = vmul.f32 %v3082, %v3481
    %v3595 = vmul.f32 %v3083, %v3491
    %v3596 = vmul.f32 %v3084, %v3501
    %v3597 = vmul.f32 %v3085, %v3511
    %v3598 = vmul.f32 %v3086, %v3521
    %v3599 = vmul.f32 %v3087, %v3531
    %v3600 = vmul.f32 %v3088, %v3541
    %v3601 = vmul.f32 %v3089, %v3551
    %v3602 = vmul.f32 %v3090, %v3561
    %v3603 = vmul.f32 %v3091, %v3571
    %vm3604 = vcmp.ge.f32.partialorder %v3572, 0.0
    %vm3605 = vcmp.ge.f32.partialorder %v3573, 0.0
    %vm3606 = vcmp.ge.f32.partialorder %v3574, 0.0
    %vm3607 = vcmp.ge.f32.partialorder %v3575, 0.0
    %vm3608 = vcmp.ge.f32.partialorder %v3576, 0.0
    %vm3609 = vcmp.ge.f32.partialorder %v3577, 0.0
    %vm3610 = vcmp.ge.f32.partialorder %v3578, 0.0
    %vm3611 = vcmp.ge.f32.partialorder %v3579, 0.0
    %vm3612 = vcmp.ge.f32.partialorder %v3580, 0.0
    %vm3613 = vcmp.ge.f32.partialorder %v3581, 0.0
    %vm3614 = vcmp.ge.f32.partialorder %v3582, 0.0
    %vm3615 = vcmp.ge.f32.partialorder %v3583, 0.0
    %vm3616 = vcmp.ge.f32.partialorder %v3584, 0.0
    %vm3617 = vcmp.ge.f32.partialorder %v3585, 0.0
    %vm3618 = vcmp.ge.f32.partialorder %v3586, 0.0
    %vm3619 = vcmp.ge.f32.partialorder %v3587, 0.0
    %vm3620 = vcmp.ge.f32.partialorder %v3588, 0.0
    %vm3621 = vcmp.ge.f32.partialorder %v3589, 0.0
    %vm3622 = vcmp.ge.f32.partialorder %v3590, 0.0
    %vm3623 = vcmp.ge.f32.partialorder %v3591, 0.0
    %vm3624 = vcmp.ge.f32.partialorder %v3592, 0.0
    %vm3625 = vcmp.ge.f32.partialorder %v3593, 0.0
    %vm3626 = vcmp.ge.f32.partialorder %v3594, 0.0
    %vm3627 = vcmp.ge.f32.partialorder %v3595, 0.0
    %vm3628 = vcmp.ge.f32.partialorder %v3596, 0.0
    %vm3629 = vcmp.ge.f32.partialorder %v3597, 0.0
    %vm3630 = vcmp.ge.f32.partialorder %v3598, 0.0
    %vm3631 = vcmp.ge.f32.partialorder %v3599, 0.0
    %vm3632 = vcmp.ge.f32.partialorder %v3600, 0.0
    %vm3633 = vcmp.ge.f32.partialorder %v3601, 0.0
    %vm3634 = vcmp.ge.f32.partialorder %v3602, 0.0
    %vm3635 = vcmp.ge.f32.partialorder %v3603, 0.0
    %v3636 = vmul.f32 %v3572, 0.2
    %v3637 = vmul.f32 %v3573, 0.2
    %v3638 = vmul.f32 %v3574, 0.2
    %v3639 = vmul.f32 %v3575, 0.2
    %v3640 = vmul.f32 %v3576, 0.2
    %v3641 = vmul.f32 %v3577, 0.2
    %v3642 = vmul.f32 %v3578, 0.2
    %v3643 = vmul.f32 %v3579, 0.2
    %v3644 = vmul.f32 %v3580, 0.2
    %v3645 = vmul.f32 %v3581, 0.2
    %v3646 = vmul.f32 %v3582, 0.2
    %v3647 = vmul.f32 %v3583, 0.2
    %v3648 = vmul.f32 %v3584, 0.2
    %v3649 = vmul.f32 %v3585, 0.2
    %v3650 = vmul.f32 %v3586, 0.2
    %v3651 = vmul.f32 %v3587, 0.2
    %v3652 = vmul.f32 %v3588, 0.2
    %v3653 = vmul.f32 %v3589, 0.2
    %v3654 = vmul.f32 %v3590, 0.2
    %v3655 = vmul.f32 %v3591, 0.2
    %v3656 = vmul.f32 %v3592, 0.2
    %v3657 = vmul.f32 %v3593, 0.2
    %v3658 = vmul.f32 %v3594, 0.2
    %v3659 = vmul.f32 %v3595, 0.2
    %v3660 = vmul.f32 %v3596, 0.2
    %v3661 = vmul.f32 %v3597, 0.2
    %v3662 = vmul.f32 %v3598, 0.2
    %v3663 = vmul.f32 %v3599, 0.2
    %v3664 = vmul.f32 %v3600, 0.2
    %v3665 = vmul.f32 %v3601, 0.2
    %v3666 = vmul.f32 %v3602, 0.2
    %v3667 = vmul.f32 %v3603, 0.2
    %v3668 = vsel %vm3604, %v3572, %v3636
    %v3669 = vsel %vm3605, %v3573, %v3637
    %v3670 = vsel %vm3606, %v3574, %v3638
    %v3671 = vsel %vm3607, %v3575, %v3639
    %v3672 = vsel %vm3608, %v3576, %v3640
    %v3673 = vsel %vm3609, %v3577, %v3641
    %v3674 = vsel %vm3610, %v3578, %v3642
    %v3675 = vsel %vm3611, %v3579, %v3643
    %v3676 = vsel %vm3612, %v3580, %v3644
    %v3677 = vsel %vm3613, %v3581, %v3645
    %v3678 = vsel %vm3614, %v3582, %v3646
    %v3679 = vsel %vm3615, %v3583, %v3647
    %v3680 = vsel %vm3616, %v3584, %v3648
    %v3681 = vsel %vm3617, %v3585, %v3649
    %v3682 = vsel %vm3618, %v3586, %v3650
    %v3683 = vsel %vm3619, %v3587, %v3651
    %v3684 = vsel %vm3620, %v3588, %v3652
    %v3685 = vsel %vm3621, %v3589, %v3653
    %v3686 = vsel %vm3622, %v3590, %v3654
    %v3687 = vsel %vm3623, %v3591, %v3655
    %v3688 = vsel %vm3624, %v3592, %v3656
    %v3689 = vsel %vm3625, %v3593, %v3657
    %v3690 = vsel %vm3626, %v3594, %v3658
    %v3691 = vsel %vm3627, %v3595, %v3659
    %v3692 = vsel %vm3628, %v3596, %v3660
    %v3693 = vsel %vm3629, %v3597, %v3661
    %v3694 = vsel %vm3630, %v3598, %v3662
    %v3695 = vsel %vm3631, %v3599, %v3663
    %v3696 = vsel %vm3632, %v3600, %v3664
    %v3697 = vsel %vm3633, %v3601, %v3665
    %v3698 = vsel %vm3634, %v3602, %v3666
    %v3699 = vsel %vm3635, %v3603, %v3667
    %v3700 = vld [vmem:[%s7] sm:$0xff]
    %v3701 = vld [vmem:[%s7 + $0x8] sm:$0xff]
    %v3702 = vld [vmem:[%s7 + $0x10] sm:$0xff]
    %v3703 = vld [vmem:[%s7 + $0x18] sm:$0xff]
    %v3704 = vld [vmem:[%s7 + $0x20] sm:$0xff]
    %v3705 = vld [vmem:[%s7 + $0x28] sm:$0xff]
    %v3706 = vld [vmem:[%s7 + $0x30] sm:$0xff]
    %v3707 = vld [vmem:[%s7 + $0x38] sm:$0xff]
    %v3708 = vld [vmem:[%s7 + $0x40] sm:$0xff]
    %v3709 = vld [vmem:[%s7 + $0x48] sm:$0xff]
    %v3710 = vld [vmem:[%s7 + $0x50] sm:$0xff]
    %v3711 = vld [vmem:[%s7 + $0x58] sm:$0xff]
    %v3712 = vld [vmem:[%s7 + $0x60] sm:$0xff]
    %v3713 = vld [vmem:[%s7 + $0x68] sm:$0xff]
    %v3714 = vld [vmem:[%s7 + $0x70] sm:$0xff]
    %v3715 = vld [vmem:[%s7 + $0x78] sm:$0xff]
    %v3716 = vld [vmem:[%s8] sm:$0x1]
    %v3718 = vperm.slane %v3716, 0
    %3720 = vmatpush.msra.mxu0 %v3715
    %3721 = vmatpush.msra.mxu0 %v3714
    %3722 = vmatpush.msra.mxu0 %v3713
    %3723 = vmatpush.msra.mxu0 %v3712
    %3724 = vmatpush.msra.mxu0 %v3711
    %3725 = vmatpush.msra.mxu0 %v3710
    %3726 = vmatpush.msra.mxu0 %v3709
    %3727 = vmatpush.msra.mxu0 %v3708
    %3728 = vmatpush.msra.mxu0 %v3707
    %3729 = vmatpush.msra.mxu0 %v3706
    %3730 = vmatpush.msra.mxu0 %v3705
    %3731 = vmatpush.msra.mxu0 %v3704
    %3732 = vmatpush.msra.mxu0 %v3703
    %3733 = vmatpush.msra.mxu0 %v3702
    %3734 = vmatpush.msra.mxu0 %v3701
    %3735 = vmatpush.msra.mxu0 %v3700
    %3736 = vmatmul.f32.gmra.mxu0 %v3668
    %v3737 = vpop.f32.mrf.mxu0
    %v3738 = vadd.f32 %v3718, %v3737
    %3739 = vmatmul.f32.gmra.mxu0 %v3669
    %v3740 = vpop.f32.mrf.mxu0
    %v3741 = vadd.f32 %v3718, %v3740
    %3742 = vmatmul.f32.gmra.mxu0 %v3670
    %v3743 = vpop.f32.mrf.mxu0
    %v3744 = vadd.f32 %v3718, %v3743
    %3745 = vmatmul.f32.gmra.mxu0 %v3671
    %v3746 = vpop.f32.mrf.mxu0
    %v3747 = vadd.f32 %v3718, %v3746
    %3748 = vmatmul.f32.gmra.mxu0 %v3672
    %v3749 = vpop.f32.mrf.mxu0
    %v3750 = vadd.f32 %v3718, %v3749
    %3751 = vmatmul.f32.gmra.mxu0 %v3673
    %v3752 = vpop.f32.mrf.mxu0
    %v3753 = vadd.f32 %v3718, %v3752
    %3754 = vmatmul.f32.gmra.mxu0 %v3674
    %v3755 = vpop.f32.mrf.mxu0
    %v3756 = vadd.f32 %v3718, %v3755
    %3757 = vmatmul.f32.gmra.mxu0 %v3675
    %v3758 = vpop.f32.mrf.mxu0
    %v3759 = vadd.f32 %v3718, %v3758
    %3760 = vmatmul.f32.gmra.mxu0 %v3676
    %v3761 = vpop.f32.mrf.mxu0
    %v3762 = vadd.f32 %v3718, %v3761
    %3763 = vmatmul.f32.gmra.mxu0 %v3677
    %v3764 = vpop.f32.mrf.mxu0
    %v3765 = vadd.f32 %v3718, %v3764
    %3766 = vmatmul.f32.gmra.mxu0 %v3678
    %v3767 = vpop.f32.mrf.mxu0
    %v3768 = vadd.f32 %v3718, %v3767
    %3769 = vmatmul.f32.gmra.mxu0 %v3679
    %v3770 = vpop.f32.mrf.mxu0
    %v3771 = vadd.f32 %v3718, %v3770
    %3772 = vmatmul.f32.gmra.mxu0 %v3680
    %v3773 = vpop.f32.mrf.mxu0
    %v3774 = vadd.f32 %v3718, %v3773
    %3775 = vmatmul.f32.gmra.mxu0 %v3681
    %v3776 = vpop.f32.mrf.mxu0
    %v3777 = vadd.f32 %v3718, %v3776
    %3778 = vmatmul.f32.gmra.mxu0 %v3682
    %v3779 = vpop.f32.mrf.mxu0
    %v3780 = vadd.f32 %v3718, %v3779
    %3781 = vmatmul.f32.gmra.mxu0 %v3683
    %v3782 = vpop.f32.mrf.mxu0
    %v3783 = vadd.f32 %v3718, %v3782
    %3784 = vmatmul.f32.gmra.mxu0 %v3684
    %v3785 = vpop.f32.mrf.mxu0
    %v3786 = vadd.f32 %v3718, %v3785
    %3787 = vmatmul.f32.gmra.mxu0 %v3685
    %v3788 = vpop.f32.mrf.mxu0
    %v3789 = vadd.f32 %v3718, %v3788
    %3790 = vmatmul.f32.gmra.mxu0 %v3686
    %v3791 = vpop.f32.mrf.mxu0
    %v3792 = vadd.f32 %v3718, %v3791
    %3793 = vmatmul.f32.gmra.mxu0 %v3687
    %v3794 = vpop.f32.mrf.mxu0
    %v3795 = vadd.f32 %v3718, %v3794
    %3796 = vmatmul.f32.gmra.mxu0 %v3688
    %v3797 = vpop.f32.mrf.mxu0
    %v3798 = vadd.f32 %v3718, %v3797
    %3799 = vmatmul.f32.gmra.mxu0 %v3689
    %v3800 = vpop.f32.mrf.mxu0
    %v3801 = vadd.f32 %v3718, %v3800
    %3802 = vmatmul.f32.gmra.mxu0 %v3690
    %v3803 = vpop.f32.mrf.mxu0
    %v3804 = vadd.f32 %v3718, %v3803
    %3805 = vmatmul.f32.gmra.mxu0 %v3691
    %v3806 = vpop.f32.mrf.mxu0
    %v3807 = vadd.f32 %v3718, %v3806
    %3808 = vmatmul.f32.gmra.mxu0 %v3692
    %v3809 = vpop.f32.mrf.mxu0
    %v3810 = vadd.f32 %v3718, %v3809
    %3811 = vmatmul.f32.gmra.mxu0 %v3693
    %v3812 = vpop.f32.mrf.mxu0
    %v3813 = vadd.f32 %v3718, %v3812
    %3814 = vmatmul.f32.gmra.mxu0 %v3694
    %v3815 = vpop.f32.mrf.mxu0
    %v3816 = vadd.f32 %v3718, %v3815
    %3817 = vmatmul.f32.gmra.mxu0 %v3695
    %v3818 = vpop.f32.mrf.mxu0
    %v3819 = vadd.f32 %v3718, %v3818
    %3820 = vmatmul.f32.gmra.mxu0 %v3696
    %v3821 = vpop.f32.mrf.mxu0
    %v3822 = vadd.f32 %v3718, %v3821
    %3823 = vmatmul.f32.gmra.mxu0 %v3697
    %v3824 = vpop.f32.mrf.mxu0
    %v3825 = vadd.f32 %v3718, %v3824
    %3826 = vmatmul.f32.gmra.mxu0 %v3698
    %v3827 = vpop.f32.mrf.mxu0
    %v3828 = vadd.f32 %v3718, %v3827
    %3829 = vmatmul.f32.gmra.mxu0 %v3699
    %v3830 = vpop.f32.mrf.mxu0
    %v3831 = vadd.f32 %v3718, %v3830
    %3832 = vdwg.mxu0
    %vm3833 = vcmask 130048
    %3834 = vst.msk [vmem:[%s9] sm:$0xff] %vm3833, %v3738
    %3835 = vst.msk [vmem:[%s9 + $0x8] sm:$0xff] %vm3833, %v3741
    %3836 = vst.msk [vmem:[%s9 + $0x10] sm:$0xff] %vm3833, %v3744
    %3837 = vst.msk [vmem:[%s9 + $0x18] sm:$0xff] %vm3833, %v3747
    %3838 = vst.msk [vmem:[%s9 + $0x20] sm:$0xff] %vm3833, %v3750
    %3839 = vst.msk [vmem:[%s9 + $0x28] sm:$0xff] %vm3833, %v3753
    %3840 = vst.msk [vmem:[%s9 + $0x30] sm:$0xff] %vm3833, %v3756
    %3841 = vst.msk [vmem:[%s9 + $0x38] sm:$0xff] %vm3833, %v3759
    %3842 = vst.msk [vmem:[%s9 + $0x40] sm:$0xff] %vm3833, %v3762
    %3843 = vst.msk [vmem:[%s9 + $0x48] sm:$0xff] %vm3833, %v3765
    %3844 = vst.msk [vmem:[%s9 + $0x50] sm:$0xff] %vm3833, %v3768
    %3845 = vst.msk [vmem:[%s9 + $0x58] sm:$0xff] %vm3833, %v3771
    %3846 = vst.msk [vmem:[%s9 + $0x60] sm:$0xff] %vm3833, %v3774
    %3847 = vst.msk [vmem:[%s9 + $0x68] sm:$0xff] %vm3833, %v3777
    %3848 = vst.msk [vmem:[%s9 + $0x70] sm:$0xff] %vm3833, %v3780
    %3849 = vst.msk [vmem:[%s9 + $0x78] sm:$0xff] %vm3833, %v3783
    %3850 = vst.msk [vmem:[%s9 + $0x80] sm:$0xff] %vm3833, %v3786
    %3851 = vst.msk [vmem:[%s9 + $0x88] sm:$0xff] %vm3833, %v3789
    %3852 = vst.msk [vmem:[%s9 + $0x90] sm:$0xff] %vm3833, %v3792
    %3853 = vst.msk [vmem:[%s9 + $0x98] sm:$0xff] %vm3833, %v3795
    %3854 = vst.msk [vmem:[%s9 + $0xa0] sm:$0xff] %vm3833, %v3798
    %3855 = vst.msk [vmem:[%s9 + $0xa8] sm:$0xff] %vm3833, %v3801
    %3856 = vst.msk [vmem:[%s9 + $0xb0] sm:$0xff] %vm3833, %v3804
    %3857 = vst.msk [vmem:[%s9 + $0xb8] sm:$0xff] %vm3833, %v3807
    %3858 = vst.msk [vmem:[%s9 + $0xc0] sm:$0xff] %vm3833, %v3810
    %3859 = vst.msk [vmem:[%s9 + $0xc8] sm:$0xff] %vm3833, %v3813
    %3860 = vst.msk [vmem:[%s9 + $0xd0] sm:$0xff] %vm3833, %v3816
    %3861 = vst.msk [vmem:[%s9 + $0xd8] sm:$0xff] %vm3833, %v3819
    %3862 = vst.msk [vmem:[%s9 + $0xe0] sm:$0xff] %vm3833, %v3822
    %3863 = vst.msk [vmem:[%s9 + $0xe8] sm:$0xff] %vm3833, %v3825
    %3864 = vst.msk [vmem:[%s9 + $0xf0] sm:$0xff] %vm3833, %v3828
    %3865 = vst.msk [vmem:[%s9 + $0xf8] sm:$0xff] %vm3833, %v3831
    // Predicated region
    $region42: #{tpu_custom_call.1} parent=1 // pred_check
      _
    $region43: #{tpu_custom_call.1} parent=1 // pred_check_branch
      %3867 = sbr.rel (0) target = $region45
    $region44: #{tpu_custom_call.1} parent=1 // pred_region
      _
    $region45: #{tpu_custom_call.1} parent=1 // pred_fallthru
      _
    // Predicated region
    $region46: #{tpu_custom_call.1} parent=1 // pred_check
      _
    $region47: #{tpu_custom_call.1} parent=1 // pred_check_branch
      %3869 = sbr.rel (0) target = $region49
    $region48: #{tpu_custom_call.1} parent=1 // pred_region
      _
    $region49: #{tpu_custom_call.1} parent=1 // pred_fallthru
      _
    %3870 = vsyncpa [#allocation3], 1

</llo_original>
